<compile_context>
chip_gen: v7x
topology: tpu7x:2x2x1
jax: 0.10.0
libtpu: 0.0.40
codegen_flags: <defaults>
</compile_context>

<pallas_src>
import jax
import jax.numpy as jnp
from jax import lax
from jax.experimental import pallas as pl
from jax.experimental.pallas import tpu as pltpu

VOCAB = 4000
EMB_DIM = 50
HIDDEN = 100
KSIZE = 5

CP = 64    # embedding channels padded 50 -> 64 (conv contraction dim)
HP = 128   # hidden features padded 100 -> 128 (lane-dense)


def word_att_kernel(idx_ref, table_ref, wc_ref, bc_ref, w1_ref, b1_ref, w2_ref,
                    out_ref, emb_ref, gsem):
    """One fused forward pass for a single (S, B) sentence batch.

    idx_ref  : (S*B,) int32 token ids in SMEM, row i = s*B + b.
    table_ref: (VOCAB, CP) f32 embedding table, left in HBM (pl.ANY).
    wc_ref   : (KSIZE, CP, HP) per-tap conv weights.   bc_ref: (1, HP) conv bias.
    w1_ref   : (HP, HP) fc1 weight (pre-transposed).   b1_ref: (1, HP) fc1 bias.
    w2_ref   : (1, HP) fc2 weight (no bias).
    out_ref  : (1, B, HP).   emb_ref: (S*B, CP) VMEM scratch.   gsem: DMA sem.
    """
    SB = emb_ref.shape[0]
    B = out_ref.shape[1]
    S = SB // B
    L = S - KSIZE + 1
    LB = L * B

    # ---- fused embedding gather: DMA one table row per token (HBM -> VMEM) ----
    def row_copy(i):
        return pltpu.make_async_copy(
            table_ref.at[pl.ds(idx_ref[i], 1)],   # (1, CP) row in HBM
            emb_ref.at[pl.ds(i, 1)],              # (1, CP) row in VMEM
            gsem)

    for i in range(SB):                 # static unroll; all copies in flight
        row_copy(i).start()
    for i in range(SB):
        row_copy(i).wait()

    # ---- Conv1d(kernel=5, valid) as 5 shifted matmuls on the MXU ---------------
    # f[l*B + b, :] = sum_k emb[(l+k)*B + b, :] @ Wc_k + bc
    # (slice starts k*B are not 8-aligned for small B; negligible at this size)
    f = jnp.zeros((LB, HP), jnp.float32)
    for k in range(KSIZE):
        xk = emb_ref[pl.ds(k * B, LB), :]                               # (LB, CP)
        f = f + jnp.dot(xk, wc_ref[k], preferred_element_type=jnp.float32)
    f = f + bc_ref[...]                                                 # (LB, HP)

    # ---- fc1 + tanh (EUP), fc2 folded into a lane-row of logits ----------------
    h = jnp.tanh(jnp.dot(f, w1_ref[...], preferred_element_type=jnp.float32)
                 + b1_ref[...])                                         # (LB, HP)
    # logits along lanes: contract w2's and h's lane (feature) dims -> (1, LB)
    s_row = lax.dot_general(w2_ref[...], h, (((1,), (1,)), ((), ())),
                            preferred_element_type=jnp.float32)

    # ---- masked segment softmax over sequence positions (segments along lanes) -
    col = lax.broadcasted_iota(jnp.int32, (B, LB), 1)
    row = lax.broadcasted_iota(jnp.int32, (B, LB), 0)
    in_seg = (col % B) == row               # column i = l*B + b belongs to batch b
    sm = jnp.where(in_seg, s_row, jnp.float32(-1e30))                   # (B, LB)
    m = jnp.max(sm, axis=1, keepdims=True)                              # (B, 1)
    e = jnp.exp(sm - m)                     # masked entries underflow to exact 0
    denom = jnp.sum(e, axis=1, keepdims=True)                           # (B, 1)
    wts = e * pl.reciprocal(denom, approx=False)   # exact recip (correctness note)

    # ---- attention-weighted sum: one (B, LB) @ (LB, HP) MXU matmul -------------
    out_ref[0] = jnp.dot(wts, f, preferred_element_type=jnp.float32)    # (B, HP)


def prepare_params(params):
    """One-time weight prep (hoisted out of the per-call path, review item 1)."""
    emb_table, conv_w, conv_b, fc1_w, fc1_b, fc2_w = params
    table_p = jnp.pad(emb_table.astype(jnp.float32), ((0, 0), (0, CP - EMB_DIM)))
    # conv_w: (out=100, in=50, k=5) -> per-tap (in, out) slabs, padded to (64, 128)
    wc = jnp.stack(
        [jnp.pad(conv_w[:, :, k].T.astype(jnp.float32),
                 ((0, CP - EMB_DIM), (0, HP - HIDDEN))) for k in range(KSIZE)])
    bc = jnp.pad(conv_b.reshape(1, HIDDEN).astype(jnp.float32),
                 ((0, 0), (0, HP - HIDDEN)))
    w1 = jnp.pad(fc1_w.T.astype(jnp.float32),
                 ((0, HP - HIDDEN), (0, HP - HIDDEN)))
    b1 = jnp.pad(fc1_b.reshape(1, HIDDEN).astype(jnp.float32),
                 ((0, 0), (0, HP - HIDDEN)))
    w2 = jnp.pad(fc2_w.reshape(1, HIDDEN).astype(jnp.float32),
                 ((0, 0), (0, HP - HIDDEN)))
    # TODO(synk): on v5e, cast table_p/wc/w1 to bf16 (keep f32 accumulation) once
    # many sentences are batched per call; verify against the 1e-3 tolerance first.
    return tuple(jax.device_put(x) for x in (table_p, wc, bc, w1, b1, w2))


@jax.jit
def word_att_forward_padded(indices, table_p, wc, bc, w1, b1, w2):
    """indices: (S, B) int32 token ids.  Returns lane-dense (1, B, 128) float32."""
    # TODO(synk): training-mode dropout (p=0.5) not modeled; eval semantics (identity).
    S, B = indices.shape
    SB = S * B
    idx_flat = indices.reshape(SB).astype(jnp.int32)    # row i = s*B + b

    # TODO(synk): to fill the 256-wide MXU on v6e/v7x (and shard across v7x's two
    # TensorCores), batch many sentences per call and add a leading grid axis with
    # dimension_semantics=("parallel",); at S=20/B=2 a single no-grid invocation
    # is latency-bound anyway, so no grid is used here.
    return pl.pallas_call(
        word_att_kernel,
        out_shape=jax.ShapeDtypeStruct((1, B, HP), jnp.float32),
        in_specs=[
            pl.BlockSpec(memory_space=pltpu.MemorySpace.SMEM),   # token ids
            pl.BlockSpec(memory_space=pl.ANY),                   # emb table stays in HBM
            pl.BlockSpec(memory_space=pltpu.MemorySpace.VMEM),   # wc
            pl.BlockSpec(memory_space=pltpu.MemorySpace.VMEM),   # bc
            pl.BlockSpec(memory_space=pltpu.MemorySpace.VMEM),   # w1
            pl.BlockSpec(memory_space=pltpu.MemorySpace.VMEM),   # b1
            pl.BlockSpec(memory_space=pltpu.MemorySpace.VMEM),   # w2
        ],
        out_specs=pl.BlockSpec(memory_space=pltpu.MemorySpace.VMEM),
        scratch_shapes=[
            pltpu.VMEM((SB, CP), jnp.float32),    # gathered embedding rows
            pltpu.SemaphoreType.DMA(()),          # shared gather semaphore
        ],
        # Working set « 1 MiB; explicit limit is headroom-safe on v7x's 64 MiB VMEM.
        compiler_params=pltpu.CompilerParams(vmem_limit_bytes=32 * 1024 * 1024),
    )(idx_flat, table_p, wc, bc, w1, b1, w2)


def word_att_forward(indices, prepared_params):
    """API-compatible wrapper returning (1, B, 100) like the PyTorch module.

    Downstream consumers should prefer word_att_forward_padded and keep the
    lane-dense 128-wide features (slice only at the final consumer).
    """
    return word_att_forward_padded(indices, *prepared_params)[:, :, :HIDDEN]


def reference_forward(indices, params):
    """Pure-JAX reference mirroring the PyTorch forward (eval-mode dropout)."""
    emb_table, conv_w, conv_b, fc1_w, fc1_b, fc2_w = params
    hp = jax.lax.Precision.HIGHEST
    emb = emb_table[indices]                         # (S, B, C)
    x = jnp.transpose(emb, (1, 2, 0))                # (B, C, S)  == permute(1,2,0)
    f = jax.lax.conv_general_dilated(
        x, conv_w, window_strides=(1,), padding="VALID",
        dimension_numbers=("NCH", "OIH", "NCH"), precision=hp)
    f = f + conv_b[None, :, None]                    # (B, H, L)
    f = jnp.transpose(f, (2, 0, 1))                  # (L, B, H)  == permute(2,0,1)
    h = jnp.tanh(jnp.einsum("lbh,oh->lbo", f, fc1_w, precision=hp) + fc1_b)
    s = jnp.einsum("lbh,oh->lbo", h, fc2_w, precision=hp)   # (L, B, 1)
    w = jax.nn.softmax(s, axis=0)
    return (w * f).sum(0)[None]                      # (1, B, H)


if __name__ == "__main__":
    key = jax.random.PRNGKey(0)
    ks = jax.random.split(key, 7)
    # deterministic synthetic parameters (shapes per module __init__)
    emb_table = jax.random.normal(ks[0], (VOCAB, EMB_DIM), jnp.float32) * 0.1
    conv_w = jax.random.normal(ks[1], (HIDDEN, EMB_DIM, KSIZE), jnp.float32) * 0.05
    conv_b = jax.random.normal(ks[2], (HIDDEN,), jnp.float32) * 0.05
    fc1_w = jax.random.normal(ks[3], (HIDDEN, HIDDEN), jnp.float32) * 0.05
    fc1_b = jax.random.normal(ks[4], (HIDDEN,), jnp.float32) * 0.05
    fc2_w = jax.random.normal(ks[5], (1, HIDDEN), jnp.float32) * 0.05
    params = (emb_table, conv_w, conv_b, fc1_w, fc1_b, fc2_w)

    seq_len, batch = 20, 2
    indices = jax.random.randint(ks[6], (seq_len, batch), 0, VOCAB, dtype=jnp.int32)

    prepared = prepare_params(params)                         # one-time weight prep
    out_padded = jax.block_until_ready(word_att_forward_padded(indices, *prepared))
    out = out_padded[:, :, :HIDDEN]                           # slice at the consumer

    ref = jax.block_until_ready(reference_forward(indices, params))
    assert out_padded.shape == (1, batch, HP), out_padded.shape
    assert jnp.allclose(out, ref, atol=1e-3, rtol=1e-3), float(jnp.max(jnp.abs(out - ref)))
    # padded feature lanes must stay exactly zero through the whole chain
    assert float(jnp.max(jnp.abs(out_padded[:, :, HIDDEN:]))) == 0.0

    print("KERNEL_OK")
</pallas_src>

<mosaic_0001>
module attributes {stable_mosaic.version = 11 : i64} {
  func.func @word_att_kernel(%arg0: memref<40xi32, #tpu.memory_space<smem>>, %arg1: memref<4000x64xf32, #tpu.memory_space<any>>, %arg2: memref<5x64x128xf32, #tpu.memory_space<vmem>>, %arg3: memref<1x128xf32, #tpu.memory_space<vmem>>, %arg4: memref<128x128xf32, #tpu.memory_space<vmem>>, %arg5: memref<1x128xf32, #tpu.memory_space<vmem>>, %arg6: memref<1x128xf32, #tpu.memory_space<vmem>>, %arg7: memref<1x2x128xf32, #tpu.memory_space<vmem>>, %arg8: memref<40x64xf32, #tpu.memory_space<vmem>>, %arg9: memref<!tpu.dma_semaphore, #tpu.memory_space<semaphore_mem>>) attributes {dimension_semantics = [], scalar_prefetch = 0 : i64, scratch_operands = 2 : i64, tpu.core_type = #tpu.core_type<tc>} {
    %c0 = arith.constant 0 : index
    %0 = memref.load %arg0[%c0] : memref<40xi32, #tpu.memory_space<smem>>
    %c0_i32 = arith.constant 0 : i32
    %1 = tpu.memref_slice %arg1[%0, %c0_i32] : memref<4000x64xf32, #tpu.memory_space<any>> -> memref<1x64xf32, #tpu.memory_space<any>>
    %c0_i32_0 = arith.constant 0 : i32
    %c0_i32_1 = arith.constant 0 : i32
    %2 = tpu.memref_slice %arg8[%c0_i32_0, %c0_i32_1] : memref<40x64xf32, #tpu.memory_space<vmem>> -> memref<1x64xf32, #tpu.memory_space<vmem>>
    tpu.enqueue_dma source(%1 : memref<1x64xf32, #tpu.memory_space<any>>) target(%2 : memref<1x64xf32, #tpu.memory_space<vmem>>) target_semaphore(%arg9 : memref<!tpu.dma_semaphore, #tpu.memory_space<semaphore_mem>>)
    %c1 = arith.constant 1 : index
    %3 = memref.load %arg0[%c1] : memref<40xi32, #tpu.memory_space<smem>>
    %c0_i32_2 = arith.constant 0 : i32
    %4 = tpu.memref_slice %arg1[%3, %c0_i32_2] : memref<4000x64xf32, #tpu.memory_space<any>> -> memref<1x64xf32, #tpu.memory_space<any>>
    %c1_i32 = arith.constant 1 : i32
    %c0_i32_3 = arith.constant 0 : i32
    %5 = tpu.memref_slice %arg8[%c1_i32, %c0_i32_3] : memref<40x64xf32, #tpu.memory_space<vmem>> -> memref<1x64xf32, #tpu.memory_space<vmem>>
    tpu.enqueue_dma source(%4 : memref<1x64xf32, #tpu.memory_space<any>>) target(%5 : memref<1x64xf32, #tpu.memory_space<vmem>>) target_semaphore(%arg9 : memref<!tpu.dma_semaphore, #tpu.memory_space<semaphore_mem>>)
    %c2 = arith.constant 2 : index
    %6 = memref.load %arg0[%c2] : memref<40xi32, #tpu.memory_space<smem>>
    %c0_i32_4 = arith.constant 0 : i32
    %7 = tpu.memref_slice %arg1[%6, %c0_i32_4] : memref<4000x64xf32, #tpu.memory_space<any>> -> memref<1x64xf32, #tpu.memory_space<any>>
    %c2_i32 = arith.constant 2 : i32
    %c0_i32_5 = arith.constant 0 : i32
    %8 = tpu.memref_slice %arg8[%c2_i32, %c0_i32_5] : memref<40x64xf32, #tpu.memory_space<vmem>> -> memref<1x64xf32, #tpu.memory_space<vmem>>
    tpu.enqueue_dma source(%7 : memref<1x64xf32, #tpu.memory_space<any>>) target(%8 : memref<1x64xf32, #tpu.memory_space<vmem>>) target_semaphore(%arg9 : memref<!tpu.dma_semaphore, #tpu.memory_space<semaphore_mem>>)
    %c3 = arith.constant 3 : index
    %9 = memref.load %arg0[%c3] : memref<40xi32, #tpu.memory_space<smem>>
    %c0_i32_6 = arith.constant 0 : i32
    %10 = tpu.memref_slice %arg1[%9, %c0_i32_6] : memref<4000x64xf32, #tpu.memory_space<any>> -> memref<1x64xf32, #tpu.memory_space<any>>
    %c3_i32 = arith.constant 3 : i32
    %c0_i32_7 = arith.constant 0 : i32
    %11 = tpu.memref_slice %arg8[%c3_i32, %c0_i32_7] : memref<40x64xf32, #tpu.memory_space<vmem>> -> memref<1x64xf32, #tpu.memory_space<vmem>>
    tpu.enqueue_dma source(%10 : memref<1x64xf32, #tpu.memory_space<any>>) target(%11 : memref<1x64xf32, #tpu.memory_space<vmem>>) target_semaphore(%arg9 : memref<!tpu.dma_semaphore, #tpu.memory_space<semaphore_mem>>)
    %c4 = arith.constant 4 : index
    %12 = memref.load %arg0[%c4] : memref<40xi32, #tpu.memory_space<smem>>
    %c0_i32_8 = arith.constant 0 : i32
    %13 = tpu.memref_slice %arg1[%12, %c0_i32_8] : memref<4000x64xf32, #tpu.memory_space<any>> -> memref<1x64xf32, #tpu.memory_space<any>>
    %c4_i32 = arith.constant 4 : i32
    %c0_i32_9 = arith.constant 0 : i32
    %14 = tpu.memref_slice %arg8[%c4_i32, %c0_i32_9] : memref<40x64xf32, #tpu.memory_space<vmem>> -> memref<1x64xf32, #tpu.memory_space<vmem>>
    tpu.enqueue_dma source(%13 : memref<1x64xf32, #tpu.memory_space<any>>) target(%14 : memref<1x64xf32, #tpu.memory_space<vmem>>) target_semaphore(%arg9 : memref<!tpu.dma_semaphore, #tpu.memory_space<semaphore_mem>>)
    %c5 = arith.constant 5 : index
    %15 = memref.load %arg0[%c5] : memref<40xi32, #tpu.memory_space<smem>>
    %c0_i32_10 = arith.constant 0 : i32
    %16 = tpu.memref_slice %arg1[%15, %c0_i32_10] : memref<4000x64xf32, #tpu.memory_space<any>> -> memref<1x64xf32, #tpu.memory_space<any>>
    %c5_i32 = arith.constant 5 : i32
    %c0_i32_11 = arith.constant 0 : i32
    %17 = tpu.memref_slice %arg8[%c5_i32, %c0_i32_11] : memref<40x64xf32, #tpu.memory_space<vmem>> -> memref<1x64xf32, #tpu.memory_space<vmem>>
    tpu.enqueue_dma source(%16 : memref<1x64xf32, #tpu.memory_space<any>>) target(%17 : memref<1x64xf32, #tpu.memory_space<vmem>>) target_semaphore(%arg9 : memref<!tpu.dma_semaphore, #tpu.memory_space<semaphore_mem>>)
    %c6 = arith.constant 6 : index
    %18 = memref.load %arg0[%c6] : memref<40xi32, #tpu.memory_space<smem>>
    %c0_i32_12 = arith.constant 0 : i32
    %19 = tpu.memref_slice %arg1[%18, %c0_i32_12] : memref<4000x64xf32, #tpu.memory_space<any>> -> memref<1x64xf32, #tpu.memory_space<any>>
    %c6_i32 = arith.constant 6 : i32
    %c0_i32_13 = arith.constant 0 : i32
    %20 = tpu.memref_slice %arg8[%c6_i32, %c0_i32_13] : memref<40x64xf32, #tpu.memory_space<vmem>> -> memref<1x64xf32, #tpu.memory_space<vmem>>
    tpu.enqueue_dma source(%19 : memref<1x64xf32, #tpu.memory_space<any>>) target(%20 : memref<1x64xf32, #tpu.memory_space<vmem>>) target_semaphore(%arg9 : memref<!tpu.dma_semaphore, #tpu.memory_space<semaphore_mem>>)
    %c7 = arith.constant 7 : index
    %21 = memref.load %arg0[%c7] : memref<40xi32, #tpu.memory_space<smem>>
    %c0_i32_14 = arith.constant 0 : i32
    %22 = tpu.memref_slice %arg1[%21, %c0_i32_14] : memref<4000x64xf32, #tpu.memory_space<any>> -> memref<1x64xf32, #tpu.memory_space<any>>
    %c7_i32 = arith.constant 7 : i32
    %c0_i32_15 = arith.constant 0 : i32
    %23 = tpu.memref_slice %arg8[%c7_i32, %c0_i32_15] : memref<40x64xf32, #tpu.memory_space<vmem>> -> memref<1x64xf32, #tpu.memory_space<vmem>>
    tpu.enqueue_dma source(%22 : memref<1x64xf32, #tpu.memory_space<any>>) target(%23 : memref<1x64xf32, #tpu.memory_space<vmem>>) target_semaphore(%arg9 : memref<!tpu.dma_semaphore, #tpu.memory_space<semaphore_mem>>)
    %c8 = arith.constant 8 : index
    %24 = memref.load %arg0[%c8] : memref<40xi32, #tpu.memory_space<smem>>
    %c0_i32_16 = arith.constant 0 : i32
    %25 = tpu.memref_slice %arg1[%24, %c0_i32_16] : memref<4000x64xf32, #tpu.memory_space<any>> -> memref<1x64xf32, #tpu.memory_space<any>>
    %c8_i32 = arith.constant 8 : i32
    %c0_i32_17 = arith.constant 0 : i32
    %26 = tpu.memref_slice %arg8[%c8_i32, %c0_i32_17] : memref<40x64xf32, #tpu.memory_space<vmem>> -> memref<1x64xf32, #tpu.memory_space<vmem>>
    tpu.enqueue_dma source(%25 : memref<1x64xf32, #tpu.memory_space<any>>) target(%26 : memref<1x64xf32, #tpu.memory_space<vmem>>) target_semaphore(%arg9 : memref<!tpu.dma_semaphore, #tpu.memory_space<semaphore_mem>>)
    %c9 = arith.constant 9 : index
    %27 = memref.load %arg0[%c9] : memref<40xi32, #tpu.memory_space<smem>>
    %c0_i32_18 = arith.constant 0 : i32
    %28 = tpu.memref_slice %arg1[%27, %c0_i32_18] : memref<4000x64xf32, #tpu.memory_space<any>> -> memref<1x64xf32, #tpu.memory_space<any>>
    %c9_i32 = arith.constant 9 : i32
    %c0_i32_19 = arith.constant 0 : i32
    %29 = tpu.memref_slice %arg8[%c9_i32, %c0_i32_19] : memref<40x64xf32, #tpu.memory_space<vmem>> -> memref<1x64xf32, #tpu.memory_space<vmem>>
    tpu.enqueue_dma source(%28 : memref<1x64xf32, #tpu.memory_space<any>>) target(%29 : memref<1x64xf32, #tpu.memory_space<vmem>>) target_semaphore(%arg9 : memref<!tpu.dma_semaphore, #tpu.memory_space<semaphore_mem>>)
    %c10 = arith.constant 10 : index
    %30 = memref.load %arg0[%c10] : memref<40xi32, #tpu.memory_space<smem>>
    %c0_i32_20 = arith.constant 0 : i32
    %31 = tpu.memref_slice %arg1[%30, %c0_i32_20] : memref<4000x64xf32, #tpu.memory_space<any>> -> memref<1x64xf32, #tpu.memory_space<any>>
    %c10_i32 = arith.constant 10 : i32
    %c0_i32_21 = arith.constant 0 : i32
    %32 = tpu.memref_slice %arg8[%c10_i32, %c0_i32_21] : memref<40x64xf32, #tpu.memory_space<vmem>> -> memref<1x64xf32, #tpu.memory_space<vmem>>
    tpu.enqueue_dma source(%31 : memref<1x64xf32, #tpu.memory_space<any>>) target(%32 : memref<1x64xf32, #tpu.memory_space<vmem>>) target_semaphore(%arg9 : memref<!tpu.dma_semaphore, #tpu.memory_space<semaphore_mem>>)
    %c11 = arith.constant 11 : index
    %33 = memref.load %arg0[%c11] : memref<40xi32, #tpu.memory_space<smem>>
    %c0_i32_22 = arith.constant 0 : i32
    %34 = tpu.memref_slice %arg1[%33, %c0_i32_22] : memref<4000x64xf32, #tpu.memory_space<any>> -> memref<1x64xf32, #tpu.memory_space<any>>
    %c11_i32 = arith.constant 11 : i32
    %c0_i32_23 = arith.constant 0 : i32
    %35 = tpu.memref_slice %arg8[%c11_i32, %c0_i32_23] : memref<40x64xf32, #tpu.memory_space<vmem>> -> memref<1x64xf32, #tpu.memory_space<vmem>>
    tpu.enqueue_dma source(%34 : memref<1x64xf32, #tpu.memory_space<any>>) target(%35 : memref<1x64xf32, #tpu.memory_space<vmem>>) target_semaphore(%arg9 : memref<!tpu.dma_semaphore, #tpu.memory_space<semaphore_mem>>)
    %c12 = arith.constant 12 : index
    %36 = memref.load %arg0[%c12] : memref<40xi32, #tpu.memory_space<smem>>
    %c0_i32_24 = arith.constant 0 : i32
    %37 = tpu.memref_slice %arg1[%36, %c0_i32_24] : memref<4000x64xf32, #tpu.memory_space<any>> -> memref<1x64xf32, #tpu.memory_space<any>>
    %c12_i32 = arith.constant 12 : i32
    %c0_i32_25 = arith.constant 0 : i32
    %38 = tpu.memref_slice %arg8[%c12_i32, %c0_i32_25] : memref<40x64xf32, #tpu.memory_space<vmem>> -> memref<1x64xf32, #tpu.memory_space<vmem>>
    tpu.enqueue_dma source(%37 : memref<1x64xf32, #tpu.memory_space<any>>) target(%38 : memref<1x64xf32, #tpu.memory_space<vmem>>) target_semaphore(%arg9 : memref<!tpu.dma_semaphore, #tpu.memory_space<semaphore_mem>>)
    %c13 = arith.constant 13 : index
    %39 = memref.load %arg0[%c13] : memref<40xi32, #tpu.memory_space<smem>>
    %c0_i32_26 = arith.constant 0 : i32
    %40 = tpu.memref_slice %arg1[%39, %c0_i32_26] : memref<4000x64xf32, #tpu.memory_space<any>> -> memref<1x64xf32, #tpu.memory_space<any>>
    %c13_i32 = arith.constant 13 : i32
    %c0_i32_27 = arith.constant 0 : i32
    %41 = tpu.memref_slice %arg8[%c13_i32, %c0_i32_27] : memref<40x64xf32, #tpu.memory_space<vmem>> -> memref<1x64xf32, #tpu.memory_space<vmem>>
    tpu.enqueue_dma source(%40 : memref<1x64xf32, #tpu.memory_space<any>>) target(%41 : memref<1x64xf32, #tpu.memory_space<vmem>>) target_semaphore(%arg9 : memref<!tpu.dma_semaphore, #tpu.memory_space<semaphore_mem>>)
    %c14 = arith.constant 14 : index
    %42 = memref.load %arg0[%c14] : memref<40xi32, #tpu.memory_space<smem>>
    %c0_i32_28 = arith.constant 0 : i32
    %43 = tpu.memref_slice %arg1[%42, %c0_i32_28] : memref<4000x64xf32, #tpu.memory_space<any>> -> memref<1x64xf32, #tpu.memory_space<any>>
    %c14_i32 = arith.constant 14 : i32
    %c0_i32_29 = arith.constant 0 : i32
    %44 = tpu.memref_slice %arg8[%c14_i32, %c0_i32_29] : memref<40x64xf32, #tpu.memory_space<vmem>> -> memref<1x64xf32, #tpu.memory_space<vmem>>
    tpu.enqueue_dma source(%43 : memref<1x64xf32, #tpu.memory_space<any>>) target(%44 : memref<1x64xf32, #tpu.memory_space<vmem>>) target_semaphore(%arg9 : memref<!tpu.dma_semaphore, #tpu.memory_space<semaphore_mem>>)
    %c15 = arith.constant 15 : index
    %45 = memref.load %arg0[%c15] : memref<40xi32, #tpu.memory_space<smem>>
    %c0_i32_30 = arith.constant 0 : i32
    %46 = tpu.memref_slice %arg1[%45, %c0_i32_30] : memref<4000x64xf32, #tpu.memory_space<any>> -> memref<1x64xf32, #tpu.memory_space<any>>
    %c15_i32 = arith.constant 15 : i32
    %c0_i32_31 = arith.constant 0 : i32
    %47 = tpu.memref_slice %arg8[%c15_i32, %c0_i32_31] : memref<40x64xf32, #tpu.memory_space<vmem>> -> memref<1x64xf32, #tpu.memory_space<vmem>>
    tpu.enqueue_dma source(%46 : memref<1x64xf32, #tpu.memory_space<any>>) target(%47 : memref<1x64xf32, #tpu.memory_space<vmem>>) target_semaphore(%arg9 : memref<!tpu.dma_semaphore, #tpu.memory_space<semaphore_mem>>)
    %c16 = arith.constant 16 : index
    %48 = memref.load %arg0[%c16] : memref<40xi32, #tpu.memory_space<smem>>
    %c0_i32_32 = arith.constant 0 : i32
    %49 = tpu.memref_slice %arg1[%48, %c0_i32_32] : memref<4000x64xf32, #tpu.memory_space<any>> -> memref<1x64xf32, #tpu.memory_space<any>>
    %c16_i32 = arith.constant 16 : i32
    %c0_i32_33 = arith.constant 0 : i32
    %50 = tpu.memref_slice %arg8[%c16_i32, %c0_i32_33] : memref<40x64xf32, #tpu.memory_space<vmem>> -> memref<1x64xf32, #tpu.memory_space<vmem>>
    tpu.enqueue_dma source(%49 : memref<1x64xf32, #tpu.memory_space<any>>) target(%50 : memref<1x64xf32, #tpu.memory_space<vmem>>) target_semaphore(%arg9 : memref<!tpu.dma_semaphore, #tpu.memory_space<semaphore_mem>>)
    %c17 = arith.constant 17 : index
    %51 = memref.load %arg0[%c17] : memref<40xi32, #tpu.memory_space<smem>>
    %c0_i32_34 = arith.constant 0 : i32
    %52 = tpu.memref_slice %arg1[%51, %c0_i32_34] : memref<4000x64xf32, #tpu.memory_space<any>> -> memref<1x64xf32, #tpu.memory_space<any>>
    %c17_i32 = arith.constant 17 : i32
    %c0_i32_35 = arith.constant 0 : i32
    %53 = tpu.memref_slice %arg8[%c17_i32, %c0_i32_35] : memref<40x64xf32, #tpu.memory_space<vmem>> -> memref<1x64xf32, #tpu.memory_space<vmem>>
    tpu.enqueue_dma source(%52 : memref<1x64xf32, #tpu.memory_space<any>>) target(%53 : memref<1x64xf32, #tpu.memory_space<vmem>>) target_semaphore(%arg9 : memref<!tpu.dma_semaphore, #tpu.memory_space<semaphore_mem>>)
    %c18 = arith.constant 18 : index
    %54 = memref.load %arg0[%c18] : memref<40xi32, #tpu.memory_space<smem>>
    %c0_i32_36 = arith.constant 0 : i32
    %55 = tpu.memref_slice %arg1[%54, %c0_i32_36] : memref<4000x64xf32, #tpu.memory_space<any>> -> memref<1x64xf32, #tpu.memory_space<any>>
    %c18_i32 = arith.constant 18 : i32
    %c0_i32_37 = arith.constant 0 : i32
    %56 = tpu.memref_slice %arg8[%c18_i32, %c0_i32_37] : memref<40x64xf32, #tpu.memory_space<vmem>> -> memref<1x64xf32, #tpu.memory_space<vmem>>
    tpu.enqueue_dma source(%55 : memref<1x64xf32, #tpu.memory_space<any>>) target(%56 : memref<1x64xf32, #tpu.memory_space<vmem>>) target_semaphore(%arg9 : memref<!tpu.dma_semaphore, #tpu.memory_space<semaphore_mem>>)
    %c19 = arith.constant 19 : index
    %57 = memref.load %arg0[%c19] : memref<40xi32, #tpu.memory_space<smem>>
    %c0_i32_38 = arith.constant 0 : i32
    %58 = tpu.memref_slice %arg1[%57, %c0_i32_38] : memref<4000x64xf32, #tpu.memory_space<any>> -> memref<1x64xf32, #tpu.memory_space<any>>
    %c19_i32 = arith.constant 19 : i32
    %c0_i32_39 = arith.constant 0 : i32
    %59 = tpu.memref_slice %arg8[%c19_i32, %c0_i32_39] : memref<40x64xf32, #tpu.memory_space<vmem>> -> memref<1x64xf32, #tpu.memory_space<vmem>>
    tpu.enqueue_dma source(%58 : memref<1x64xf32, #tpu.memory_space<any>>) target(%59 : memref<1x64xf32, #tpu.memory_space<vmem>>) target_semaphore(%arg9 : memref<!tpu.dma_semaphore, #tpu.memory_space<semaphore_mem>>)
    %c20 = arith.constant 20 : index
    %60 = memref.load %arg0[%c20] : memref<40xi32, #tpu.memory_space<smem>>
    %c0_i32_40 = arith.constant 0 : i32
    %61 = tpu.memref_slice %arg1[%60, %c0_i32_40] : memref<4000x64xf32, #tpu.memory_space<any>> -> memref<1x64xf32, #tpu.memory_space<any>>
    %c20_i32 = arith.constant 20 : i32
    %c0_i32_41 = arith.constant 0 : i32
    %62 = tpu.memref_slice %arg8[%c20_i32, %c0_i32_41] : memref<40x64xf32, #tpu.memory_space<vmem>> -> memref<1x64xf32, #tpu.memory_space<vmem>>
    tpu.enqueue_dma source(%61 : memref<1x64xf32, #tpu.memory_space<any>>) target(%62 : memref<1x64xf32, #tpu.memory_space<vmem>>) target_semaphore(%arg9 : memref<!tpu.dma_semaphore, #tpu.memory_space<semaphore_mem>>)
    %c21 = arith.constant 21 : index
    %63 = memref.load %arg0[%c21] : memref<40xi32, #tpu.memory_space<smem>>
    %c0_i32_42 = arith.constant 0 : i32
    %64 = tpu.memref_slice %arg1[%63, %c0_i32_42] : memref<4000x64xf32, #tpu.memory_space<any>> -> memref<1x64xf32, #tpu.memory_space<any>>
    %c21_i32 = arith.constant 21 : i32
    %c0_i32_43 = arith.constant 0 : i32
    %65 = tpu.memref_slice %arg8[%c21_i32, %c0_i32_43] : memref<40x64xf32, #tpu.memory_space<vmem>> -> memref<1x64xf32, #tpu.memory_space<vmem>>
    tpu.enqueue_dma source(%64 : memref<1x64xf32, #tpu.memory_space<any>>) target(%65 : memref<1x64xf32, #tpu.memory_space<vmem>>) target_semaphore(%arg9 : memref<!tpu.dma_semaphore, #tpu.memory_space<semaphore_mem>>)
    %c22 = arith.constant 22 : index
    %66 = memref.load %arg0[%c22] : memref<40xi32, #tpu.memory_space<smem>>
    %c0_i32_44 = arith.constant 0 : i32
    %67 = tpu.memref_slice %arg1[%66, %c0_i32_44] : memref<4000x64xf32, #tpu.memory_space<any>> -> memref<1x64xf32, #tpu.memory_space<any>>
    %c22_i32 = arith.constant 22 : i32
    %c0_i32_45 = arith.constant 0 : i32
    %68 = tpu.memref_slice %arg8[%c22_i32, %c0_i32_45] : memref<40x64xf32, #tpu.memory_space<vmem>> -> memref<1x64xf32, #tpu.memory_space<vmem>>
    tpu.enqueue_dma source(%67 : memref<1x64xf32, #tpu.memory_space<any>>) target(%68 : memref<1x64xf32, #tpu.memory_space<vmem>>) target_semaphore(%arg9 : memref<!tpu.dma_semaphore, #tpu.memory_space<semaphore_mem>>)
    %c23 = arith.constant 23 : index
    %69 = memref.load %arg0[%c23] : memref<40xi32, #tpu.memory_space<smem>>
    %c0_i32_46 = arith.constant 0 : i32
    %70 = tpu.memref_slice %arg1[%69, %c0_i32_46] : memref<4000x64xf32, #tpu.memory_space<any>> -> memref<1x64xf32, #tpu.memory_space<any>>
    %c23_i32 = arith.constant 23 : i32
    %c0_i32_47 = arith.constant 0 : i32
    %71 = tpu.memref_slice %arg8[%c23_i32, %c0_i32_47] : memref<40x64xf32, #tpu.memory_space<vmem>> -> memref<1x64xf32, #tpu.memory_space<vmem>>
    tpu.enqueue_dma source(%70 : memref<1x64xf32, #tpu.memory_space<any>>) target(%71 : memref<1x64xf32, #tpu.memory_space<vmem>>) target_semaphore(%arg9 : memref<!tpu.dma_semaphore, #tpu.memory_space<semaphore_mem>>)
    %c24 = arith.constant 24 : index
    %72 = memref.load %arg0[%c24] : memref<40xi32, #tpu.memory_space<smem>>
    %c0_i32_48 = arith.constant 0 : i32
    %73 = tpu.memref_slice %arg1[%72, %c0_i32_48] : memref<4000x64xf32, #tpu.memory_space<any>> -> memref<1x64xf32, #tpu.memory_space<any>>
    %c24_i32 = arith.constant 24 : i32
    %c0_i32_49 = arith.constant 0 : i32
    %74 = tpu.memref_slice %arg8[%c24_i32, %c0_i32_49] : memref<40x64xf32, #tpu.memory_space<vmem>> -> memref<1x64xf32, #tpu.memory_space<vmem>>
    tpu.enqueue_dma source(%73 : memref<1x64xf32, #tpu.memory_space<any>>) target(%74 : memref<1x64xf32, #tpu.memory_space<vmem>>) target_semaphore(%arg9 : memref<!tpu.dma_semaphore, #tpu.memory_space<semaphore_mem>>)
    %c25 = arith.constant 25 : index
    %75 = memref.load %arg0[%c25] : memref<40xi32, #tpu.memory_space<smem>>
    %c0_i32_50 = arith.constant 0 : i32
    %76 = tpu.memref_slice %arg1[%75, %c0_i32_50] : memref<4000x64xf32, #tpu.memory_space<any>> -> memref<1x64xf32, #tpu.memory_space<any>>
    %c25_i32 = arith.constant 25 : i32
    %c0_i32_51 = arith.constant 0 : i32
    %77 = tpu.memref_slice %arg8[%c25_i32, %c0_i32_51] : memref<40x64xf32, #tpu.memory_space<vmem>> -> memref<1x64xf32, #tpu.memory_space<vmem>>
    tpu.enqueue_dma source(%76 : memref<1x64xf32, #tpu.memory_space<any>>) target(%77 : memref<1x64xf32, #tpu.memory_space<vmem>>) target_semaphore(%arg9 : memref<!tpu.dma_semaphore, #tpu.memory_space<semaphore_mem>>)
    %c26 = arith.constant 26 : index
    %78 = memref.load %arg0[%c26] : memref<40xi32, #tpu.memory_space<smem>>
    %c0_i32_52 = arith.constant 0 : i32
    %79 = tpu.memref_slice %arg1[%78, %c0_i32_52] : memref<4000x64xf32, #tpu.memory_space<any>> -> memref<1x64xf32, #tpu.memory_space<any>>
    %c26_i32 = arith.constant 26 : i32
    %c0_i32_53 = arith.constant 0 : i32
    %80 = tpu.memref_slice %arg8[%c26_i32, %c0_i32_53] : memref<40x64xf32, #tpu.memory_space<vmem>> -> memref<1x64xf32, #tpu.memory_space<vmem>>
    tpu.enqueue_dma source(%79 : memref<1x64xf32, #tpu.memory_space<any>>) target(%80 : memref<1x64xf32, #tpu.memory_space<vmem>>) target_semaphore(%arg9 : memref<!tpu.dma_semaphore, #tpu.memory_space<semaphore_mem>>)
    %c27 = arith.constant 27 : index
    %81 = memref.load %arg0[%c27] : memref<40xi32, #tpu.memory_space<smem>>
    %c0_i32_54 = arith.constant 0 : i32
    %82 = tpu.memref_slice %arg1[%81, %c0_i32_54] : memref<4000x64xf32, #tpu.memory_space<any>> -> memref<1x64xf32, #tpu.memory_space<any>>
    %c27_i32 = arith.constant 27 : i32
    %c0_i32_55 = arith.constant 0 : i32
    %83 = tpu.memref_slice %arg8[%c27_i32, %c0_i32_55] : memref<40x64xf32, #tpu.memory_space<vmem>> -> memref<1x64xf32, #tpu.memory_space<vmem>>
    tpu.enqueue_dma source(%82 : memref<1x64xf32, #tpu.memory_space<any>>) target(%83 : memref<1x64xf32, #tpu.memory_space<vmem>>) target_semaphore(%arg9 : memref<!tpu.dma_semaphore, #tpu.memory_space<semaphore_mem>>)
    %c28 = arith.constant 28 : index
    %84 = memref.load %arg0[%c28] : memref<40xi32, #tpu.memory_space<smem>>
    %c0_i32_56 = arith.constant 0 : i32
    %85 = tpu.memref_slice %arg1[%84, %c0_i32_56] : memref<4000x64xf32, #tpu.memory_space<any>> -> memref<1x64xf32, #tpu.memory_space<any>>
    %c28_i32 = arith.constant 28 : i32
    %c0_i32_57 = arith.constant 0 : i32
    %86 = tpu.memref_slice %arg8[%c28_i32, %c0_i32_57] : memref<40x64xf32, #tpu.memory_space<vmem>> -> memref<1x64xf32, #tpu.memory_space<vmem>>
    tpu.enqueue_dma source(%85 : memref<1x64xf32, #tpu.memory_space<any>>) target(%86 : memref<1x64xf32, #tpu.memory_space<vmem>>) target_semaphore(%arg9 : memref<!tpu.dma_semaphore, #tpu.memory_space<semaphore_mem>>)
    %c29 = arith.constant 29 : index
    %87 = memref.load %arg0[%c29] : memref<40xi32, #tpu.memory_space<smem>>
    %c0_i32_58 = arith.constant 0 : i32
    %88 = tpu.memref_slice %arg1[%87, %c0_i32_58] : memref<4000x64xf32, #tpu.memory_space<any>> -> memref<1x64xf32, #tpu.memory_space<any>>
    %c29_i32 = arith.constant 29 : i32
    %c0_i32_59 = arith.constant 0 : i32
    %89 = tpu.memref_slice %arg8[%c29_i32, %c0_i32_59] : memref<40x64xf32, #tpu.memory_space<vmem>> -> memref<1x64xf32, #tpu.memory_space<vmem>>
    tpu.enqueue_dma source(%88 : memref<1x64xf32, #tpu.memory_space<any>>) target(%89 : memref<1x64xf32, #tpu.memory_space<vmem>>) target_semaphore(%arg9 : memref<!tpu.dma_semaphore, #tpu.memory_space<semaphore_mem>>)
    %c30 = arith.constant 30 : index
    %90 = memref.load %arg0[%c30] : memref<40xi32, #tpu.memory_space<smem>>
    %c0_i32_60 = arith.constant 0 : i32
    %91 = tpu.memref_slice %arg1[%90, %c0_i32_60] : memref<4000x64xf32, #tpu.memory_space<any>> -> memref<1x64xf32, #tpu.memory_space<any>>
    %c30_i32 = arith.constant 30 : i32
    %c0_i32_61 = arith.constant 0 : i32
    %92 = tpu.memref_slice %arg8[%c30_i32, %c0_i32_61] : memref<40x64xf32, #tpu.memory_space<vmem>> -> memref<1x64xf32, #tpu.memory_space<vmem>>
    tpu.enqueue_dma source(%91 : memref<1x64xf32, #tpu.memory_space<any>>) target(%92 : memref<1x64xf32, #tpu.memory_space<vmem>>) target_semaphore(%arg9 : memref<!tpu.dma_semaphore, #tpu.memory_space<semaphore_mem>>)
    %c31 = arith.constant 31 : index
    %93 = memref.load %arg0[%c31] : memref<40xi32, #tpu.memory_space<smem>>
    %c0_i32_62 = arith.constant 0 : i32
    %94 = tpu.memref_slice %arg1[%93, %c0_i32_62] : memref<4000x64xf32, #tpu.memory_space<any>> -> memref<1x64xf32, #tpu.memory_space<any>>
    %c31_i32 = arith.constant 31 : i32
    %c0_i32_63 = arith.constant 0 : i32
    %95 = tpu.memref_slice %arg8[%c31_i32, %c0_i32_63] : memref<40x64xf32, #tpu.memory_space<vmem>> -> memref<1x64xf32, #tpu.memory_space<vmem>>
    tpu.enqueue_dma source(%94 : memref<1x64xf32, #tpu.memory_space<any>>) target(%95 : memref<1x64xf32, #tpu.memory_space<vmem>>) target_semaphore(%arg9 : memref<!tpu.dma_semaphore, #tpu.memory_space<semaphore_mem>>)
    %c32 = arith.constant 32 : index
    %96 = memref.load %arg0[%c32] : memref<40xi32, #tpu.memory_space<smem>>
    %c0_i32_64 = arith.constant 0 : i32
    %97 = tpu.memref_slice %arg1[%96, %c0_i32_64] : memref<4000x64xf32, #tpu.memory_space<any>> -> memref<1x64xf32, #tpu.memory_space<any>>
    %c32_i32 = arith.constant 32 : i32
    %c0_i32_65 = arith.constant 0 : i32
    %98 = tpu.memref_slice %arg8[%c32_i32, %c0_i32_65] : memref<40x64xf32, #tpu.memory_space<vmem>> -> memref<1x64xf32, #tpu.memory_space<vmem>>
    tpu.enqueue_dma source(%97 : memref<1x64xf32, #tpu.memory_space<any>>) target(%98 : memref<1x64xf32, #tpu.memory_space<vmem>>) target_semaphore(%arg9 : memref<!tpu.dma_semaphore, #tpu.memory_space<semaphore_mem>>)
    %c33 = arith.constant 33 : index
    %99 = memref.load %arg0[%c33] : memref<40xi32, #tpu.memory_space<smem>>
    %c0_i32_66 = arith.constant 0 : i32
    %100 = tpu.memref_slice %arg1[%99, %c0_i32_66] : memref<4000x64xf32, #tpu.memory_space<any>> -> memref<1x64xf32, #tpu.memory_space<any>>
    %c33_i32 = arith.constant 33 : i32
    %c0_i32_67 = arith.constant 0 : i32
    %101 = tpu.memref_slice %arg8[%c33_i32, %c0_i32_67] : memref<40x64xf32, #tpu.memory_space<vmem>> -> memref<1x64xf32, #tpu.memory_space<vmem>>
    tpu.enqueue_dma source(%100 : memref<1x64xf32, #tpu.memory_space<any>>) target(%101 : memref<1x64xf32, #tpu.memory_space<vmem>>) target_semaphore(%arg9 : memref<!tpu.dma_semaphore, #tpu.memory_space<semaphore_mem>>)
    %c34 = arith.constant 34 : index
    %102 = memref.load %arg0[%c34] : memref<40xi32, #tpu.memory_space<smem>>
    %c0_i32_68 = arith.constant 0 : i32
    %103 = tpu.memref_slice %arg1[%102, %c0_i32_68] : memref<4000x64xf32, #tpu.memory_space<any>> -> memref<1x64xf32, #tpu.memory_space<any>>
    %c34_i32 = arith.constant 34 : i32
    %c0_i32_69 = arith.constant 0 : i32
    %104 = tpu.memref_slice %arg8[%c34_i32, %c0_i32_69] : memref<40x64xf32, #tpu.memory_space<vmem>> -> memref<1x64xf32, #tpu.memory_space<vmem>>
    tpu.enqueue_dma source(%103 : memref<1x64xf32, #tpu.memory_space<any>>) target(%104 : memref<1x64xf32, #tpu.memory_space<vmem>>) target_semaphore(%arg9 : memref<!tpu.dma_semaphore, #tpu.memory_space<semaphore_mem>>)
    %c35 = arith.constant 35 : index
    %105 = memref.load %arg0[%c35] : memref<40xi32, #tpu.memory_space<smem>>
    %c0_i32_70 = arith.constant 0 : i32
    %106 = tpu.memref_slice %arg1[%105, %c0_i32_70] : memref<4000x64xf32, #tpu.memory_space<any>> -> memref<1x64xf32, #tpu.memory_space<any>>
    %c35_i32 = arith.constant 35 : i32
    %c0_i32_71 = arith.constant 0 : i32
    %107 = tpu.memref_slice %arg8[%c35_i32, %c0_i32_71] : memref<40x64xf32, #tpu.memory_space<vmem>> -> memref<1x64xf32, #tpu.memory_space<vmem>>
    tpu.enqueue_dma source(%106 : memref<1x64xf32, #tpu.memory_space<any>>) target(%107 : memref<1x64xf32, #tpu.memory_space<vmem>>) target_semaphore(%arg9 : memref<!tpu.dma_semaphore, #tpu.memory_space<semaphore_mem>>)
    %c36 = arith.constant 36 : index
    %108 = memref.load %arg0[%c36] : memref<40xi32, #tpu.memory_space<smem>>
    %c0_i32_72 = arith.constant 0 : i32
    %109 = tpu.memref_slice %arg1[%108, %c0_i32_72] : memref<4000x64xf32, #tpu.memory_space<any>> -> memref<1x64xf32, #tpu.memory_space<any>>
    %c36_i32 = arith.constant 36 : i32
    %c0_i32_73 = arith.constant 0 : i32
    %110 = tpu.memref_slice %arg8[%c36_i32, %c0_i32_73] : memref<40x64xf32, #tpu.memory_space<vmem>> -> memref<1x64xf32, #tpu.memory_space<vmem>>
    tpu.enqueue_dma source(%109 : memref<1x64xf32, #tpu.memory_space<any>>) target(%110 : memref<1x64xf32, #tpu.memory_space<vmem>>) target_semaphore(%arg9 : memref<!tpu.dma_semaphore, #tpu.memory_space<semaphore_mem>>)
    %c37 = arith.constant 37 : index
    %111 = memref.load %arg0[%c37] : memref<40xi32, #tpu.memory_space<smem>>
    %c0_i32_74 = arith.constant 0 : i32
    %112 = tpu.memref_slice %arg1[%111, %c0_i32_74] : memref<4000x64xf32, #tpu.memory_space<any>> -> memref<1x64xf32, #tpu.memory_space<any>>
    %c37_i32 = arith.constant 37 : i32
    %c0_i32_75 = arith.constant 0 : i32
    %113 = tpu.memref_slice %arg8[%c37_i32, %c0_i32_75] : memref<40x64xf32, #tpu.memory_space<vmem>> -> memref<1x64xf32, #tpu.memory_space<vmem>>
    tpu.enqueue_dma source(%112 : memref<1x64xf32, #tpu.memory_space<any>>) target(%113 : memref<1x64xf32, #tpu.memory_space<vmem>>) target_semaphore(%arg9 : memref<!tpu.dma_semaphore, #tpu.memory_space<semaphore_mem>>)
    %c38 = arith.constant 38 : index
    %114 = memref.load %arg0[%c38] : memref<40xi32, #tpu.memory_space<smem>>
    %c0_i32_76 = arith.constant 0 : i32
    %115 = tpu.memref_slice %arg1[%114, %c0_i32_76] : memref<4000x64xf32, #tpu.memory_space<any>> -> memref<1x64xf32, #tpu.memory_space<any>>
    %c38_i32 = arith.constant 38 : i32
    %c0_i32_77 = arith.constant 0 : i32
    %116 = tpu.memref_slice %arg8[%c38_i32, %c0_i32_77] : memref<40x64xf32, #tpu.memory_space<vmem>> -> memref<1x64xf32, #tpu.memory_space<vmem>>
    tpu.enqueue_dma source(%115 : memref<1x64xf32, #tpu.memory_space<any>>) target(%116 : memref<1x64xf32, #tpu.memory_space<vmem>>) target_semaphore(%arg9 : memref<!tpu.dma_semaphore, #tpu.memory_space<semaphore_mem>>)
    %c39 = arith.constant 39 : index
    %117 = memref.load %arg0[%c39] : memref<40xi32, #tpu.memory_space<smem>>
    %c0_i32_78 = arith.constant 0 : i32
    %118 = tpu.memref_slice %arg1[%117, %c0_i32_78] : memref<4000x64xf32, #tpu.memory_space<any>> -> memref<1x64xf32, #tpu.memory_space<any>>
    %c39_i32 = arith.constant 39 : i32
    %c0_i32_79 = arith.constant 0 : i32
    %119 = tpu.memref_slice %arg8[%c39_i32, %c0_i32_79] : memref<40x64xf32, #tpu.memory_space<vmem>> -> memref<1x64xf32, #tpu.memory_space<vmem>>
    tpu.enqueue_dma source(%118 : memref<1x64xf32, #tpu.memory_space<any>>) target(%119 : memref<1x64xf32, #tpu.memory_space<vmem>>) target_semaphore(%arg9 : memref<!tpu.dma_semaphore, #tpu.memory_space<semaphore_mem>>)
    %c0_80 = arith.constant 0 : index
    %120 = memref.load %arg0[%c0_80] : memref<40xi32, #tpu.memory_space<smem>>
    %c0_i32_81 = arith.constant 0 : i32
    %121 = tpu.memref_slice %arg1[%120, %c0_i32_81] : memref<4000x64xf32, #tpu.memory_space<any>> -> memref<1x64xf32, #tpu.memory_space<any>>
    %c0_i32_82 = arith.constant 0 : i32
    %c0_i32_83 = arith.constant 0 : i32
    %122 = tpu.memref_slice %arg8[%c0_i32_82, %c0_i32_83] : memref<40x64xf32, #tpu.memory_space<vmem>> -> memref<1x64xf32, #tpu.memory_space<vmem>>
    tpu.wait_dma2 semaphore(%arg9 : memref<!tpu.dma_semaphore, #tpu.memory_space<semaphore_mem>>) src(%121 : memref<1x64xf32, #tpu.memory_space<any>>) dst(%122 : memref<1x64xf32, #tpu.memory_space<vmem>>)
    %c1_84 = arith.constant 1 : index
    %123 = memref.load %arg0[%c1_84] : memref<40xi32, #tpu.memory_space<smem>>
    %c0_i32_85 = arith.constant 0 : i32
    %124 = tpu.memref_slice %arg1[%123, %c0_i32_85] : memref<4000x64xf32, #tpu.memory_space<any>> -> memref<1x64xf32, #tpu.memory_space<any>>
    %c1_i32_86 = arith.constant 1 : i32
    %c0_i32_87 = arith.constant 0 : i32
    %125 = tpu.memref_slice %arg8[%c1_i32_86, %c0_i32_87] : memref<40x64xf32, #tpu.memory_space<vmem>> -> memref<1x64xf32, #tpu.memory_space<vmem>>
    tpu.wait_dma2 semaphore(%arg9 : memref<!tpu.dma_semaphore, #tpu.memory_space<semaphore_mem>>) src(%124 : memref<1x64xf32, #tpu.memory_space<any>>) dst(%125 : memref<1x64xf32, #tpu.memory_space<vmem>>)
    %c2_88 = arith.constant 2 : index
    %126 = memref.load %arg0[%c2_88] : memref<40xi32, #tpu.memory_space<smem>>
    %c0_i32_89 = arith.constant 0 : i32
    %127 = tpu.memref_slice %arg1[%126, %c0_i32_89] : memref<4000x64xf32, #tpu.memory_space<any>> -> memref<1x64xf32, #tpu.memory_space<any>>
    %c2_i32_90 = arith.constant 2 : i32
    %c0_i32_91 = arith.constant 0 : i32
    %128 = tpu.memref_slice %arg8[%c2_i32_90, %c0_i32_91] : memref<40x64xf32, #tpu.memory_space<vmem>> -> memref<1x64xf32, #tpu.memory_space<vmem>>
    tpu.wait_dma2 semaphore(%arg9 : memref<!tpu.dma_semaphore, #tpu.memory_space<semaphore_mem>>) src(%127 : memref<1x64xf32, #tpu.memory_space<any>>) dst(%128 : memref<1x64xf32, #tpu.memory_space<vmem>>)
    %c3_92 = arith.constant 3 : index
    %129 = memref.load %arg0[%c3_92] : memref<40xi32, #tpu.memory_space<smem>>
    %c0_i32_93 = arith.constant 0 : i32
    %130 = tpu.memref_slice %arg1[%129, %c0_i32_93] : memref<4000x64xf32, #tpu.memory_space<any>> -> memref<1x64xf32, #tpu.memory_space<any>>
    %c3_i32_94 = arith.constant 3 : i32
    %c0_i32_95 = arith.constant 0 : i32
    %131 = tpu.memref_slice %arg8[%c3_i32_94, %c0_i32_95] : memref<40x64xf32, #tpu.memory_space<vmem>> -> memref<1x64xf32, #tpu.memory_space<vmem>>
    tpu.wait_dma2 semaphore(%arg9 : memref<!tpu.dma_semaphore, #tpu.memory_space<semaphore_mem>>) src(%130 : memref<1x64xf32, #tpu.memory_space<any>>) dst(%131 : memref<1x64xf32, #tpu.memory_space<vmem>>)
    %c4_96 = arith.constant 4 : index
    %132 = memref.load %arg0[%c4_96] : memref<40xi32, #tpu.memory_space<smem>>
    %c0_i32_97 = arith.constant 0 : i32
    %133 = tpu.memref_slice %arg1[%132, %c0_i32_97] : memref<4000x64xf32, #tpu.memory_space<any>> -> memref<1x64xf32, #tpu.memory_space<any>>
    %c4_i32_98 = arith.constant 4 : i32
    %c0_i32_99 = arith.constant 0 : i32
    %134 = tpu.memref_slice %arg8[%c4_i32_98, %c0_i32_99] : memref<40x64xf32, #tpu.memory_space<vmem>> -> memref<1x64xf32, #tpu.memory_space<vmem>>
    tpu.wait_dma2 semaphore(%arg9 : memref<!tpu.dma_semaphore, #tpu.memory_space<semaphore_mem>>) src(%133 : memref<1x64xf32, #tpu.memory_space<any>>) dst(%134 : memref<1x64xf32, #tpu.memory_space<vmem>>)
    %c5_100 = arith.constant 5 : index
    %135 = memref.load %arg0[%c5_100] : memref<40xi32, #tpu.memory_space<smem>>
    %c0_i32_101 = arith.constant 0 : i32
    %136 = tpu.memref_slice %arg1[%135, %c0_i32_101] : memref<4000x64xf32, #tpu.memory_space<any>> -> memref<1x64xf32, #tpu.memory_space<any>>
    %c5_i32_102 = arith.constant 5 : i32
    %c0_i32_103 = arith.constant 0 : i32
    %137 = tpu.memref_slice %arg8[%c5_i32_102, %c0_i32_103] : memref<40x64xf32, #tpu.memory_space<vmem>> -> memref<1x64xf32, #tpu.memory_space<vmem>>
    tpu.wait_dma2 semaphore(%arg9 : memref<!tpu.dma_semaphore, #tpu.memory_space<semaphore_mem>>) src(%136 : memref<1x64xf32, #tpu.memory_space<any>>) dst(%137 : memref<1x64xf32, #tpu.memory_space<vmem>>)
    %c6_104 = arith.constant 6 : index
    %138 = memref.load %arg0[%c6_104] : memref<40xi32, #tpu.memory_space<smem>>
    %c0_i32_105 = arith.constant 0 : i32
    %139 = tpu.memref_slice %arg1[%138, %c0_i32_105] : memref<4000x64xf32, #tpu.memory_space<any>> -> memref<1x64xf32, #tpu.memory_space<any>>
    %c6_i32_106 = arith.constant 6 : i32
    %c0_i32_107 = arith.constant 0 : i32
    %140 = tpu.memref_slice %arg8[%c6_i32_106, %c0_i32_107] : memref<40x64xf32, #tpu.memory_space<vmem>> -> memref<1x64xf32, #tpu.memory_space<vmem>>
    tpu.wait_dma2 semaphore(%arg9 : memref<!tpu.dma_semaphore, #tpu.memory_space<semaphore_mem>>) src(%139 : memref<1x64xf32, #tpu.memory_space<any>>) dst(%140 : memref<1x64xf32, #tpu.memory_space<vmem>>)
    %c7_108 = arith.constant 7 : index
    %141 = memref.load %arg0[%c7_108] : memref<40xi32, #tpu.memory_space<smem>>
    %c0_i32_109 = arith.constant 0 : i32
    %142 = tpu.memref_slice %arg1[%141, %c0_i32_109] : memref<4000x64xf32, #tpu.memory_space<any>> -> memref<1x64xf32, #tpu.memory_space<any>>
    %c7_i32_110 = arith.constant 7 : i32
    %c0_i32_111 = arith.constant 0 : i32
    %143 = tpu.memref_slice %arg8[%c7_i32_110, %c0_i32_111] : memref<40x64xf32, #tpu.memory_space<vmem>> -> memref<1x64xf32, #tpu.memory_space<vmem>>
    tpu.wait_dma2 semaphore(%arg9 : memref<!tpu.dma_semaphore, #tpu.memory_space<semaphore_mem>>) src(%142 : memref<1x64xf32, #tpu.memory_space<any>>) dst(%143 : memref<1x64xf32, #tpu.memory_space<vmem>>)
    %c8_112 = arith.constant 8 : index
    %144 = memref.load %arg0[%c8_112] : memref<40xi32, #tpu.memory_space<smem>>
    %c0_i32_113 = arith.constant 0 : i32
    %145 = tpu.memref_slice %arg1[%144, %c0_i32_113] : memref<4000x64xf32, #tpu.memory_space<any>> -> memref<1x64xf32, #tpu.memory_space<any>>
    %c8_i32_114 = arith.constant 8 : i32
    %c0_i32_115 = arith.constant 0 : i32
    %146 = tpu.memref_slice %arg8[%c8_i32_114, %c0_i32_115] : memref<40x64xf32, #tpu.memory_space<vmem>> -> memref<1x64xf32, #tpu.memory_space<vmem>>
    tpu.wait_dma2 semaphore(%arg9 : memref<!tpu.dma_semaphore, #tpu.memory_space<semaphore_mem>>) src(%145 : memref<1x64xf32, #tpu.memory_space<any>>) dst(%146 : memref<1x64xf32, #tpu.memory_space<vmem>>)
    %c9_116 = arith.constant 9 : index
    %147 = memref.load %arg0[%c9_116] : memref<40xi32, #tpu.memory_space<smem>>
    %c0_i32_117 = arith.constant 0 : i32
    %148 = tpu.memref_slice %arg1[%147, %c0_i32_117] : memref<4000x64xf32, #tpu.memory_space<any>> -> memref<1x64xf32, #tpu.memory_space<any>>
    %c9_i32_118 = arith.constant 9 : i32
    %c0_i32_119 = arith.constant 0 : i32
    %149 = tpu.memref_slice %arg8[%c9_i32_118, %c0_i32_119] : memref<40x64xf32, #tpu.memory_space<vmem>> -> memref<1x64xf32, #tpu.memory_space<vmem>>
    tpu.wait_dma2 semaphore(%arg9 : memref<!tpu.dma_semaphore, #tpu.memory_space<semaphore_mem>>) src(%148 : memref<1x64xf32, #tpu.memory_space<any>>) dst(%149 : memref<1x64xf32, #tpu.memory_space<vmem>>)
    %c10_120 = arith.constant 10 : index
    %150 = memref.load %arg0[%c10_120] : memref<40xi32, #tpu.memory_space<smem>>
    %c0_i32_121 = arith.constant 0 : i32
    %151 = tpu.memref_slice %arg1[%150, %c0_i32_121] : memref<4000x64xf32, #tpu.memory_space<any>> -> memref<1x64xf32, #tpu.memory_space<any>>
    %c10_i32_122 = arith.constant 10 : i32
    %c0_i32_123 = arith.constant 0 : i32
    %152 = tpu.memref_slice %arg8[%c10_i32_122, %c0_i32_123] : memref<40x64xf32, #tpu.memory_space<vmem>> -> memref<1x64xf32, #tpu.memory_space<vmem>>
    tpu.wait_dma2 semaphore(%arg9 : memref<!tpu.dma_semaphore, #tpu.memory_space<semaphore_mem>>) src(%151 : memref<1x64xf32, #tpu.memory_space<any>>) dst(%152 : memref<1x64xf32, #tpu.memory_space<vmem>>)
    %c11_124 = arith.constant 11 : index
    %153 = memref.load %arg0[%c11_124] : memref<40xi32, #tpu.memory_space<smem>>
    %c0_i32_125 = arith.constant 0 : i32
    %154 = tpu.memref_slice %arg1[%153, %c0_i32_125] : memref<4000x64xf32, #tpu.memory_space<any>> -> memref<1x64xf32, #tpu.memory_space<any>>
    %c11_i32_126 = arith.constant 11 : i32
    %c0_i32_127 = arith.constant 0 : i32
    %155 = tpu.memref_slice %arg8[%c11_i32_126, %c0_i32_127] : memref<40x64xf32, #tpu.memory_space<vmem>> -> memref<1x64xf32, #tpu.memory_space<vmem>>
    tpu.wait_dma2 semaphore(%arg9 : memref<!tpu.dma_semaphore, #tpu.memory_space<semaphore_mem>>) src(%154 : memref<1x64xf32, #tpu.memory_space<any>>) dst(%155 : memref<1x64xf32, #tpu.memory_space<vmem>>)
    %c12_128 = arith.constant 12 : index
    %156 = memref.load %arg0[%c12_128] : memref<40xi32, #tpu.memory_space<smem>>
    %c0_i32_129 = arith.constant 0 : i32
    %157 = tpu.memref_slice %arg1[%156, %c0_i32_129] : memref<4000x64xf32, #tpu.memory_space<any>> -> memref<1x64xf32, #tpu.memory_space<any>>
    %c12_i32_130 = arith.constant 12 : i32
    %c0_i32_131 = arith.constant 0 : i32
    %158 = tpu.memref_slice %arg8[%c12_i32_130, %c0_i32_131] : memref<40x64xf32, #tpu.memory_space<vmem>> -> memref<1x64xf32, #tpu.memory_space<vmem>>
    tpu.wait_dma2 semaphore(%arg9 : memref<!tpu.dma_semaphore, #tpu.memory_space<semaphore_mem>>) src(%157 : memref<1x64xf32, #tpu.memory_space<any>>) dst(%158 : memref<1x64xf32, #tpu.memory_space<vmem>>)
    %c13_132 = arith.constant 13 : index
    %159 = memref.load %arg0[%c13_132] : memref<40xi32, #tpu.memory_space<smem>>
    %c0_i32_133 = arith.constant 0 : i32
    %160 = tpu.memref_slice %arg1[%159, %c0_i32_133] : memref<4000x64xf32, #tpu.memory_space<any>> -> memref<1x64xf32, #tpu.memory_space<any>>
    %c13_i32_134 = arith.constant 13 : i32
    %c0_i32_135 = arith.constant 0 : i32
    %161 = tpu.memref_slice %arg8[%c13_i32_134, %c0_i32_135] : memref<40x64xf32, #tpu.memory_space<vmem>> -> memref<1x64xf32, #tpu.memory_space<vmem>>
    tpu.wait_dma2 semaphore(%arg9 : memref<!tpu.dma_semaphore, #tpu.memory_space<semaphore_mem>>) src(%160 : memref<1x64xf32, #tpu.memory_space<any>>) dst(%161 : memref<1x64xf32, #tpu.memory_space<vmem>>)
    %c14_136 = arith.constant 14 : index
    %162 = memref.load %arg0[%c14_136] : memref<40xi32, #tpu.memory_space<smem>>
    %c0_i32_137 = arith.constant 0 : i32
    %163 = tpu.memref_slice %arg1[%162, %c0_i32_137] : memref<4000x64xf32, #tpu.memory_space<any>> -> memref<1x64xf32, #tpu.memory_space<any>>
    %c14_i32_138 = arith.constant 14 : i32
    %c0_i32_139 = arith.constant 0 : i32
    %164 = tpu.memref_slice %arg8[%c14_i32_138, %c0_i32_139] : memref<40x64xf32, #tpu.memory_space<vmem>> -> memref<1x64xf32, #tpu.memory_space<vmem>>
    tpu.wait_dma2 semaphore(%arg9 : memref<!tpu.dma_semaphore, #tpu.memory_space<semaphore_mem>>) src(%163 : memref<1x64xf32, #tpu.memory_space<any>>) dst(%164 : memref<1x64xf32, #tpu.memory_space<vmem>>)
    %c15_140 = arith.constant 15 : index
    %165 = memref.load %arg0[%c15_140] : memref<40xi32, #tpu.memory_space<smem>>
    %c0_i32_141 = arith.constant 0 : i32
    %166 = tpu.memref_slice %arg1[%165, %c0_i32_141] : memref<4000x64xf32, #tpu.memory_space<any>> -> memref<1x64xf32, #tpu.memory_space<any>>
    %c15_i32_142 = arith.constant 15 : i32
    %c0_i32_143 = arith.constant 0 : i32
    %167 = tpu.memref_slice %arg8[%c15_i32_142, %c0_i32_143] : memref<40x64xf32, #tpu.memory_space<vmem>> -> memref<1x64xf32, #tpu.memory_space<vmem>>
    tpu.wait_dma2 semaphore(%arg9 : memref<!tpu.dma_semaphore, #tpu.memory_space<semaphore_mem>>) src(%166 : memref<1x64xf32, #tpu.memory_space<any>>) dst(%167 : memref<1x64xf32, #tpu.memory_space<vmem>>)
    %c16_144 = arith.constant 16 : index
    %168 = memref.load %arg0[%c16_144] : memref<40xi32, #tpu.memory_space<smem>>
    %c0_i32_145 = arith.constant 0 : i32
    %169 = tpu.memref_slice %arg1[%168, %c0_i32_145] : memref<4000x64xf32, #tpu.memory_space<any>> -> memref<1x64xf32, #tpu.memory_space<any>>
    %c16_i32_146 = arith.constant 16 : i32
    %c0_i32_147 = arith.constant 0 : i32
    %170 = tpu.memref_slice %arg8[%c16_i32_146, %c0_i32_147] : memref<40x64xf32, #tpu.memory_space<vmem>> -> memref<1x64xf32, #tpu.memory_space<vmem>>
    tpu.wait_dma2 semaphore(%arg9 : memref<!tpu.dma_semaphore, #tpu.memory_space<semaphore_mem>>) src(%169 : memref<1x64xf32, #tpu.memory_space<any>>) dst(%170 : memref<1x64xf32, #tpu.memory_space<vmem>>)
    %c17_148 = arith.constant 17 : index
    %171 = memref.load %arg0[%c17_148] : memref<40xi32, #tpu.memory_space<smem>>
    %c0_i32_149 = arith.constant 0 : i32
    %172 = tpu.memref_slice %arg1[%171, %c0_i32_149] : memref<4000x64xf32, #tpu.memory_space<any>> -> memref<1x64xf32, #tpu.memory_space<any>>
    %c17_i32_150 = arith.constant 17 : i32
    %c0_i32_151 = arith.constant 0 : i32
    %173 = tpu.memref_slice %arg8[%c17_i32_150, %c0_i32_151] : memref<40x64xf32, #tpu.memory_space<vmem>> -> memref<1x64xf32, #tpu.memory_space<vmem>>
    tpu.wait_dma2 semaphore(%arg9 : memref<!tpu.dma_semaphore, #tpu.memory_space<semaphore_mem>>) src(%172 : memref<1x64xf32, #tpu.memory_space<any>>) dst(%173 : memref<1x64xf32, #tpu.memory_space<vmem>>)
    %c18_152 = arith.constant 18 : index
    %174 = memref.load %arg0[%c18_152] : memref<40xi32, #tpu.memory_space<smem>>
    %c0_i32_153 = arith.constant 0 : i32
    %175 = tpu.memref_slice %arg1[%174, %c0_i32_153] : memref<4000x64xf32, #tpu.memory_space<any>> -> memref<1x64xf32, #tpu.memory_space<any>>
    %c18_i32_154 = arith.constant 18 : i32
    %c0_i32_155 = arith.constant 0 : i32
    %176 = tpu.memref_slice %arg8[%c18_i32_154, %c0_i32_155] : memref<40x64xf32, #tpu.memory_space<vmem>> -> memref<1x64xf32, #tpu.memory_space<vmem>>
    tpu.wait_dma2 semaphore(%arg9 : memref<!tpu.dma_semaphore, #tpu.memory_space<semaphore_mem>>) src(%175 : memref<1x64xf32, #tpu.memory_space<any>>) dst(%176 : memref<1x64xf32, #tpu.memory_space<vmem>>)
    %c19_156 = arith.constant 19 : index
    %177 = memref.load %arg0[%c19_156] : memref<40xi32, #tpu.memory_space<smem>>
    %c0_i32_157 = arith.constant 0 : i32
    %178 = tpu.memref_slice %arg1[%177, %c0_i32_157] : memref<4000x64xf32, #tpu.memory_space<any>> -> memref<1x64xf32, #tpu.memory_space<any>>
    %c19_i32_158 = arith.constant 19 : i32
    %c0_i32_159 = arith.constant 0 : i32
    %179 = tpu.memref_slice %arg8[%c19_i32_158, %c0_i32_159] : memref<40x64xf32, #tpu.memory_space<vmem>> -> memref<1x64xf32, #tpu.memory_space<vmem>>
    tpu.wait_dma2 semaphore(%arg9 : memref<!tpu.dma_semaphore, #tpu.memory_space<semaphore_mem>>) src(%178 : memref<1x64xf32, #tpu.memory_space<any>>) dst(%179 : memref<1x64xf32, #tpu.memory_space<vmem>>)
    %c20_160 = arith.constant 20 : index
    %180 = memref.load %arg0[%c20_160] : memref<40xi32, #tpu.memory_space<smem>>
    %c0_i32_161 = arith.constant 0 : i32
    %181 = tpu.memref_slice %arg1[%180, %c0_i32_161] : memref<4000x64xf32, #tpu.memory_space<any>> -> memref<1x64xf32, #tpu.memory_space<any>>
    %c20_i32_162 = arith.constant 20 : i32
    %c0_i32_163 = arith.constant 0 : i32
    %182 = tpu.memref_slice %arg8[%c20_i32_162, %c0_i32_163] : memref<40x64xf32, #tpu.memory_space<vmem>> -> memref<1x64xf32, #tpu.memory_space<vmem>>
    tpu.wait_dma2 semaphore(%arg9 : memref<!tpu.dma_semaphore, #tpu.memory_space<semaphore_mem>>) src(%181 : memref<1x64xf32, #tpu.memory_space<any>>) dst(%182 : memref<1x64xf32, #tpu.memory_space<vmem>>)
    %c21_164 = arith.constant 21 : index
    %183 = memref.load %arg0[%c21_164] : memref<40xi32, #tpu.memory_space<smem>>
    %c0_i32_165 = arith.constant 0 : i32
    %184 = tpu.memref_slice %arg1[%183, %c0_i32_165] : memref<4000x64xf32, #tpu.memory_space<any>> -> memref<1x64xf32, #tpu.memory_space<any>>
    %c21_i32_166 = arith.constant 21 : i32
    %c0_i32_167 = arith.constant 0 : i32
    %185 = tpu.memref_slice %arg8[%c21_i32_166, %c0_i32_167] : memref<40x64xf32, #tpu.memory_space<vmem>> -> memref<1x64xf32, #tpu.memory_space<vmem>>
    tpu.wait_dma2 semaphore(%arg9 : memref<!tpu.dma_semaphore, #tpu.memory_space<semaphore_mem>>) src(%184 : memref<1x64xf32, #tpu.memory_space<any>>) dst(%185 : memref<1x64xf32, #tpu.memory_space<vmem>>)
    %c22_168 = arith.constant 22 : index
    %186 = memref.load %arg0[%c22_168] : memref<40xi32, #tpu.memory_space<smem>>
    %c0_i32_169 = arith.constant 0 : i32
    %187 = tpu.memref_slice %arg1[%186, %c0_i32_169] : memref<4000x64xf32, #tpu.memory_space<any>> -> memref<1x64xf32, #tpu.memory_space<any>>
    %c22_i32_170 = arith.constant 22 : i32
    %c0_i32_171 = arith.constant 0 : i32
    %188 = tpu.memref_slice %arg8[%c22_i32_170, %c0_i32_171] : memref<40x64xf32, #tpu.memory_space<vmem>> -> memref<1x64xf32, #tpu.memory_space<vmem>>
    tpu.wait_dma2 semaphore(%arg9 : memref<!tpu.dma_semaphore, #tpu.memory_space<semaphore_mem>>) src(%187 : memref<1x64xf32, #tpu.memory_space<any>>) dst(%188 : memref<1x64xf32, #tpu.memory_space<vmem>>)
    %c23_172 = arith.constant 23 : index
    %189 = memref.load %arg0[%c23_172] : memref<40xi32, #tpu.memory_space<smem>>
    %c0_i32_173 = arith.constant 0 : i32
    %190 = tpu.memref_slice %arg1[%189, %c0_i32_173] : memref<4000x64xf32, #tpu.memory_space<any>> -> memref<1x64xf32, #tpu.memory_space<any>>
    %c23_i32_174 = arith.constant 23 : i32
    %c0_i32_175 = arith.constant 0 : i32
    %191 = tpu.memref_slice %arg8[%c23_i32_174, %c0_i32_175] : memref<40x64xf32, #tpu.memory_space<vmem>> -> memref<1x64xf32, #tpu.memory_space<vmem>>
    tpu.wait_dma2 semaphore(%arg9 : memref<!tpu.dma_semaphore, #tpu.memory_space<semaphore_mem>>) src(%190 : memref<1x64xf32, #tpu.memory_space<any>>) dst(%191 : memref<1x64xf32, #tpu.memory_space<vmem>>)
    %c24_176 = arith.constant 24 : index
    %192 = memref.load %arg0[%c24_176] : memref<40xi32, #tpu.memory_space<smem>>
    %c0_i32_177 = arith.constant 0 : i32
    %193 = tpu.memref_slice %arg1[%192, %c0_i32_177] : memref<4000x64xf32, #tpu.memory_space<any>> -> memref<1x64xf32, #tpu.memory_space<any>>
    %c24_i32_178 = arith.constant 24 : i32
    %c0_i32_179 = arith.constant 0 : i32
    %194 = tpu.memref_slice %arg8[%c24_i32_178, %c0_i32_179] : memref<40x64xf32, #tpu.memory_space<vmem>> -> memref<1x64xf32, #tpu.memory_space<vmem>>
    tpu.wait_dma2 semaphore(%arg9 : memref<!tpu.dma_semaphore, #tpu.memory_space<semaphore_mem>>) src(%193 : memref<1x64xf32, #tpu.memory_space<any>>) dst(%194 : memref<1x64xf32, #tpu.memory_space<vmem>>)
    %c25_180 = arith.constant 25 : index
    %195 = memref.load %arg0[%c25_180] : memref<40xi32, #tpu.memory_space<smem>>
    %c0_i32_181 = arith.constant 0 : i32
    %196 = tpu.memref_slice %arg1[%195, %c0_i32_181] : memref<4000x64xf32, #tpu.memory_space<any>> -> memref<1x64xf32, #tpu.memory_space<any>>
    %c25_i32_182 = arith.constant 25 : i32
    %c0_i32_183 = arith.constant 0 : i32
    %197 = tpu.memref_slice %arg8[%c25_i32_182, %c0_i32_183] : memref<40x64xf32, #tpu.memory_space<vmem>> -> memref<1x64xf32, #tpu.memory_space<vmem>>
    tpu.wait_dma2 semaphore(%arg9 : memref<!tpu.dma_semaphore, #tpu.memory_space<semaphore_mem>>) src(%196 : memref<1x64xf32, #tpu.memory_space<any>>) dst(%197 : memref<1x64xf32, #tpu.memory_space<vmem>>)
    %c26_184 = arith.constant 26 : index
    %198 = memref.load %arg0[%c26_184] : memref<40xi32, #tpu.memory_space<smem>>
    %c0_i32_185 = arith.constant 0 : i32
    %199 = tpu.memref_slice %arg1[%198, %c0_i32_185] : memref<4000x64xf32, #tpu.memory_space<any>> -> memref<1x64xf32, #tpu.memory_space<any>>
    %c26_i32_186 = arith.constant 26 : i32
    %c0_i32_187 = arith.constant 0 : i32
    %200 = tpu.memref_slice %arg8[%c26_i32_186, %c0_i32_187] : memref<40x64xf32, #tpu.memory_space<vmem>> -> memref<1x64xf32, #tpu.memory_space<vmem>>
    tpu.wait_dma2 semaphore(%arg9 : memref<!tpu.dma_semaphore, #tpu.memory_space<semaphore_mem>>) src(%199 : memref<1x64xf32, #tpu.memory_space<any>>) dst(%200 : memref<1x64xf32, #tpu.memory_space<vmem>>)
    %c27_188 = arith.constant 27 : index
    %201 = memref.load %arg0[%c27_188] : memref<40xi32, #tpu.memory_space<smem>>
    %c0_i32_189 = arith.constant 0 : i32
    %202 = tpu.memref_slice %arg1[%201, %c0_i32_189] : memref<4000x64xf32, #tpu.memory_space<any>> -> memref<1x64xf32, #tpu.memory_space<any>>
    %c27_i32_190 = arith.constant 27 : i32
    %c0_i32_191 = arith.constant 0 : i32
    %203 = tpu.memref_slice %arg8[%c27_i32_190, %c0_i32_191] : memref<40x64xf32, #tpu.memory_space<vmem>> -> memref<1x64xf32, #tpu.memory_space<vmem>>
    tpu.wait_dma2 semaphore(%arg9 : memref<!tpu.dma_semaphore, #tpu.memory_space<semaphore_mem>>) src(%202 : memref<1x64xf32, #tpu.memory_space<any>>) dst(%203 : memref<1x64xf32, #tpu.memory_space<vmem>>)
    %c28_192 = arith.constant 28 : index
    %204 = memref.load %arg0[%c28_192] : memref<40xi32, #tpu.memory_space<smem>>
    %c0_i32_193 = arith.constant 0 : i32
    %205 = tpu.memref_slice %arg1[%204, %c0_i32_193] : memref<4000x64xf32, #tpu.memory_space<any>> -> memref<1x64xf32, #tpu.memory_space<any>>
    %c28_i32_194 = arith.constant 28 : i32
    %c0_i32_195 = arith.constant 0 : i32
    %206 = tpu.memref_slice %arg8[%c28_i32_194, %c0_i32_195] : memref<40x64xf32, #tpu.memory_space<vmem>> -> memref<1x64xf32, #tpu.memory_space<vmem>>
    tpu.wait_dma2 semaphore(%arg9 : memref<!tpu.dma_semaphore, #tpu.memory_space<semaphore_mem>>) src(%205 : memref<1x64xf32, #tpu.memory_space<any>>) dst(%206 : memref<1x64xf32, #tpu.memory_space<vmem>>)
    %c29_196 = arith.constant 29 : index
    %207 = memref.load %arg0[%c29_196] : memref<40xi32, #tpu.memory_space<smem>>
    %c0_i32_197 = arith.constant 0 : i32
    %208 = tpu.memref_slice %arg1[%207, %c0_i32_197] : memref<4000x64xf32, #tpu.memory_space<any>> -> memref<1x64xf32, #tpu.memory_space<any>>
    %c29_i32_198 = arith.constant 29 : i32
    %c0_i32_199 = arith.constant 0 : i32
    %209 = tpu.memref_slice %arg8[%c29_i32_198, %c0_i32_199] : memref<40x64xf32, #tpu.memory_space<vmem>> -> memref<1x64xf32, #tpu.memory_space<vmem>>
    tpu.wait_dma2 semaphore(%arg9 : memref<!tpu.dma_semaphore, #tpu.memory_space<semaphore_mem>>) src(%208 : memref<1x64xf32, #tpu.memory_space<any>>) dst(%209 : memref<1x64xf32, #tpu.memory_space<vmem>>)
    %c30_200 = arith.constant 30 : index
    %210 = memref.load %arg0[%c30_200] : memref<40xi32, #tpu.memory_space<smem>>
    %c0_i32_201 = arith.constant 0 : i32
    %211 = tpu.memref_slice %arg1[%210, %c0_i32_201] : memref<4000x64xf32, #tpu.memory_space<any>> -> memref<1x64xf32, #tpu.memory_space<any>>
    %c30_i32_202 = arith.constant 30 : i32
    %c0_i32_203 = arith.constant 0 : i32
    %212 = tpu.memref_slice %arg8[%c30_i32_202, %c0_i32_203] : memref<40x64xf32, #tpu.memory_space<vmem>> -> memref<1x64xf32, #tpu.memory_space<vmem>>
    tpu.wait_dma2 semaphore(%arg9 : memref<!tpu.dma_semaphore, #tpu.memory_space<semaphore_mem>>) src(%211 : memref<1x64xf32, #tpu.memory_space<any>>) dst(%212 : memref<1x64xf32, #tpu.memory_space<vmem>>)
    %c31_204 = arith.constant 31 : index
    %213 = memref.load %arg0[%c31_204] : memref<40xi32, #tpu.memory_space<smem>>
    %c0_i32_205 = arith.constant 0 : i32
    %214 = tpu.memref_slice %arg1[%213, %c0_i32_205] : memref<4000x64xf32, #tpu.memory_space<any>> -> memref<1x64xf32, #tpu.memory_space<any>>
    %c31_i32_206 = arith.constant 31 : i32
    %c0_i32_207 = arith.constant 0 : i32
    %215 = tpu.memref_slice %arg8[%c31_i32_206, %c0_i32_207] : memref<40x64xf32, #tpu.memory_space<vmem>> -> memref<1x64xf32, #tpu.memory_space<vmem>>
    tpu.wait_dma2 semaphore(%arg9 : memref<!tpu.dma_semaphore, #tpu.memory_space<semaphore_mem>>) src(%214 : memref<1x64xf32, #tpu.memory_space<any>>) dst(%215 : memref<1x64xf32, #tpu.memory_space<vmem>>)
    %c32_208 = arith.constant 32 : index
    %216 = memref.load %arg0[%c32_208] : memref<40xi32, #tpu.memory_space<smem>>
    %c0_i32_209 = arith.constant 0 : i32
    %217 = tpu.memref_slice %arg1[%216, %c0_i32_209] : memref<4000x64xf32, #tpu.memory_space<any>> -> memref<1x64xf32, #tpu.memory_space<any>>
    %c32_i32_210 = arith.constant 32 : i32
    %c0_i32_211 = arith.constant 0 : i32
    %218 = tpu.memref_slice %arg8[%c32_i32_210, %c0_i32_211] : memref<40x64xf32, #tpu.memory_space<vmem>> -> memref<1x64xf32, #tpu.memory_space<vmem>>
    tpu.wait_dma2 semaphore(%arg9 : memref<!tpu.dma_semaphore, #tpu.memory_space<semaphore_mem>>) src(%217 : memref<1x64xf32, #tpu.memory_space<any>>) dst(%218 : memref<1x64xf32, #tpu.memory_space<vmem>>)
    %c33_212 = arith.constant 33 : index
    %219 = memref.load %arg0[%c33_212] : memref<40xi32, #tpu.memory_space<smem>>
    %c0_i32_213 = arith.constant 0 : i32
    %220 = tpu.memref_slice %arg1[%219, %c0_i32_213] : memref<4000x64xf32, #tpu.memory_space<any>> -> memref<1x64xf32, #tpu.memory_space<any>>
    %c33_i32_214 = arith.constant 33 : i32
    %c0_i32_215 = arith.constant 0 : i32
    %221 = tpu.memref_slice %arg8[%c33_i32_214, %c0_i32_215] : memref<40x64xf32, #tpu.memory_space<vmem>> -> memref<1x64xf32, #tpu.memory_space<vmem>>
    tpu.wait_dma2 semaphore(%arg9 : memref<!tpu.dma_semaphore, #tpu.memory_space<semaphore_mem>>) src(%220 : memref<1x64xf32, #tpu.memory_space<any>>) dst(%221 : memref<1x64xf32, #tpu.memory_space<vmem>>)
    %c34_216 = arith.constant 34 : index
    %222 = memref.load %arg0[%c34_216] : memref<40xi32, #tpu.memory_space<smem>>
    %c0_i32_217 = arith.constant 0 : i32
    %223 = tpu.memref_slice %arg1[%222, %c0_i32_217] : memref<4000x64xf32, #tpu.memory_space<any>> -> memref<1x64xf32, #tpu.memory_space<any>>
    %c34_i32_218 = arith.constant 34 : i32
    %c0_i32_219 = arith.constant 0 : i32
    %224 = tpu.memref_slice %arg8[%c34_i32_218, %c0_i32_219] : memref<40x64xf32, #tpu.memory_space<vmem>> -> memref<1x64xf32, #tpu.memory_space<vmem>>
    tpu.wait_dma2 semaphore(%arg9 : memref<!tpu.dma_semaphore, #tpu.memory_space<semaphore_mem>>) src(%223 : memref<1x64xf32, #tpu.memory_space<any>>) dst(%224 : memref<1x64xf32, #tpu.memory_space<vmem>>)
    %c35_220 = arith.constant 35 : index
    %225 = memref.load %arg0[%c35_220] : memref<40xi32, #tpu.memory_space<smem>>
    %c0_i32_221 = arith.constant 0 : i32
    %226 = tpu.memref_slice %arg1[%225, %c0_i32_221] : memref<4000x64xf32, #tpu.memory_space<any>> -> memref<1x64xf32, #tpu.memory_space<any>>
    %c35_i32_222 = arith.constant 35 : i32
    %c0_i32_223 = arith.constant 0 : i32
    %227 = tpu.memref_slice %arg8[%c35_i32_222, %c0_i32_223] : memref<40x64xf32, #tpu.memory_space<vmem>> -> memref<1x64xf32, #tpu.memory_space<vmem>>
    tpu.wait_dma2 semaphore(%arg9 : memref<!tpu.dma_semaphore, #tpu.memory_space<semaphore_mem>>) src(%226 : memref<1x64xf32, #tpu.memory_space<any>>) dst(%227 : memref<1x64xf32, #tpu.memory_space<vmem>>)
    %c36_224 = arith.constant 36 : index
    %228 = memref.load %arg0[%c36_224] : memref<40xi32, #tpu.memory_space<smem>>
    %c0_i32_225 = arith.constant 0 : i32
    %229 = tpu.memref_slice %arg1[%228, %c0_i32_225] : memref<4000x64xf32, #tpu.memory_space<any>> -> memref<1x64xf32, #tpu.memory_space<any>>
    %c36_i32_226 = arith.constant 36 : i32
    %c0_i32_227 = arith.constant 0 : i32
    %230 = tpu.memref_slice %arg8[%c36_i32_226, %c0_i32_227] : memref<40x64xf32, #tpu.memory_space<vmem>> -> memref<1x64xf32, #tpu.memory_space<vmem>>
    tpu.wait_dma2 semaphore(%arg9 : memref<!tpu.dma_semaphore, #tpu.memory_space<semaphore_mem>>) src(%229 : memref<1x64xf32, #tpu.memory_space<any>>) dst(%230 : memref<1x64xf32, #tpu.memory_space<vmem>>)
    %c37_228 = arith.constant 37 : index
    %231 = memref.load %arg0[%c37_228] : memref<40xi32, #tpu.memory_space<smem>>
    %c0_i32_229 = arith.constant 0 : i32
    %232 = tpu.memref_slice %arg1[%231, %c0_i32_229] : memref<4000x64xf32, #tpu.memory_space<any>> -> memref<1x64xf32, #tpu.memory_space<any>>
    %c37_i32_230 = arith.constant 37 : i32
    %c0_i32_231 = arith.constant 0 : i32
    %233 = tpu.memref_slice %arg8[%c37_i32_230, %c0_i32_231] : memref<40x64xf32, #tpu.memory_space<vmem>> -> memref<1x64xf32, #tpu.memory_space<vmem>>
    tpu.wait_dma2 semaphore(%arg9 : memref<!tpu.dma_semaphore, #tpu.memory_space<semaphore_mem>>) src(%232 : memref<1x64xf32, #tpu.memory_space<any>>) dst(%233 : memref<1x64xf32, #tpu.memory_space<vmem>>)
    %c38_232 = arith.constant 38 : index
    %234 = memref.load %arg0[%c38_232] : memref<40xi32, #tpu.memory_space<smem>>
    %c0_i32_233 = arith.constant 0 : i32
    %235 = tpu.memref_slice %arg1[%234, %c0_i32_233] : memref<4000x64xf32, #tpu.memory_space<any>> -> memref<1x64xf32, #tpu.memory_space<any>>
    %c38_i32_234 = arith.constant 38 : i32
    %c0_i32_235 = arith.constant 0 : i32
    %236 = tpu.memref_slice %arg8[%c38_i32_234, %c0_i32_235] : memref<40x64xf32, #tpu.memory_space<vmem>> -> memref<1x64xf32, #tpu.memory_space<vmem>>
    tpu.wait_dma2 semaphore(%arg9 : memref<!tpu.dma_semaphore, #tpu.memory_space<semaphore_mem>>) src(%235 : memref<1x64xf32, #tpu.memory_space<any>>) dst(%236 : memref<1x64xf32, #tpu.memory_space<vmem>>)
    %c39_236 = arith.constant 39 : index
    %237 = memref.load %arg0[%c39_236] : memref<40xi32, #tpu.memory_space<smem>>
    %c0_i32_237 = arith.constant 0 : i32
    %238 = tpu.memref_slice %arg1[%237, %c0_i32_237] : memref<4000x64xf32, #tpu.memory_space<any>> -> memref<1x64xf32, #tpu.memory_space<any>>
    %c39_i32_238 = arith.constant 39 : i32
    %c0_i32_239 = arith.constant 0 : i32
    %239 = tpu.memref_slice %arg8[%c39_i32_238, %c0_i32_239] : memref<40x64xf32, #tpu.memory_space<vmem>> -> memref<1x64xf32, #tpu.memory_space<vmem>>
    tpu.wait_dma2 semaphore(%arg9 : memref<!tpu.dma_semaphore, #tpu.memory_space<semaphore_mem>>) src(%238 : memref<1x64xf32, #tpu.memory_space<any>>) dst(%239 : memref<1x64xf32, #tpu.memory_space<vmem>>)
    %cst = arith.constant 0.000000e+00 : f32
    %240 = vector.broadcast %cst : f32 to vector<32x128xf32>
    %c0_240 = arith.constant 0 : index
    %c0_241 = arith.constant 0 : index
    %241 = vector.load %arg8[%c0_240, %c0_241] : memref<40x64xf32, #tpu.memory_space<vmem>>, vector<32x64xf32>
    %c0_242 = arith.constant 0 : index
    %c0_243 = arith.constant 0 : index
    %c0_244 = arith.constant 0 : index
    %242 = vector.load %arg2[%c0_242, %c0_243, %c0_244] : memref<5x64x128xf32, #tpu.memory_space<vmem>>, vector<1x64x128xf32>
    %243 = vector.shape_cast %242 : vector<1x64x128xf32> to vector<64x128xf32>
    %cst_245 = arith.constant dense<0.000000e+00> : vector<32x128xf32>
    %244 = tpu.matmul %241, %243, %cst_245 {dimension_numbers = #tpu.dot_dimension_numbers<[1], [0], [0], [1], [0, 0, 1, 1], [], []>} : vector<32x64xf32>, vector<64x128xf32>, vector<32x128xf32> -> vector<32x128xf32>
    %245 = arith.addf %240, %244 : vector<32x128xf32>
    %c2_246 = arith.constant 2 : index
    %c0_247 = arith.constant 0 : index
    %246 = vector.load %arg8[%c2_246, %c0_247] : memref<40x64xf32, #tpu.memory_space<vmem>>, vector<32x64xf32>
    %c1_248 = arith.constant 1 : index
    %c0_249 = arith.constant 0 : index
    %c0_250 = arith.constant 0 : index
    %247 = vector.load %arg2[%c1_248, %c0_249, %c0_250] : memref<5x64x128xf32, #tpu.memory_space<vmem>>, vector<1x64x128xf32>
    %248 = vector.shape_cast %247 : vector<1x64x128xf32> to vector<64x128xf32>
    %cst_251 = arith.constant dense<0.000000e+00> : vector<32x128xf32>
    %249 = tpu.matmul %246, %248, %cst_251 {dimension_numbers = #tpu.dot_dimension_numbers<[1], [0], [0], [1], [0, 0, 1, 1], [], []>} : vector<32x64xf32>, vector<64x128xf32>, vector<32x128xf32> -> vector<32x128xf32>
    %250 = arith.addf %245, %249 : vector<32x128xf32>
    %c4_252 = arith.constant 4 : index
    %c0_253 = arith.constant 0 : index
    %251 = vector.load %arg8[%c4_252, %c0_253] : memref<40x64xf32, #tpu.memory_space<vmem>>, vector<32x64xf32>
    %c2_254 = arith.constant 2 : index
    %c0_255 = arith.constant 0 : index
    %c0_256 = arith.constant 0 : index
    %252 = vector.load %arg2[%c2_254, %c0_255, %c0_256] : memref<5x64x128xf32, #tpu.memory_space<vmem>>, vector<1x64x128xf32>
    %253 = vector.shape_cast %252 : vector<1x64x128xf32> to vector<64x128xf32>
    %cst_257 = arith.constant dense<0.000000e+00> : vector<32x128xf32>
    %254 = tpu.matmul %251, %253, %cst_257 {dimension_numbers = #tpu.dot_dimension_numbers<[1], [0], [0], [1], [0, 0, 1, 1], [], []>} : vector<32x64xf32>, vector<64x128xf32>, vector<32x128xf32> -> vector<32x128xf32>
    %255 = arith.addf %250, %254 : vector<32x128xf32>
    %c6_258 = arith.constant 6 : index
    %c0_259 = arith.constant 0 : index
    %256 = vector.load %arg8[%c6_258, %c0_259] : memref<40x64xf32, #tpu.memory_space<vmem>>, vector<32x64xf32>
    %c3_260 = arith.constant 3 : index
    %c0_261 = arith.constant 0 : index
    %c0_262 = arith.constant 0 : index
    %257 = vector.load %arg2[%c3_260, %c0_261, %c0_262] : memref<5x64x128xf32, #tpu.memory_space<vmem>>, vector<1x64x128xf32>
    %258 = vector.shape_cast %257 : vector<1x64x128xf32> to vector<64x128xf32>
    %cst_263 = arith.constant dense<0.000000e+00> : vector<32x128xf32>
    %259 = tpu.matmul %256, %258, %cst_263 {dimension_numbers = #tpu.dot_dimension_numbers<[1], [0], [0], [1], [0, 0, 1, 1], [], []>} : vector<32x64xf32>, vector<64x128xf32>, vector<32x128xf32> -> vector<32x128xf32>
    %260 = arith.addf %255, %259 : vector<32x128xf32>
    %c8_264 = arith.constant 8 : index
    %c0_265 = arith.constant 0 : index
    %261 = vector.load %arg8[%c8_264, %c0_265] : memref<40x64xf32, #tpu.memory_space<vmem>>, vector<32x64xf32>
    %c4_266 = arith.constant 4 : index
    %c0_267 = arith.constant 0 : index
    %c0_268 = arith.constant 0 : index
    %262 = vector.load %arg2[%c4_266, %c0_267, %c0_268] : memref<5x64x128xf32, #tpu.memory_space<vmem>>, vector<1x64x128xf32>
    %263 = vector.shape_cast %262 : vector<1x64x128xf32> to vector<64x128xf32>
    %cst_269 = arith.constant dense<0.000000e+00> : vector<32x128xf32>
    %264 = tpu.matmul %261, %263, %cst_269 {dimension_numbers = #tpu.dot_dimension_numbers<[1], [0], [0], [1], [0, 0, 1, 1], [], []>} : vector<32x64xf32>, vector<64x128xf32>, vector<32x128xf32> -> vector<32x128xf32>
    %265 = arith.addf %260, %264 : vector<32x128xf32>
    %c0_270 = arith.constant 0 : index
    %c0_271 = arith.constant 0 : index
    %266 = vector.load %arg3[%c0_270, %c0_271] : memref<1x128xf32, #tpu.memory_space<vmem>>, vector<1x128xf32>
    %267 = vector.broadcast %266 : vector<1x128xf32> to vector<32x128xf32>
    %268 = arith.addf %265, %267 : vector<32x128xf32>
    %c0_272 = arith.constant 0 : index
    %c0_273 = arith.constant 0 : index
    %269 = vector.load %arg4[%c0_272, %c0_273] : memref<128x128xf32, #tpu.memory_space<vmem>>, vector<128x128xf32>
    %cst_274 = arith.constant dense<0.000000e+00> : vector<32x128xf32>
    %270 = tpu.matmul %268, %269, %cst_274 {dimension_numbers = #tpu.dot_dimension_numbers<[1], [0], [0], [1], [0, 0, 1, 1], [], []>} : vector<32x128xf32>, vector<128x128xf32>, vector<32x128xf32> -> vector<32x128xf32>
    %c0_275 = arith.constant 0 : index
    %c0_276 = arith.constant 0 : index
    %271 = vector.load %arg5[%c0_275, %c0_276] : memref<1x128xf32, #tpu.memory_space<vmem>>, vector<1x128xf32>
    %272 = vector.broadcast %271 : vector<1x128xf32> to vector<32x128xf32>
    %273 = arith.addf %270, %272 : vector<32x128xf32>
    %274 = math.tanh %273 : vector<32x128xf32>
    %c0_277 = arith.constant 0 : index
    %c0_278 = arith.constant 0 : index
    %275 = vector.load %arg6[%c0_277, %c0_278] : memref<1x128xf32, #tpu.memory_space<vmem>>, vector<1x128xf32>
    %cst_279 = arith.constant dense<0.000000e+00> : vector<1x32xf32>
    %276 = tpu.matmul %275, %274, %cst_279 {dimension_numbers = #tpu.dot_dimension_numbers<[1], [1], [0], [0], [0, 0, 1, 0], [], []>} : vector<1x128xf32>, vector<32x128xf32>, vector<1x32xf32> -> vector<1x32xf32>
    %277 = tpu.iota {dimensions = array<i32: 1>} : vector<2x32xi32>
    %278 = tpu.iota {dimensions = array<i32: 0>} : vector<2x32xi32>
    %c2_i32_280 = arith.constant 2 : i32
    %c0_i32_281 = arith.constant 0 : i32
    %279 = arith.cmpi eq, %c2_i32_280, %c0_i32_281 : i32
    %c1_i32_282 = arith.constant 1 : i32
    %280 = arith.select %279, %c1_i32_282, %c2_i32_280 : i32
    %281 = vector.broadcast %280 : i32 to vector<2x32xi32>
    %282 = arith.remsi %277, %281 : vector<2x32xi32>
    %c0_i32_283 = arith.constant 0 : i32
    %283 = vector.broadcast %c0_i32_283 : i32 to vector<2x32xi32>
    %284 = arith.cmpi ne, %282, %283 : vector<2x32xi32>
    %c0_i32_284 = arith.constant 0 : i32
    %285 = vector.broadcast %c0_i32_284 : i32 to vector<2x32xi32>
    %286 = arith.cmpi slt, %282, %285 : vector<2x32xi32>
    %c0_i32_285 = arith.constant 0 : i32
    %287 = arith.cmpi slt, %280, %c0_i32_285 : i32
    %288 = vector.broadcast %287 : i1 to vector<2x32xi1>
    %289 = vector.broadcast %288 : vector<2x32xi1> to vector<2x32xi1>
    %290 = arith.xori %286, %289 : vector<2x32xi1>
    %291 = arith.andi %290, %284 : vector<2x32xi1>
    %292 = vector.broadcast %280 : i32 to vector<2x32xi32>
    %293 = arith.addi %282, %292 : vector<2x32xi32>
    %294 = arith.select %291, %293, %282 : vector<2x32xi1>, vector<2x32xi32>
    %295 = arith.cmpi eq, %294, %278 : vector<2x32xi32>
    %cst_286 = arith.constant -1.000000e+30 : f32
    %296 = vector.shape_cast %276 : vector<1x32xf32> to vector<1x32xf32>
    %297 = vector.broadcast %296 : vector<1x32xf32> to vector<2x32xf32>
    %298 = vector.broadcast %cst_286 : f32 to vector<2x32xf32>
    %299 = arith.select %295, %297, %298 : vector<2x32xi1>, vector<2x32xf32>
    %cst_287 = arith.constant dense<0xFF800000> : vector<2xf32>
    %300 = vector.multi_reduction <maximumf>, %299, %cst_287 [1] : vector<2x32xf32> to vector<2xf32>
    %301 = vector.shape_cast %300 : vector<2xf32> to vector<2x1xf32>
    %302 = vector.broadcast %301 : vector<2x1xf32> to vector<2x32xf32>
    %303 = arith.subf %299, %302 : vector<2x32xf32>
    %304 = math.exp %303 : vector<2x32xf32>
    %cst_288 = arith.constant dense<0.000000e+00> : vector<2xf32>
    %305 = vector.multi_reduction <add>, %304, %cst_288 [1] : vector<2x32xf32> to vector<2xf32>
    %306 = vector.shape_cast %305 : vector<2xf32> to vector<2x1xf32>
    %307 = tpu.reciprocal %306 : vector<2x1xf32> -> vector<2x1xf32>
    %308 = vector.broadcast %307 : vector<2x1xf32> to vector<2x32xf32>
    %309 = arith.mulf %304, %308 : vector<2x32xf32>
    %cst_289 = arith.constant dense<0.000000e+00> : vector<2x128xf32>
    %310 = tpu.matmul %309, %268, %cst_289 {dimension_numbers = #tpu.dot_dimension_numbers<[1], [0], [0], [1], [0, 0, 1, 1], [], []>} : vector<2x32xf32>, vector<32x128xf32>, vector<2x128xf32> -> vector<2x128xf32>
    %c0_290 = arith.constant 0 : index
    %c0_291 = arith.constant 0 : index
    %c0_292 = arith.constant 0 : index
    %311 = vector.load %arg7[%c0_290, %c0_291, %c0_292] : memref<1x2x128xf32, #tpu.memory_space<vmem>>, vector<1x2x128xf32>
    %312 = vector.shape_cast %311 : vector<1x2x128xf32> to vector<2x128xf32>
    %313 = vector.shape_cast %310 : vector<2x128xf32> to vector<1x2x128xf32>
    tpu.vector_store %arg7[%c0_290, %c0_291, %c0_292], %313 {strides = array<i32>} : memref<1x2x128xf32, #tpu.memory_space<vmem>>, vector<1x2x128xf32>,
    return
  }
}

</mosaic_0001>

<llo_original>
// kernel: word_att_forward_padded.1
$region0: #{word_att_forward_padded.1}
  #allocation0 [shape = 'u32[]', space=smem, size = 0x4, offset = 0x4, fixed_abs, tag = 'smem constant byte address 0x4 - core index']
  #allocation1 [shape = 'u32[144,128]{1,0:T(1,128)}', space=vmem, size = 0x12000, scoped, tag = 'internal scratch']
  #allocation2 [shape = 'f32[40,64]{1,0:T(8,128)}', space=vmem, size = 0x5000, scoped, tag = 'scratch operand']
  #allocation3 [shape = 's32[1]{0}', space=sflag, size = 0x4, scoped, tag = 'scratch operand']
  #allocation8 [shape = 's32[]', space=sflag, size = 0x4, offset = 0, fixed_abs, tag = 'sflag constant byte address 0x0 - dummy sync flag']
  #allocation9 [shape = 's32[]', space=sflag, size = 0x4, offset = 0, fixed_abs, tag = 'sflag constant byte address 0x0 - dummy sync flag']
  #allocation10 [shape = 's32[]', space=sflag, size = 0x4, offset = 0, fixed_abs, tag = 'sflag constant byte address 0x0 - dummy sync flag']
  #allocation11 [shape = 's32[]', space=sflag, size = 0x4, offset = 0, fixed_abs, tag = 'sflag constant byte address 0x0 - dummy sync flag']
  #allocation12 [shape = 's32[]', space=sflag, size = 0x4, offset = 0, fixed_abs, tag = 'sflag constant byte address 0x0 - dummy sync flag']
  #allocation13 [shape = 's32[]', space=sflag, size = 0x4, offset = 0, fixed_abs, tag = 'sflag constant byte address 0x0 - dummy sync flag']
  #allocation14 [shape = 's32[]', space=sflag, size = 0x4, offset = 0, fixed_abs, tag = 'sflag constant byte address 0x0 - dummy sync flag']
  #allocation15 [shape = 's32[]', space=sflag, size = 0x4, offset = 0, fixed_abs, tag = 'sflag constant byte address 0x0 - dummy sync flag']
  #allocation16 [shape = 's32[]', space=sflag, size = 0x4, offset = 0, fixed_abs, tag = 'sflag constant byte address 0x0 - dummy sync flag']
  #allocation17 [shape = 's32[]', space=sflag, size = 0x4, offset = 0, fixed_abs, tag = 'sflag constant byte address 0x0 - dummy sync flag']
  #allocation18 [shape = 's32[]', space=sflag, size = 0x4, offset = 0, fixed_abs, tag = 'sflag constant byte address 0x0 - dummy sync flag']
  #allocation19 [shape = 's32[]', space=sflag, size = 0x4, offset = 0, fixed_abs, tag = 'sflag constant byte address 0x0 - dummy sync flag']
  #allocation20 [shape = 's32[]', space=sflag, size = 0x4, offset = 0, fixed_abs, tag = 'sflag constant byte address 0x0 - dummy sync flag']
  #allocation21 [shape = 's32[]', space=sflag, size = 0x4, offset = 0, fixed_abs, tag = 'sflag constant byte address 0x0 - dummy sync flag']
  #allocation22 [shape = 's32[]', space=sflag, size = 0x4, offset = 0, fixed_abs, tag = 'sflag constant byte address 0x0 - dummy sync flag']
  #allocation23 [shape = 's32[]', space=sflag, size = 0x4, offset = 0, fixed_abs, tag = 'sflag constant byte address 0x0 - dummy sync flag']
  #allocation24 [shape = 's32[]', space=sflag, size = 0x4, offset = 0, fixed_abs, tag = 'sflag constant byte address 0x0 - dummy sync flag']
  #allocation25 [shape = 's32[]', space=sflag, size = 0x4, offset = 0, fixed_abs, tag = 'sflag constant byte address 0x0 - dummy sync flag']
  #allocation26 [shape = 's32[]', space=sflag, size = 0x4, offset = 0, fixed_abs, tag = 'sflag constant byte address 0x0 - dummy sync flag']
  #allocation27 [shape = 's32[]', space=sflag, size = 0x4, offset = 0, fixed_abs, tag = 'sflag constant byte address 0x0 - dummy sync flag']
  #allocation28 [shape = 's32[]', space=sflag, size = 0x4, offset = 0, fixed_abs, tag = 'sflag constant byte address 0x0 - dummy sync flag']
  #allocation29 [shape = 's32[]', space=sflag, size = 0x4, offset = 0, fixed_abs, tag = 'sflag constant byte address 0x0 - dummy sync flag']
  #allocation30 [shape = 's32[]', space=sflag, size = 0x4, offset = 0, fixed_abs, tag = 'sflag constant byte address 0x0 - dummy sync flag']
  #allocation31 [shape = 's32[]', space=sflag, size = 0x4, offset = 0, fixed_abs, tag = 'sflag constant byte address 0x0 - dummy sync flag']
  #allocation32 [shape = 's32[]', space=sflag, size = 0x4, offset = 0, fixed_abs, tag = 'sflag constant byte address 0x0 - dummy sync flag']
  #allocation33 [shape = 's32[]', space=sflag, size = 0x4, offset = 0, fixed_abs, tag = 'sflag constant byte address 0x0 - dummy sync flag']
  #allocation34 [shape = 's32[]', space=sflag, size = 0x4, offset = 0, fixed_abs, tag = 'sflag constant byte address 0x0 - dummy sync flag']
  #allocation35 [shape = 's32[]', space=sflag, size = 0x4, offset = 0, fixed_abs, tag = 'sflag constant byte address 0x0 - dummy sync flag']
  #allocation36 [shape = 's32[]', space=sflag, size = 0x4, offset = 0, fixed_abs, tag = 'sflag constant byte address 0x0 - dummy sync flag']
  #allocation37 [shape = 's32[]', space=sflag, size = 0x4, offset = 0, fixed_abs, tag = 'sflag constant byte address 0x0 - dummy sync flag']
  #allocation38 [shape = 's32[]', space=sflag, size = 0x4, offset = 0, fixed_abs, tag = 'sflag constant byte address 0x0 - dummy sync flag']
  #allocation39 [shape = 's32[]', space=sflag, size = 0x4, offset = 0, fixed_abs, tag = 'sflag constant byte address 0x0 - dummy sync flag']
  #allocation40 [shape = 's32[]', space=sflag, size = 0x4, offset = 0, fixed_abs, tag = 'sflag constant byte address 0x0 - dummy sync flag']
  #allocation41 [shape = 's32[]', space=sflag, size = 0x4, offset = 0, fixed_abs, tag = 'sflag constant byte address 0x0 - dummy sync flag']
  #allocation42 [shape = 's32[]', space=sflag, size = 0x4, offset = 0, fixed_abs, tag = 'sflag constant byte address 0x0 - dummy sync flag']
  #allocation43 [shape = 's32[]', space=sflag, size = 0x4, offset = 0, fixed_abs, tag = 'sflag constant byte address 0x0 - dummy sync flag']
  #allocation44 [shape = 's32[]', space=sflag, size = 0x4, offset = 0, fixed_abs, tag = 'sflag constant byte address 0x0 - dummy sync flag']
  #allocation45 [shape = 's32[]', space=sflag, size = 0x4, offset = 0, fixed_abs, tag = 'sflag constant byte address 0x0 - dummy sync flag']
  #allocation46 [shape = 's32[]', space=sflag, size = 0x4, offset = 0, fixed_abs, tag = 'sflag constant byte address 0x0 - dummy sync flag']
  #allocation47 [shape = 's32[]', space=sflag, size = 0x4, offset = 0, fixed_abs, tag = 'sflag constant byte address 0x0 - dummy sync flag']
  %s0 = inlined_call_operand.vmem [shape: s32[40], index: 0, kind: input, shape index: {}]
  %s1 = inlined_call_operand.vmem [shape: f32[4000,64], index: 1, kind: input, shape index: {}]
  %s2 = inlined_call_operand.vmem [shape: f32[5,64,128], index: 2, kind: input, shape index: {}]
  %s3 = inlined_call_operand.vmem [shape: f32[1,128], index: 3, kind: input, shape index: {}]
  %s4 = inlined_call_operand.vmem [shape: f32[128,128], index: 4, kind: input, shape index: {}]
  %s5 = inlined_call_operand.vmem [shape: f32[1,128], index: 5, kind: input, shape index: {}]
  %s6 = inlined_call_operand.vmem [shape: f32[1,128], index: 6, kind: input, shape index: {}]
  %s7 = inlined_call_operand.hbm [shape: f32[1,2,128], index: 7, kind: output, shape index: {}]
  %s8 = sld [smem:[#allocation0]]
  $region1238: #{word_att_forward_padded.1} parent=0
    _
  %s10 = ssub.s32 1, %s8
  %s11 = scalar_select 0, %s10, %s8
  $region1: #{word_att_forward_padded.1} parent=0
    #allocation4 [shape = 'u8[512]{0}', space=smem, size = 0x200, scoped, tag = 'input window, operand 0, single buffered']
    #allocation5 [shape = 's32[1]{0}', space=sflag, size = 0x4, scoped, tag = 'scoped memory for word_att_forward_padded.1']
    #allocation6 [shape = 's32[1]{0}', space=sflag, size = 0x4, scoped, tag = 'scoped memory for word_att_forward_padded.1']
    #allocation7 [shape = 'u8[1024]{0}', space=vmem, size = 0x400, scoped, tag = 'output window, operand 0, single buffered']
    %12 = vsyncpa [#allocation6], 0
    %13 = vsyncpa [#allocation5], 0
    // Predicated region
    $region2: #{word_att_forward_padded.1} parent=1 // pred_check
      _
    $region3: #{word_att_forward_padded.1} parent=1 // pred_check_branch
      %15 = sbr.rel (0) target = $region5
    $region4: #{word_att_forward_padded.1} parent=1 // pred_region
      %s17 = ssub.s32 16, 16
      %18 = vsyncadd [#allocation6], %s17
      %s20 = sshll.u32 %s0, 4
      %s21 = int_to_ptr.vmem [resolvable:$true] %s20
      %23 = dma.vmem_to_smem %s21, 16, [#allocation4], [#allocation6]
    $region5: #{word_att_forward_padded.1} parent=1 // pred_fallthru
      _
    // Predicated region
    $region6: #{word_att_forward_padded.1} parent=1 // pred_check
      _
    $region7: #{word_att_forward_padded.1} parent=1 // pred_check_branch
      %25 = sbr.rel (0) target = $region9
    $region8: #{word_att_forward_padded.1} parent=1 // pred_region
      _
    $region9: #{word_att_forward_padded.1} parent=1 // pred_fallthru
      _
    // Predicated region
    $region10: #{word_att_forward_padded.1} parent=1 // pred_check
      _
    $region11: #{word_att_forward_padded.1} parent=1 // pred_check_branch
      %27 = sbr.rel (0) target = $region13
    $region12: #{word_att_forward_padded.1} parent=1 // pred_region
      _
    $region13: #{word_att_forward_padded.1} parent=1 // pred_fallthru
      _
    // Predicated region
    $region14: #{word_att_forward_padded.1} parent=1 // pred_check
      _
    $region15: #{word_att_forward_padded.1} parent=1 // pred_check_branch
      %29 = sbr.rel (0) target = $region17
    $region16: #{word_att_forward_padded.1} parent=1 // pred_region
      _
    $region17: #{word_att_forward_padded.1} parent=1 // pred_fallthru
      _
    // Predicated region
    $region18: #{word_att_forward_padded.1} parent=1 // pred_check
      _
    $region19: #{word_att_forward_padded.1} parent=1 // pred_check_branch
      %31 = sbr.rel (0) target = $region21
    $region20: #{word_att_forward_padded.1} parent=1 // pred_region
      _
    $region21: #{word_att_forward_padded.1} parent=1 // pred_fallthru
      _
    // Predicated region
    $region22: #{word_att_forward_padded.1} parent=1 // pred_check
      _
    $region23: #{word_att_forward_padded.1} parent=1 // pred_check_branch
      %33 = sbr.rel (0) target = $region25
    $region24: #{word_att_forward_padded.1} parent=1 // pred_region
      _
    $region25: #{word_att_forward_padded.1} parent=1 // pred_fallthru
      _
    // Predicated region
    $region26: #{word_att_forward_padded.1} parent=1 // pred_check
      _
    $region27: #{word_att_forward_padded.1} parent=1 // pred_check_branch
      %35 = sbr.rel (0) target = $region29
    $region28: #{word_att_forward_padded.1} parent=1 // pred_region
      %36 = dma.done [#allocation6], 16
    $region29: #{word_att_forward_padded.1} parent=1 // pred_fallthru
      _
    %37 = sfence
    %s38 = sld [smem:[#allocation4]]
    %s39 = scalar_lea.vmem %s1, %s38
    %p41 = scmp.lt.u32.totalorder 1, 8
    %p42 = pneg %p41
    // Predicated region
    $region30: #{word_att_forward_padded.1} parent=1 // pred_check
      _
    $region31: #{word_att_forward_padded.1} parent=1 // pred_check_branch
      %44 = sbr.rel (%p41) target = $region33
    $region32: #{word_att_forward_padded.1} parent=1 // pred_region
      %s59 = sand.u32 1, 7
      %p60 = scmp.eq.s32.totalorder %s59, 0
      %p61 = pneg %p60
      // Predicated region
      $region45: #{word_att_forward_padded.1} parent=32 // pred_check
        _
      $region46: #{word_att_forward_padded.1} parent=32 // pred_check_branch
        %63 = sbr.rel (%p60) target = $region48
      $region47: #{word_att_forward_padded.1} parent=32 // pred_region
        %s64 = sand.u32 1, 7
        %s65 = ssub.s32 1, %s64
        %s66 = scalar_lea.vmem %s39, %s65
        %s67 = ssub.s32 1, %s64
        %s68 = scalar_lea.vmem [#allocation2], %s67
        %s69 = sshllo.u32 0, %s64
        loop: start=0, step=1, limit=1
        $region49: #{word_att_forward_padded.1} parent=47 // loop_pre_header
          _
        $region50: #{word_att_forward_padded.1} parent=47 // loop_header
          %s71 = sphi 0, %s75
          %p72 = scmp.ge.s32.totalorder %s71, 1
          %s76 = sphi %s66, %s66
          %s77 = sphi %s68, %s68
        $region51: #{word_att_forward_padded.1} parent=47 // loop_header_branch
          %74 = sbr.rel (%p72) target = $region55
        $region52: #{word_att_forward_padded.1} parent=47 // loop_body
          %v78 = vld [vmem:[%s76] sm:%s69]
          %79 = vst [vmem:[%s77] sm:%s69] %v78
        $region53: #{word_att_forward_padded.1} parent=47 // loop_footer
          %s75 = sadd.s32 1, %s71
        $region54: #{word_att_forward_padded.1} parent=47 // loop_footer_branch
          %70 = sbr.rel target = $region50
        $region55: #{word_att_forward_padded.1} parent=47 // loop_exit
          _
      $region48: #{word_att_forward_padded.1} parent=32 // pred_fallthru
        _
    $region33: #{word_att_forward_padded.1} parent=1 // pred_fallthru
      _
    // Predicated region
    $region34: #{word_att_forward_padded.1} parent=1 // pred_check
      %p45 = pneg %p41
    $region35: #{word_att_forward_padded.1} parent=1 // pred_check_branch
      %47 = sbr.rel (%p45) target = $region37
    $region36: #{word_att_forward_padded.1} parent=1 // pred_region
      %s48 = sshllo.u32 0, 1
      loop: start=0, step=1, limit=1
      $region38: #{word_att_forward_padded.1} parent=36 // loop_pre_header
        _
      $region39: #{word_att_forward_padded.1} parent=36 // loop_header
        %s50 = sphi 0, %s54
        %p51 = scmp.ge.s32.totalorder %s50, 1
        %s55 = sphi %s39, %s39
        %s56 = sphi [#allocation2], [#allocation2]
      $region40: #{word_att_forward_padded.1} parent=36 // loop_header_branch
        %53 = sbr.rel (%p51) target = $region44
      $region41: #{word_att_forward_padded.1} parent=36 // loop_body
        %v57 = vld [vmem:[%s55] sm:%s48]
        %58 = vst [vmem:[%s56] sm:%s48] %v57
      $region42: #{word_att_forward_padded.1} parent=36 // loop_footer
        %s54 = sadd.s32 1, %s50
      $region43: #{word_att_forward_padded.1} parent=36 // loop_footer_branch
        %49 = sbr.rel target = $region39
      $region44: #{word_att_forward_padded.1} parent=36 // loop_exit
        _
    $region37: #{word_att_forward_padded.1} parent=1 // pred_fallthru
      _
    // Predicated region
    $region56: #{word_att_forward_padded.1} parent=1 // pred_check
      _
    $region57: #{word_att_forward_padded.1} parent=1 // pred_check_branch
      %82 = sbr.rel (0) target = $region59
    $region58: #{word_att_forward_padded.1} parent=1 // pred_region
      %83 = vsyncadd [#allocation3], 16
    $region59: #{word_att_forward_padded.1} parent=1 // pred_fallthru
      _
    %s84 = sld [smem:[#allocation4 + $0x1]]
    %s85 = scalar_lea.vmem %s1, %s84
    %s86 = scalar_lea.vmem [#allocation2], 1
    %p88 = scmp.lt.u32.totalorder 1, 8
    %p89 = pneg %p88
    // Predicated region
    $region60: #{word_att_forward_padded.1} parent=1 // pred_check
      _
    $region61: #{word_att_forward_padded.1} parent=1 // pred_check_branch
      %91 = sbr.rel (%p88) target = $region63
    $region62: #{word_att_forward_padded.1} parent=1 // pred_region
      %s106 = sand.u32 1, 7
      %p107 = scmp.eq.s32.totalorder %s106, 0
      %p108 = pneg %p107
      // Predicated region
      $region75: #{word_att_forward_padded.1} parent=62 // pred_check
        _
      $region76: #{word_att_forward_padded.1} parent=62 // pred_check_branch
        %110 = sbr.rel (%p107) target = $region78
      $region77: #{word_att_forward_padded.1} parent=62 // pred_region
        %s111 = sand.u32 1, 7
        %s112 = ssub.s32 1, %s111
        %s113 = scalar_lea.vmem %s85, %s112
        %s114 = ssub.s32 1, %s111
        %s115 = scalar_lea.vmem %s86, %s114 [#allocation2]
        %s116 = sshllo.u32 0, %s111
        loop: start=0, step=1, limit=1
        $region79: #{word_att_forward_padded.1} parent=77 // loop_pre_header
          _
        $region80: #{word_att_forward_padded.1} parent=77 // loop_header
          %s118 = sphi 0, %s122
          %p119 = scmp.ge.s32.totalorder %s118, 1
          %s123 = sphi %s113, %s113
          %s124 = sphi %s115, %s115
        $region81: #{word_att_forward_padded.1} parent=77 // loop_header_branch
          %121 = sbr.rel (%p119) target = $region85
        $region82: #{word_att_forward_padded.1} parent=77 // loop_body
          %v125 = vld [vmem:[%s123] sm:%s116]
          %126 = vst [vmem:[%s124] sm:%s116] %v125
        $region83: #{word_att_forward_padded.1} parent=77 // loop_footer
          %s122 = sadd.s32 1, %s118
        $region84: #{word_att_forward_padded.1} parent=77 // loop_footer_branch
          %117 = sbr.rel target = $region80
        $region85: #{word_att_forward_padded.1} parent=77 // loop_exit
          _
      $region78: #{word_att_forward_padded.1} parent=62 // pred_fallthru
        _
    $region63: #{word_att_forward_padded.1} parent=1 // pred_fallthru
      _
    // Predicated region
    $region64: #{word_att_forward_padded.1} parent=1 // pred_check
      %p92 = pneg %p88
    $region65: #{word_att_forward_padded.1} parent=1 // pred_check_branch
      %94 = sbr.rel (%p92) target = $region67
    $region66: #{word_att_forward_padded.1} parent=1 // pred_region
      %s95 = sshllo.u32 0, 1
      loop: start=0, step=1, limit=1
      $region68: #{word_att_forward_padded.1} parent=66 // loop_pre_header
        _
      $region69: #{word_att_forward_padded.1} parent=66 // loop_header
        %s97 = sphi 0, %s101
        %p98 = scmp.ge.s32.totalorder %s97, 1
        %s102 = sphi %s85, %s85
        %s103 = sphi %s86, %s86
      $region70: #{word_att_forward_padded.1} parent=66 // loop_header_branch
        %100 = sbr.rel (%p98) target = $region74
      $region71: #{word_att_forward_padded.1} parent=66 // loop_body
        %v104 = vld [vmem:[%s102] sm:%s95]
        %105 = vst [vmem:[%s103] sm:%s95] %v104
      $region72: #{word_att_forward_padded.1} parent=66 // loop_footer
        %s101 = sadd.s32 1, %s97
      $region73: #{word_att_forward_padded.1} parent=66 // loop_footer_branch
        %96 = sbr.rel target = $region69
      $region74: #{word_att_forward_padded.1} parent=66 // loop_exit
        _
    $region67: #{word_att_forward_padded.1} parent=1 // pred_fallthru
      _
    // Predicated region
    $region86: #{word_att_forward_padded.1} parent=1 // pred_check
      _
    $region87: #{word_att_forward_padded.1} parent=1 // pred_check_branch
      %129 = sbr.rel (0) target = $region89
    $region88: #{word_att_forward_padded.1} parent=1 // pred_region
      %130 = vsyncadd [#allocation3], 16
    $region89: #{word_att_forward_padded.1} parent=1 // pred_fallthru
      _
    %s131 = sld [smem:[#allocation4 + $0x2]]
    %s132 = scalar_lea.vmem %s1, %s131
    %s133 = scalar_lea.vmem [#allocation2], 2
    %p135 = scmp.lt.u32.totalorder 1, 8
    %p136 = pneg %p135
    // Predicated region
    $region90: #{word_att_forward_padded.1} parent=1 // pred_check
      _
    $region91: #{word_att_forward_padded.1} parent=1 // pred_check_branch
      %138 = sbr.rel (%p135) target = $region93
    $region92: #{word_att_forward_padded.1} parent=1 // pred_region
      %s153 = sand.u32 1, 7
      %p154 = scmp.eq.s32.totalorder %s153, 0
      %p155 = pneg %p154
      // Predicated region
      $region105: #{word_att_forward_padded.1} parent=92 // pred_check
        _
      $region106: #{word_att_forward_padded.1} parent=92 // pred_check_branch
        %157 = sbr.rel (%p154) target = $region108
      $region107: #{word_att_forward_padded.1} parent=92 // pred_region
        %s158 = sand.u32 1, 7
        %s159 = ssub.s32 1, %s158
        %s160 = scalar_lea.vmem %s132, %s159
        %s161 = ssub.s32 1, %s158
        %s162 = scalar_lea.vmem %s133, %s161 [#allocation2]
        %s163 = sshllo.u32 0, %s158
        loop: start=0, step=1, limit=1
        $region109: #{word_att_forward_padded.1} parent=107 // loop_pre_header
          _
        $region110: #{word_att_forward_padded.1} parent=107 // loop_header
          %s165 = sphi 0, %s169
          %p166 = scmp.ge.s32.totalorder %s165, 1
          %s170 = sphi %s160, %s160
          %s171 = sphi %s162, %s162
        $region111: #{word_att_forward_padded.1} parent=107 // loop_header_branch
          %168 = sbr.rel (%p166) target = $region115
        $region112: #{word_att_forward_padded.1} parent=107 // loop_body
          %v172 = vld [vmem:[%s170] sm:%s163]
          %173 = vst [vmem:[%s171] sm:%s163] %v172
        $region113: #{word_att_forward_padded.1} parent=107 // loop_footer
          %s169 = sadd.s32 1, %s165
        $region114: #{word_att_forward_padded.1} parent=107 // loop_footer_branch
          %164 = sbr.rel target = $region110
        $region115: #{word_att_forward_padded.1} parent=107 // loop_exit
          _
      $region108: #{word_att_forward_padded.1} parent=92 // pred_fallthru
        _
    $region93: #{word_att_forward_padded.1} parent=1 // pred_fallthru
      _
    // Predicated region
    $region94: #{word_att_forward_padded.1} parent=1 // pred_check
      %p139 = pneg %p135
    $region95: #{word_att_forward_padded.1} parent=1 // pred_check_branch
      %141 = sbr.rel (%p139) target = $region97
    $region96: #{word_att_forward_padded.1} parent=1 // pred_region
      %s142 = sshllo.u32 0, 1
      loop: start=0, step=1, limit=1
      $region98: #{word_att_forward_padded.1} parent=96 // loop_pre_header
        _
      $region99: #{word_att_forward_padded.1} parent=96 // loop_header
        %s144 = sphi 0, %s148
        %p145 = scmp.ge.s32.totalorder %s144, 1
        %s149 = sphi %s132, %s132
        %s150 = sphi %s133, %s133
      $region100: #{word_att_forward_padded.1} parent=96 // loop_header_branch
        %147 = sbr.rel (%p145) target = $region104
      $region101: #{word_att_forward_padded.1} parent=96 // loop_body
        %v151 = vld [vmem:[%s149] sm:%s142]
        %152 = vst [vmem:[%s150] sm:%s142] %v151
      $region102: #{word_att_forward_padded.1} parent=96 // loop_footer
        %s148 = sadd.s32 1, %s144
      $region103: #{word_att_forward_padded.1} parent=96 // loop_footer_branch
        %143 = sbr.rel target = $region99
      $region104: #{word_att_forward_padded.1} parent=96 // loop_exit
        _
    $region97: #{word_att_forward_padded.1} parent=1 // pred_fallthru
      _
    // Predicated region
    $region116: #{word_att_forward_padded.1} parent=1 // pred_check
      _
    $region117: #{word_att_forward_padded.1} parent=1 // pred_check_branch
      %176 = sbr.rel (0) target = $region119
    $region118: #{word_att_forward_padded.1} parent=1 // pred_region
      %177 = vsyncadd [#allocation3], 16
    $region119: #{word_att_forward_padded.1} parent=1 // pred_fallthru
      _
    %s178 = sld [smem:[#allocation4 + $0x3]]
    %s179 = scalar_lea.vmem %s1, %s178
    %s180 = scalar_lea.vmem [#allocation2], 3
    %p182 = scmp.lt.u32.totalorder 1, 8
    %p183 = pneg %p182
    // Predicated region
    $region120: #{word_att_forward_padded.1} parent=1 // pred_check
      _
    $region121: #{word_att_forward_padded.1} parent=1 // pred_check_branch
      %185 = sbr.rel (%p182) target = $region123
    $region122: #{word_att_forward_padded.1} parent=1 // pred_region
      %s200 = sand.u32 1, 7
      %p201 = scmp.eq.s32.totalorder %s200, 0
      %p202 = pneg %p201
      // Predicated region
      $region135: #{word_att_forward_padded.1} parent=122 // pred_check
        _
      $region136: #{word_att_forward_padded.1} parent=122 // pred_check_branch
        %204 = sbr.rel (%p201) target = $region138
      $region137: #{word_att_forward_padded.1} parent=122 // pred_region
        %s205 = sand.u32 1, 7
        %s206 = ssub.s32 1, %s205
        %s207 = scalar_lea.vmem %s179, %s206
        %s208 = ssub.s32 1, %s205
        %s209 = scalar_lea.vmem %s180, %s208 [#allocation2]
        %s210 = sshllo.u32 0, %s205
        loop: start=0, step=1, limit=1
        $region139: #{word_att_forward_padded.1} parent=137 // loop_pre_header
          _
        $region140: #{word_att_forward_padded.1} parent=137 // loop_header
          %s212 = sphi 0, %s216
          %p213 = scmp.ge.s32.totalorder %s212, 1
          %s217 = sphi %s207, %s207
          %s218 = sphi %s209, %s209
        $region141: #{word_att_forward_padded.1} parent=137 // loop_header_branch
          %215 = sbr.rel (%p213) target = $region145
        $region142: #{word_att_forward_padded.1} parent=137 // loop_body
          %v219 = vld [vmem:[%s217] sm:%s210]
          %220 = vst [vmem:[%s218] sm:%s210] %v219
        $region143: #{word_att_forward_padded.1} parent=137 // loop_footer
          %s216 = sadd.s32 1, %s212
        $region144: #{word_att_forward_padded.1} parent=137 // loop_footer_branch
          %211 = sbr.rel target = $region140
        $region145: #{word_att_forward_padded.1} parent=137 // loop_exit
          _
      $region138: #{word_att_forward_padded.1} parent=122 // pred_fallthru
        _
    $region123: #{word_att_forward_padded.1} parent=1 // pred_fallthru
      _
    // Predicated region
    $region124: #{word_att_forward_padded.1} parent=1 // pred_check
      %p186 = pneg %p182
    $region125: #{word_att_forward_padded.1} parent=1 // pred_check_branch
      %188 = sbr.rel (%p186) target = $region127
    $region126: #{word_att_forward_padded.1} parent=1 // pred_region
      %s189 = sshllo.u32 0, 1
      loop: start=0, step=1, limit=1
      $region128: #{word_att_forward_padded.1} parent=126 // loop_pre_header
        _
      $region129: #{word_att_forward_padded.1} parent=126 // loop_header
        %s191 = sphi 0, %s195
        %p192 = scmp.ge.s32.totalorder %s191, 1
        %s196 = sphi %s179, %s179
        %s197 = sphi %s180, %s180
      $region130: #{word_att_forward_padded.1} parent=126 // loop_header_branch
        %194 = sbr.rel (%p192) target = $region134
      $region131: #{word_att_forward_padded.1} parent=126 // loop_body
        %v198 = vld [vmem:[%s196] sm:%s189]
        %199 = vst [vmem:[%s197] sm:%s189] %v198
      $region132: #{word_att_forward_padded.1} parent=126 // loop_footer
        %s195 = sadd.s32 1, %s191
      $region133: #{word_att_forward_padded.1} parent=126 // loop_footer_branch
        %190 = sbr.rel target = $region129
      $region134: #{word_att_forward_padded.1} parent=126 // loop_exit
        _
    $region127: #{word_att_forward_padded.1} parent=1 // pred_fallthru
      _
    // Predicated region
    $region146: #{word_att_forward_padded.1} parent=1 // pred_check
      _
    $region147: #{word_att_forward_padded.1} parent=1 // pred_check_branch
      %223 = sbr.rel (0) target = $region149
    $region148: #{word_att_forward_padded.1} parent=1 // pred_region
      %224 = vsyncadd [#allocation3], 16
    $region149: #{word_att_forward_padded.1} parent=1 // pred_fallthru
      _
    %s225 = sld [smem:[#allocation4 + $0x4]]
    %s226 = scalar_lea.vmem %s1, %s225
    %s227 = scalar_lea.vmem [#allocation2], 4
    %p229 = scmp.lt.u32.totalorder 1, 8
    %p230 = pneg %p229
    // Predicated region
    $region150: #{word_att_forward_padded.1} parent=1 // pred_check
      _
    $region151: #{word_att_forward_padded.1} parent=1 // pred_check_branch
      %232 = sbr.rel (%p229) target = $region153
    $region152: #{word_att_forward_padded.1} parent=1 // pred_region
      %s247 = sand.u32 1, 7
      %p248 = scmp.eq.s32.totalorder %s247, 0
      %p249 = pneg %p248
      // Predicated region
      $region165: #{word_att_forward_padded.1} parent=152 // pred_check
        _
      $region166: #{word_att_forward_padded.1} parent=152 // pred_check_branch
        %251 = sbr.rel (%p248) target = $region168
      $region167: #{word_att_forward_padded.1} parent=152 // pred_region
        %s252 = sand.u32 1, 7
        %s253 = ssub.s32 1, %s252
        %s254 = scalar_lea.vmem %s226, %s253
        %s255 = ssub.s32 1, %s252
        %s256 = scalar_lea.vmem %s227, %s255 [#allocation2]
        %s257 = sshllo.u32 0, %s252
        loop: start=0, step=1, limit=1
        $region169: #{word_att_forward_padded.1} parent=167 // loop_pre_header
          _
        $region170: #{word_att_forward_padded.1} parent=167 // loop_header
          %s259 = sphi 0, %s263
          %p260 = scmp.ge.s32.totalorder %s259, 1
          %s264 = sphi %s254, %s254
          %s265 = sphi %s256, %s256
        $region171: #{word_att_forward_padded.1} parent=167 // loop_header_branch
          %262 = sbr.rel (%p260) target = $region175
        $region172: #{word_att_forward_padded.1} parent=167 // loop_body
          %v266 = vld [vmem:[%s264] sm:%s257]
          %267 = vst [vmem:[%s265] sm:%s257] %v266
        $region173: #{word_att_forward_padded.1} parent=167 // loop_footer
          %s263 = sadd.s32 1, %s259
        $region174: #{word_att_forward_padded.1} parent=167 // loop_footer_branch
          %258 = sbr.rel target = $region170
        $region175: #{word_att_forward_padded.1} parent=167 // loop_exit
          _
      $region168: #{word_att_forward_padded.1} parent=152 // pred_fallthru
        _
    $region153: #{word_att_forward_padded.1} parent=1 // pred_fallthru
      _
    // Predicated region
    $region154: #{word_att_forward_padded.1} parent=1 // pred_check
      %p233 = pneg %p229
    $region155: #{word_att_forward_padded.1} parent=1 // pred_check_branch
      %235 = sbr.rel (%p233) target = $region157
    $region156: #{word_att_forward_padded.1} parent=1 // pred_region
      %s236 = sshllo.u32 0, 1
      loop: start=0, step=1, limit=1
      $region158: #{word_att_forward_padded.1} parent=156 // loop_pre_header
        _
      $region159: #{word_att_forward_padded.1} parent=156 // loop_header
        %s238 = sphi 0, %s242
        %p239 = scmp.ge.s32.totalorder %s238, 1
        %s243 = sphi %s226, %s226
        %s244 = sphi %s227, %s227
      $region160: #{word_att_forward_padded.1} parent=156 // loop_header_branch
        %241 = sbr.rel (%p239) target = $region164
      $region161: #{word_att_forward_padded.1} parent=156 // loop_body
        %v245 = vld [vmem:[%s243] sm:%s236]
        %246 = vst [vmem:[%s244] sm:%s236] %v245
      $region162: #{word_att_forward_padded.1} parent=156 // loop_footer
        %s242 = sadd.s32 1, %s238
      $region163: #{word_att_forward_padded.1} parent=156 // loop_footer_branch
        %237 = sbr.rel target = $region159
      $region164: #{word_att_forward_padded.1} parent=156 // loop_exit
        _
    $region157: #{word_att_forward_padded.1} parent=1 // pred_fallthru
      _
    // Predicated region
    $region176: #{word_att_forward_padded.1} parent=1 // pred_check
      _
    $region177: #{word_att_forward_padded.1} parent=1 // pred_check_branch
      %270 = sbr.rel (0) target = $region179
    $region178: #{word_att_forward_padded.1} parent=1 // pred_region
      %271 = vsyncadd [#allocation3], 16
    $region179: #{word_att_forward_padded.1} parent=1 // pred_fallthru
      _
    %s272 = sld [smem:[#allocation4 + $0x5]]
    %s273 = scalar_lea.vmem %s1, %s272
    %s274 = scalar_lea.vmem [#allocation2], 5
    %p276 = scmp.lt.u32.totalorder 1, 8
    %p277 = pneg %p276
    // Predicated region
    $region180: #{word_att_forward_padded.1} parent=1 // pred_check
      _
    $region181: #{word_att_forward_padded.1} parent=1 // pred_check_branch
      %279 = sbr.rel (%p276) target = $region183
    $region182: #{word_att_forward_padded.1} parent=1 // pred_region
      %s294 = sand.u32 1, 7
      %p295 = scmp.eq.s32.totalorder %s294, 0
      %p296 = pneg %p295
      // Predicated region
      $region195: #{word_att_forward_padded.1} parent=182 // pred_check
        _
      $region196: #{word_att_forward_padded.1} parent=182 // pred_check_branch
        %298 = sbr.rel (%p295) target = $region198
      $region197: #{word_att_forward_padded.1} parent=182 // pred_region
        %s299 = sand.u32 1, 7
        %s300 = ssub.s32 1, %s299
        %s301 = scalar_lea.vmem %s273, %s300
        %s302 = ssub.s32 1, %s299
        %s303 = scalar_lea.vmem %s274, %s302 [#allocation2]
        %s304 = sshllo.u32 0, %s299
        loop: start=0, step=1, limit=1
        $region199: #{word_att_forward_padded.1} parent=197 // loop_pre_header
          _
        $region200: #{word_att_forward_padded.1} parent=197 // loop_header
          %s306 = sphi 0, %s310
          %p307 = scmp.ge.s32.totalorder %s306, 1
          %s311 = sphi %s301, %s301
          %s312 = sphi %s303, %s303
        $region201: #{word_att_forward_padded.1} parent=197 // loop_header_branch
          %309 = sbr.rel (%p307) target = $region205
        $region202: #{word_att_forward_padded.1} parent=197 // loop_body
          %v313 = vld [vmem:[%s311] sm:%s304]
          %314 = vst [vmem:[%s312] sm:%s304] %v313
        $region203: #{word_att_forward_padded.1} parent=197 // loop_footer
          %s310 = sadd.s32 1, %s306
        $region204: #{word_att_forward_padded.1} parent=197 // loop_footer_branch
          %305 = sbr.rel target = $region200
        $region205: #{word_att_forward_padded.1} parent=197 // loop_exit
          _
      $region198: #{word_att_forward_padded.1} parent=182 // pred_fallthru
        _
    $region183: #{word_att_forward_padded.1} parent=1 // pred_fallthru
      _
    // Predicated region
    $region184: #{word_att_forward_padded.1} parent=1 // pred_check
      %p280 = pneg %p276
    $region185: #{word_att_forward_padded.1} parent=1 // pred_check_branch
      %282 = sbr.rel (%p280) target = $region187
    $region186: #{word_att_forward_padded.1} parent=1 // pred_region
      %s283 = sshllo.u32 0, 1
      loop: start=0, step=1, limit=1
      $region188: #{word_att_forward_padded.1} parent=186 // loop_pre_header
        _
      $region189: #{word_att_forward_padded.1} parent=186 // loop_header
        %s285 = sphi 0, %s289
        %p286 = scmp.ge.s32.totalorder %s285, 1
        %s290 = sphi %s273, %s273
        %s291 = sphi %s274, %s274
      $region190: #{word_att_forward_padded.1} parent=186 // loop_header_branch
        %288 = sbr.rel (%p286) target = $region194
      $region191: #{word_att_forward_padded.1} parent=186 // loop_body
        %v292 = vld [vmem:[%s290] sm:%s283]
        %293 = vst [vmem:[%s291] sm:%s283] %v292
      $region192: #{word_att_forward_padded.1} parent=186 // loop_footer
        %s289 = sadd.s32 1, %s285
      $region193: #{word_att_forward_padded.1} parent=186 // loop_footer_branch
        %284 = sbr.rel target = $region189
      $region194: #{word_att_forward_padded.1} parent=186 // loop_exit
        _
    $region187: #{word_att_forward_padded.1} parent=1 // pred_fallthru
      _
    // Predicated region
    $region206: #{word_att_forward_padded.1} parent=1 // pred_check
      _
    $region207: #{word_att_forward_padded.1} parent=1 // pred_check_branch
      %317 = sbr.rel (0) target = $region209
    $region208: #{word_att_forward_padded.1} parent=1 // pred_region
      %318 = vsyncadd [#allocation3], 16
    $region209: #{word_att_forward_padded.1} parent=1 // pred_fallthru
      _
    %s319 = sld [smem:[#allocation4 + $0x6]]
    %s320 = scalar_lea.vmem %s1, %s319
    %s321 = scalar_lea.vmem [#allocation2], 6
    %p323 = scmp.lt.u32.totalorder 1, 8
    %p324 = pneg %p323
    // Predicated region
    $region210: #{word_att_forward_padded.1} parent=1 // pred_check
      _
    $region211: #{word_att_forward_padded.1} parent=1 // pred_check_branch
      %326 = sbr.rel (%p323) target = $region213
    $region212: #{word_att_forward_padded.1} parent=1 // pred_region
      %s341 = sand.u32 1, 7
      %p342 = scmp.eq.s32.totalorder %s341, 0
      %p343 = pneg %p342
      // Predicated region
      $region225: #{word_att_forward_padded.1} parent=212 // pred_check
        _
      $region226: #{word_att_forward_padded.1} parent=212 // pred_check_branch
        %345 = sbr.rel (%p342) target = $region228
      $region227: #{word_att_forward_padded.1} parent=212 // pred_region
        %s346 = sand.u32 1, 7
        %s347 = ssub.s32 1, %s346
        %s348 = scalar_lea.vmem %s320, %s347
        %s349 = ssub.s32 1, %s346
        %s350 = scalar_lea.vmem %s321, %s349 [#allocation2]
        %s351 = sshllo.u32 0, %s346
        loop: start=0, step=1, limit=1
        $region229: #{word_att_forward_padded.1} parent=227 // loop_pre_header
          _
        $region230: #{word_att_forward_padded.1} parent=227 // loop_header
          %s353 = sphi 0, %s357
          %p354 = scmp.ge.s32.totalorder %s353, 1
          %s358 = sphi %s348, %s348
          %s359 = sphi %s350, %s350
        $region231: #{word_att_forward_padded.1} parent=227 // loop_header_branch
          %356 = sbr.rel (%p354) target = $region235
        $region232: #{word_att_forward_padded.1} parent=227 // loop_body
          %v360 = vld [vmem:[%s358] sm:%s351]
          %361 = vst [vmem:[%s359] sm:%s351] %v360
        $region233: #{word_att_forward_padded.1} parent=227 // loop_footer
          %s357 = sadd.s32 1, %s353
        $region234: #{word_att_forward_padded.1} parent=227 // loop_footer_branch
          %352 = sbr.rel target = $region230
        $region235: #{word_att_forward_padded.1} parent=227 // loop_exit
          _
      $region228: #{word_att_forward_padded.1} parent=212 // pred_fallthru
        _
    $region213: #{word_att_forward_padded.1} parent=1 // pred_fallthru
      _
    // Predicated region
    $region214: #{word_att_forward_padded.1} parent=1 // pred_check
      %p327 = pneg %p323
    $region215: #{word_att_forward_padded.1} parent=1 // pred_check_branch
      %329 = sbr.rel (%p327) target = $region217
    $region216: #{word_att_forward_padded.1} parent=1 // pred_region
      %s330 = sshllo.u32 0, 1
      loop: start=0, step=1, limit=1
      $region218: #{word_att_forward_padded.1} parent=216 // loop_pre_header
        _
      $region219: #{word_att_forward_padded.1} parent=216 // loop_header
        %s332 = sphi 0, %s336
        %p333 = scmp.ge.s32.totalorder %s332, 1
        %s337 = sphi %s320, %s320
        %s338 = sphi %s321, %s321
      $region220: #{word_att_forward_padded.1} parent=216 // loop_header_branch
        %335 = sbr.rel (%p333) target = $region224
      $region221: #{word_att_forward_padded.1} parent=216 // loop_body
        %v339 = vld [vmem:[%s337] sm:%s330]
        %340 = vst [vmem:[%s338] sm:%s330] %v339
      $region222: #{word_att_forward_padded.1} parent=216 // loop_footer
        %s336 = sadd.s32 1, %s332
      $region223: #{word_att_forward_padded.1} parent=216 // loop_footer_branch
        %331 = sbr.rel target = $region219
      $region224: #{word_att_forward_padded.1} parent=216 // loop_exit
        _
    $region217: #{word_att_forward_padded.1} parent=1 // pred_fallthru
      _
    // Predicated region
    $region236: #{word_att_forward_padded.1} parent=1 // pred_check
      _
    $region237: #{word_att_forward_padded.1} parent=1 // pred_check_branch
      %364 = sbr.rel (0) target = $region239
    $region238: #{word_att_forward_padded.1} parent=1 // pred_region
      %365 = vsyncadd [#allocation3], 16
    $region239: #{word_att_forward_padded.1} parent=1 // pred_fallthru
      _
    %s366 = sld [smem:[#allocation4 + $0x7]]
    %s367 = scalar_lea.vmem %s1, %s366
    %s368 = scalar_lea.vmem [#allocation2], 7
    %p370 = scmp.lt.u32.totalorder 1, 8
    %p371 = pneg %p370
    // Predicated region
    $region240: #{word_att_forward_padded.1} parent=1 // pred_check
      _
    $region241: #{word_att_forward_padded.1} parent=1 // pred_check_branch
      %373 = sbr.rel (%p370) target = $region243
    $region242: #{word_att_forward_padded.1} parent=1 // pred_region
      %s388 = sand.u32 1, 7
      %p389 = scmp.eq.s32.totalorder %s388, 0
      %p390 = pneg %p389
      // Predicated region
      $region255: #{word_att_forward_padded.1} parent=242 // pred_check
        _
      $region256: #{word_att_forward_padded.1} parent=242 // pred_check_branch
        %392 = sbr.rel (%p389) target = $region258
      $region257: #{word_att_forward_padded.1} parent=242 // pred_region
        %s393 = sand.u32 1, 7
        %s394 = ssub.s32 1, %s393
        %s395 = scalar_lea.vmem %s367, %s394
        %s396 = ssub.s32 1, %s393
        %s397 = scalar_lea.vmem %s368, %s396 [#allocation2]
        %s398 = sshllo.u32 0, %s393
        loop: start=0, step=1, limit=1
        $region259: #{word_att_forward_padded.1} parent=257 // loop_pre_header
          _
        $region260: #{word_att_forward_padded.1} parent=257 // loop_header
          %s400 = sphi 0, %s404
          %p401 = scmp.ge.s32.totalorder %s400, 1
          %s405 = sphi %s395, %s395
          %s406 = sphi %s397, %s397
        $region261: #{word_att_forward_padded.1} parent=257 // loop_header_branch
          %403 = sbr.rel (%p401) target = $region265
        $region262: #{word_att_forward_padded.1} parent=257 // loop_body
          %v407 = vld [vmem:[%s405] sm:%s398]
          %408 = vst [vmem:[%s406] sm:%s398] %v407
        $region263: #{word_att_forward_padded.1} parent=257 // loop_footer
          %s404 = sadd.s32 1, %s400
        $region264: #{word_att_forward_padded.1} parent=257 // loop_footer_branch
          %399 = sbr.rel target = $region260
        $region265: #{word_att_forward_padded.1} parent=257 // loop_exit
          _
      $region258: #{word_att_forward_padded.1} parent=242 // pred_fallthru
        _
    $region243: #{word_att_forward_padded.1} parent=1 // pred_fallthru
      _
    // Predicated region
    $region244: #{word_att_forward_padded.1} parent=1 // pred_check
      %p374 = pneg %p370
    $region245: #{word_att_forward_padded.1} parent=1 // pred_check_branch
      %376 = sbr.rel (%p374) target = $region247
    $region246: #{word_att_forward_padded.1} parent=1 // pred_region
      %s377 = sshllo.u32 0, 1
      loop: start=0, step=1, limit=1
      $region248: #{word_att_forward_padded.1} parent=246 // loop_pre_header
        _
      $region249: #{word_att_forward_padded.1} parent=246 // loop_header
        %s379 = sphi 0, %s383
        %p380 = scmp.ge.s32.totalorder %s379, 1
        %s384 = sphi %s367, %s367
        %s385 = sphi %s368, %s368
      $region250: #{word_att_forward_padded.1} parent=246 // loop_header_branch
        %382 = sbr.rel (%p380) target = $region254
      $region251: #{word_att_forward_padded.1} parent=246 // loop_body
        %v386 = vld [vmem:[%s384] sm:%s377]
        %387 = vst [vmem:[%s385] sm:%s377] %v386
      $region252: #{word_att_forward_padded.1} parent=246 // loop_footer
        %s383 = sadd.s32 1, %s379
      $region253: #{word_att_forward_padded.1} parent=246 // loop_footer_branch
        %378 = sbr.rel target = $region249
      $region254: #{word_att_forward_padded.1} parent=246 // loop_exit
        _
    $region247: #{word_att_forward_padded.1} parent=1 // pred_fallthru
      _
    // Predicated region
    $region266: #{word_att_forward_padded.1} parent=1 // pred_check
      _
    $region267: #{word_att_forward_padded.1} parent=1 // pred_check_branch
      %411 = sbr.rel (0) target = $region269
    $region268: #{word_att_forward_padded.1} parent=1 // pred_region
      %412 = vsyncadd [#allocation3], 16
    $region269: #{word_att_forward_padded.1} parent=1 // pred_fallthru
      _
    %s413 = sld [smem:[#allocation4 + $0x8]]
    %s414 = scalar_lea.vmem %s1, %s413
    %s415 = scalar_lea.vmem [#allocation2], 8
    %p417 = scmp.lt.u32.totalorder 1, 8
    %p418 = pneg %p417
    // Predicated region
    $region270: #{word_att_forward_padded.1} parent=1 // pred_check
      _
    $region271: #{word_att_forward_padded.1} parent=1 // pred_check_branch
      %420 = sbr.rel (%p417) target = $region273
    $region272: #{word_att_forward_padded.1} parent=1 // pred_region
      %s435 = sand.u32 1, 7
      %p436 = scmp.eq.s32.totalorder %s435, 0
      %p437 = pneg %p436
      // Predicated region
      $region285: #{word_att_forward_padded.1} parent=272 // pred_check
        _
      $region286: #{word_att_forward_padded.1} parent=272 // pred_check_branch
        %439 = sbr.rel (%p436) target = $region288
      $region287: #{word_att_forward_padded.1} parent=272 // pred_region
        %s440 = sand.u32 1, 7
        %s441 = ssub.s32 1, %s440
        %s442 = scalar_lea.vmem %s414, %s441
        %s443 = ssub.s32 1, %s440
        %s444 = scalar_lea.vmem %s415, %s443 [#allocation2]
        %s445 = sshllo.u32 0, %s440
        loop: start=0, step=1, limit=1
        $region289: #{word_att_forward_padded.1} parent=287 // loop_pre_header
          _
        $region290: #{word_att_forward_padded.1} parent=287 // loop_header
          %s447 = sphi 0, %s451
          %p448 = scmp.ge.s32.totalorder %s447, 1
          %s452 = sphi %s442, %s442
          %s453 = sphi %s444, %s444
        $region291: #{word_att_forward_padded.1} parent=287 // loop_header_branch
          %450 = sbr.rel (%p448) target = $region295
        $region292: #{word_att_forward_padded.1} parent=287 // loop_body
          %v454 = vld [vmem:[%s452] sm:%s445]
          %455 = vst [vmem:[%s453] sm:%s445] %v454
        $region293: #{word_att_forward_padded.1} parent=287 // loop_footer
          %s451 = sadd.s32 1, %s447
        $region294: #{word_att_forward_padded.1} parent=287 // loop_footer_branch
          %446 = sbr.rel target = $region290
        $region295: #{word_att_forward_padded.1} parent=287 // loop_exit
          _
      $region288: #{word_att_forward_padded.1} parent=272 // pred_fallthru
        _
    $region273: #{word_att_forward_padded.1} parent=1 // pred_fallthru
      _
    // Predicated region
    $region274: #{word_att_forward_padded.1} parent=1 // pred_check
      %p421 = pneg %p417
    $region275: #{word_att_forward_padded.1} parent=1 // pred_check_branch
      %423 = sbr.rel (%p421) target = $region277
    $region276: #{word_att_forward_padded.1} parent=1 // pred_region
      %s424 = sshllo.u32 0, 1
      loop: start=0, step=1, limit=1
      $region278: #{word_att_forward_padded.1} parent=276 // loop_pre_header
        _
      $region279: #{word_att_forward_padded.1} parent=276 // loop_header
        %s426 = sphi 0, %s430
        %p427 = scmp.ge.s32.totalorder %s426, 1
        %s431 = sphi %s414, %s414
        %s432 = sphi %s415, %s415
      $region280: #{word_att_forward_padded.1} parent=276 // loop_header_branch
        %429 = sbr.rel (%p427) target = $region284
      $region281: #{word_att_forward_padded.1} parent=276 // loop_body
        %v433 = vld [vmem:[%s431] sm:%s424]
        %434 = vst [vmem:[%s432] sm:%s424] %v433
      $region282: #{word_att_forward_padded.1} parent=276 // loop_footer
        %s430 = sadd.s32 1, %s426
      $region283: #{word_att_forward_padded.1} parent=276 // loop_footer_branch
        %425 = sbr.rel target = $region279
      $region284: #{word_att_forward_padded.1} parent=276 // loop_exit
        _
    $region277: #{word_att_forward_padded.1} parent=1 // pred_fallthru
      _
    // Predicated region
    $region296: #{word_att_forward_padded.1} parent=1 // pred_check
      _
    $region297: #{word_att_forward_padded.1} parent=1 // pred_check_branch
      %458 = sbr.rel (0) target = $region299
    $region298: #{word_att_forward_padded.1} parent=1 // pred_region
      %459 = vsyncadd [#allocation3], 16
    $region299: #{word_att_forward_padded.1} parent=1 // pred_fallthru
      _
    %s460 = sld [smem:[#allocation4 + $0x9]]
    %s461 = scalar_lea.vmem %s1, %s460
    %s462 = scalar_lea.vmem [#allocation2], 9
    %p464 = scmp.lt.u32.totalorder 1, 8
    %p465 = pneg %p464
    // Predicated region
    $region300: #{word_att_forward_padded.1} parent=1 // pred_check
      _
    $region301: #{word_att_forward_padded.1} parent=1 // pred_check_branch
      %467 = sbr.rel (%p464) target = $region303
    $region302: #{word_att_forward_padded.1} parent=1 // pred_region
      %s482 = sand.u32 1, 7
      %p483 = scmp.eq.s32.totalorder %s482, 0
      %p484 = pneg %p483
      // Predicated region
      $region315: #{word_att_forward_padded.1} parent=302 // pred_check
        _
      $region316: #{word_att_forward_padded.1} parent=302 // pred_check_branch
        %486 = sbr.rel (%p483) target = $region318
      $region317: #{word_att_forward_padded.1} parent=302 // pred_region
        %s487 = sand.u32 1, 7
        %s488 = ssub.s32 1, %s487
        %s489 = scalar_lea.vmem %s461, %s488
        %s490 = ssub.s32 1, %s487
        %s491 = scalar_lea.vmem %s462, %s490 [#allocation2]
        %s492 = sshllo.u32 0, %s487
        loop: start=0, step=1, limit=1
        $region319: #{word_att_forward_padded.1} parent=317 // loop_pre_header
          _
        $region320: #{word_att_forward_padded.1} parent=317 // loop_header
          %s494 = sphi 0, %s498
          %p495 = scmp.ge.s32.totalorder %s494, 1
          %s499 = sphi %s489, %s489
          %s500 = sphi %s491, %s491
        $region321: #{word_att_forward_padded.1} parent=317 // loop_header_branch
          %497 = sbr.rel (%p495) target = $region325
        $region322: #{word_att_forward_padded.1} parent=317 // loop_body
          %v501 = vld [vmem:[%s499] sm:%s492]
          %502 = vst [vmem:[%s500] sm:%s492] %v501
        $region323: #{word_att_forward_padded.1} parent=317 // loop_footer
          %s498 = sadd.s32 1, %s494
        $region324: #{word_att_forward_padded.1} parent=317 // loop_footer_branch
          %493 = sbr.rel target = $region320
        $region325: #{word_att_forward_padded.1} parent=317 // loop_exit
          _
      $region318: #{word_att_forward_padded.1} parent=302 // pred_fallthru
        _
    $region303: #{word_att_forward_padded.1} parent=1 // pred_fallthru
      _
    // Predicated region
    $region304: #{word_att_forward_padded.1} parent=1 // pred_check
      %p468 = pneg %p464
    $region305: #{word_att_forward_padded.1} parent=1 // pred_check_branch
      %470 = sbr.rel (%p468) target = $region307
    $region306: #{word_att_forward_padded.1} parent=1 // pred_region
      %s471 = sshllo.u32 0, 1
      loop: start=0, step=1, limit=1
      $region308: #{word_att_forward_padded.1} parent=306 // loop_pre_header
        _
      $region309: #{word_att_forward_padded.1} parent=306 // loop_header
        %s473 = sphi 0, %s477
        %p474 = scmp.ge.s32.totalorder %s473, 1
        %s478 = sphi %s461, %s461
        %s479 = sphi %s462, %s462
      $region310: #{word_att_forward_padded.1} parent=306 // loop_header_branch
        %476 = sbr.rel (%p474) target = $region314
      $region311: #{word_att_forward_padded.1} parent=306 // loop_body
        %v480 = vld [vmem:[%s478] sm:%s471]
        %481 = vst [vmem:[%s479] sm:%s471] %v480
      $region312: #{word_att_forward_padded.1} parent=306 // loop_footer
        %s477 = sadd.s32 1, %s473
      $region313: #{word_att_forward_padded.1} parent=306 // loop_footer_branch
        %472 = sbr.rel target = $region309
      $region314: #{word_att_forward_padded.1} parent=306 // loop_exit
        _
    $region307: #{word_att_forward_padded.1} parent=1 // pred_fallthru
      _
    // Predicated region
    $region326: #{word_att_forward_padded.1} parent=1 // pred_check
      _
    $region327: #{word_att_forward_padded.1} parent=1 // pred_check_branch
      %505 = sbr.rel (0) target = $region329
    $region328: #{word_att_forward_padded.1} parent=1 // pred_region
      %506 = vsyncadd [#allocation3], 16
    $region329: #{word_att_forward_padded.1} parent=1 // pred_fallthru
      _
    %s507 = sld [smem:[#allocation4 + $0xa]]
    %s508 = scalar_lea.vmem %s1, %s507
    %s509 = scalar_lea.vmem [#allocation2], 10
    %p511 = scmp.lt.u32.totalorder 1, 8
    %p512 = pneg %p511
    // Predicated region
    $region330: #{word_att_forward_padded.1} parent=1 // pred_check
      _
    $region331: #{word_att_forward_padded.1} parent=1 // pred_check_branch
      %514 = sbr.rel (%p511) target = $region333
    $region332: #{word_att_forward_padded.1} parent=1 // pred_region
      %s529 = sand.u32 1, 7
      %p530 = scmp.eq.s32.totalorder %s529, 0
      %p531 = pneg %p530
      // Predicated region
      $region345: #{word_att_forward_padded.1} parent=332 // pred_check
        _
      $region346: #{word_att_forward_padded.1} parent=332 // pred_check_branch
        %533 = sbr.rel (%p530) target = $region348
      $region347: #{word_att_forward_padded.1} parent=332 // pred_region
        %s534 = sand.u32 1, 7
        %s535 = ssub.s32 1, %s534
        %s536 = scalar_lea.vmem %s508, %s535
        %s537 = ssub.s32 1, %s534
        %s538 = scalar_lea.vmem %s509, %s537 [#allocation2]
        %s539 = sshllo.u32 0, %s534
        loop: start=0, step=1, limit=1
        $region349: #{word_att_forward_padded.1} parent=347 // loop_pre_header
          _
        $region350: #{word_att_forward_padded.1} parent=347 // loop_header
          %s541 = sphi 0, %s545
          %p542 = scmp.ge.s32.totalorder %s541, 1
          %s546 = sphi %s536, %s536
          %s547 = sphi %s538, %s538
        $region351: #{word_att_forward_padded.1} parent=347 // loop_header_branch
          %544 = sbr.rel (%p542) target = $region355
        $region352: #{word_att_forward_padded.1} parent=347 // loop_body
          %v548 = vld [vmem:[%s546] sm:%s539]
          %549 = vst [vmem:[%s547] sm:%s539] %v548
        $region353: #{word_att_forward_padded.1} parent=347 // loop_footer
          %s545 = sadd.s32 1, %s541
        $region354: #{word_att_forward_padded.1} parent=347 // loop_footer_branch
          %540 = sbr.rel target = $region350
        $region355: #{word_att_forward_padded.1} parent=347 // loop_exit
          _
      $region348: #{word_att_forward_padded.1} parent=332 // pred_fallthru
        _
    $region333: #{word_att_forward_padded.1} parent=1 // pred_fallthru
      _
    // Predicated region
    $region334: #{word_att_forward_padded.1} parent=1 // pred_check
      %p515 = pneg %p511
    $region335: #{word_att_forward_padded.1} parent=1 // pred_check_branch
      %517 = sbr.rel (%p515) target = $region337
    $region336: #{word_att_forward_padded.1} parent=1 // pred_region
      %s518 = sshllo.u32 0, 1
      loop: start=0, step=1, limit=1
      $region338: #{word_att_forward_padded.1} parent=336 // loop_pre_header
        _
      $region339: #{word_att_forward_padded.1} parent=336 // loop_header
        %s520 = sphi 0, %s524
        %p521 = scmp.ge.s32.totalorder %s520, 1
        %s525 = sphi %s508, %s508
        %s526 = sphi %s509, %s509
      $region340: #{word_att_forward_padded.1} parent=336 // loop_header_branch
        %523 = sbr.rel (%p521) target = $region344
      $region341: #{word_att_forward_padded.1} parent=336 // loop_body
        %v527 = vld [vmem:[%s525] sm:%s518]
        %528 = vst [vmem:[%s526] sm:%s518] %v527
      $region342: #{word_att_forward_padded.1} parent=336 // loop_footer
        %s524 = sadd.s32 1, %s520
      $region343: #{word_att_forward_padded.1} parent=336 // loop_footer_branch
        %519 = sbr.rel target = $region339
      $region344: #{word_att_forward_padded.1} parent=336 // loop_exit
        _
    $region337: #{word_att_forward_padded.1} parent=1 // pred_fallthru
      _
    // Predicated region
    $region356: #{word_att_forward_padded.1} parent=1 // pred_check
      _
    $region357: #{word_att_forward_padded.1} parent=1 // pred_check_branch
      %552 = sbr.rel (0) target = $region359
    $region358: #{word_att_forward_padded.1} parent=1 // pred_region
      %553 = vsyncadd [#allocation3], 16
    $region359: #{word_att_forward_padded.1} parent=1 // pred_fallthru
      _
    %s554 = sld [smem:[#allocation4 + $0xb]]
    %s555 = scalar_lea.vmem %s1, %s554
    %s556 = scalar_lea.vmem [#allocation2], 11
    %p558 = scmp.lt.u32.totalorder 1, 8
    %p559 = pneg %p558
    // Predicated region
    $region360: #{word_att_forward_padded.1} parent=1 // pred_check
      _
    $region361: #{word_att_forward_padded.1} parent=1 // pred_check_branch
      %561 = sbr.rel (%p558) target = $region363
    $region362: #{word_att_forward_padded.1} parent=1 // pred_region
      %s576 = sand.u32 1, 7
      %p577 = scmp.eq.s32.totalorder %s576, 0
      %p578 = pneg %p577
      // Predicated region
      $region375: #{word_att_forward_padded.1} parent=362 // pred_check
        _
      $region376: #{word_att_forward_padded.1} parent=362 // pred_check_branch
        %580 = sbr.rel (%p577) target = $region378
      $region377: #{word_att_forward_padded.1} parent=362 // pred_region
        %s581 = sand.u32 1, 7
        %s582 = ssub.s32 1, %s581
        %s583 = scalar_lea.vmem %s555, %s582
        %s584 = ssub.s32 1, %s581
        %s585 = scalar_lea.vmem %s556, %s584 [#allocation2]
        %s586 = sshllo.u32 0, %s581
        loop: start=0, step=1, limit=1
        $region379: #{word_att_forward_padded.1} parent=377 // loop_pre_header
          _
        $region380: #{word_att_forward_padded.1} parent=377 // loop_header
          %s588 = sphi 0, %s592
          %p589 = scmp.ge.s32.totalorder %s588, 1
          %s593 = sphi %s583, %s583
          %s594 = sphi %s585, %s585
        $region381: #{word_att_forward_padded.1} parent=377 // loop_header_branch
          %591 = sbr.rel (%p589) target = $region385
        $region382: #{word_att_forward_padded.1} parent=377 // loop_body
          %v595 = vld [vmem:[%s593] sm:%s586]
          %596 = vst [vmem:[%s594] sm:%s586] %v595
        $region383: #{word_att_forward_padded.1} parent=377 // loop_footer
          %s592 = sadd.s32 1, %s588
        $region384: #{word_att_forward_padded.1} parent=377 // loop_footer_branch
          %587 = sbr.rel target = $region380
        $region385: #{word_att_forward_padded.1} parent=377 // loop_exit
          _
      $region378: #{word_att_forward_padded.1} parent=362 // pred_fallthru
        _
    $region363: #{word_att_forward_padded.1} parent=1 // pred_fallthru
      _
    // Predicated region
    $region364: #{word_att_forward_padded.1} parent=1 // pred_check
      %p562 = pneg %p558
    $region365: #{word_att_forward_padded.1} parent=1 // pred_check_branch
      %564 = sbr.rel (%p562) target = $region367
    $region366: #{word_att_forward_padded.1} parent=1 // pred_region
      %s565 = sshllo.u32 0, 1
      loop: start=0, step=1, limit=1
      $region368: #{word_att_forward_padded.1} parent=366 // loop_pre_header
        _
      $region369: #{word_att_forward_padded.1} parent=366 // loop_header
        %s567 = sphi 0, %s571
        %p568 = scmp.ge.s32.totalorder %s567, 1
        %s572 = sphi %s555, %s555
        %s573 = sphi %s556, %s556
      $region370: #{word_att_forward_padded.1} parent=366 // loop_header_branch
        %570 = sbr.rel (%p568) target = $region374
      $region371: #{word_att_forward_padded.1} parent=366 // loop_body
        %v574 = vld [vmem:[%s572] sm:%s565]
        %575 = vst [vmem:[%s573] sm:%s565] %v574
      $region372: #{word_att_forward_padded.1} parent=366 // loop_footer
        %s571 = sadd.s32 1, %s567
      $region373: #{word_att_forward_padded.1} parent=366 // loop_footer_branch
        %566 = sbr.rel target = $region369
      $region374: #{word_att_forward_padded.1} parent=366 // loop_exit
        _
    $region367: #{word_att_forward_padded.1} parent=1 // pred_fallthru
      _
    // Predicated region
    $region386: #{word_att_forward_padded.1} parent=1 // pred_check
      _
    $region387: #{word_att_forward_padded.1} parent=1 // pred_check_branch
      %599 = sbr.rel (0) target = $region389
    $region388: #{word_att_forward_padded.1} parent=1 // pred_region
      %600 = vsyncadd [#allocation3], 16
    $region389: #{word_att_forward_padded.1} parent=1 // pred_fallthru
      _
    %s601 = sld [smem:[#allocation4 + $0xc]]
    %s602 = scalar_lea.vmem %s1, %s601
    %s603 = scalar_lea.vmem [#allocation2], 12
    %p605 = scmp.lt.u32.totalorder 1, 8
    %p606 = pneg %p605
    // Predicated region
    $region390: #{word_att_forward_padded.1} parent=1 // pred_check
      _
    $region391: #{word_att_forward_padded.1} parent=1 // pred_check_branch
      %608 = sbr.rel (%p605) target = $region393
    $region392: #{word_att_forward_padded.1} parent=1 // pred_region
      %s623 = sand.u32 1, 7
      %p624 = scmp.eq.s32.totalorder %s623, 0
      %p625 = pneg %p624
      // Predicated region
      $region405: #{word_att_forward_padded.1} parent=392 // pred_check
        _
      $region406: #{word_att_forward_padded.1} parent=392 // pred_check_branch
        %627 = sbr.rel (%p624) target = $region408
      $region407: #{word_att_forward_padded.1} parent=392 // pred_region
        %s628 = sand.u32 1, 7
        %s629 = ssub.s32 1, %s628
        %s630 = scalar_lea.vmem %s602, %s629
        %s631 = ssub.s32 1, %s628
        %s632 = scalar_lea.vmem %s603, %s631 [#allocation2]
        %s633 = sshllo.u32 0, %s628
        loop: start=0, step=1, limit=1
        $region409: #{word_att_forward_padded.1} parent=407 // loop_pre_header
          _
        $region410: #{word_att_forward_padded.1} parent=407 // loop_header
          %s635 = sphi 0, %s639
          %p636 = scmp.ge.s32.totalorder %s635, 1
          %s640 = sphi %s630, %s630
          %s641 = sphi %s632, %s632
        $region411: #{word_att_forward_padded.1} parent=407 // loop_header_branch
          %638 = sbr.rel (%p636) target = $region415
        $region412: #{word_att_forward_padded.1} parent=407 // loop_body
          %v642 = vld [vmem:[%s640] sm:%s633]
          %643 = vst [vmem:[%s641] sm:%s633] %v642
        $region413: #{word_att_forward_padded.1} parent=407 // loop_footer
          %s639 = sadd.s32 1, %s635
        $region414: #{word_att_forward_padded.1} parent=407 // loop_footer_branch
          %634 = sbr.rel target = $region410
        $region415: #{word_att_forward_padded.1} parent=407 // loop_exit
          _
      $region408: #{word_att_forward_padded.1} parent=392 // pred_fallthru
        _
    $region393: #{word_att_forward_padded.1} parent=1 // pred_fallthru
      _
    // Predicated region
    $region394: #{word_att_forward_padded.1} parent=1 // pred_check
      %p609 = pneg %p605
    $region395: #{word_att_forward_padded.1} parent=1 // pred_check_branch
      %611 = sbr.rel (%p609) target = $region397
    $region396: #{word_att_forward_padded.1} parent=1 // pred_region
      %s612 = sshllo.u32 0, 1
      loop: start=0, step=1, limit=1
      $region398: #{word_att_forward_padded.1} parent=396 // loop_pre_header
        _
      $region399: #{word_att_forward_padded.1} parent=396 // loop_header
        %s614 = sphi 0, %s618
        %p615 = scmp.ge.s32.totalorder %s614, 1
        %s619 = sphi %s602, %s602
        %s620 = sphi %s603, %s603
      $region400: #{word_att_forward_padded.1} parent=396 // loop_header_branch
        %617 = sbr.rel (%p615) target = $region404
      $region401: #{word_att_forward_padded.1} parent=396 // loop_body
        %v621 = vld [vmem:[%s619] sm:%s612]
        %622 = vst [vmem:[%s620] sm:%s612] %v621
      $region402: #{word_att_forward_padded.1} parent=396 // loop_footer
        %s618 = sadd.s32 1, %s614
      $region403: #{word_att_forward_padded.1} parent=396 // loop_footer_branch
        %613 = sbr.rel target = $region399
      $region404: #{word_att_forward_padded.1} parent=396 // loop_exit
        _
    $region397: #{word_att_forward_padded.1} parent=1 // pred_fallthru
      _
    // Predicated region
    $region416: #{word_att_forward_padded.1} parent=1 // pred_check
      _
    $region417: #{word_att_forward_padded.1} parent=1 // pred_check_branch
      %646 = sbr.rel (0) target = $region419
    $region418: #{word_att_forward_padded.1} parent=1 // pred_region
      %647 = vsyncadd [#allocation3], 16
    $region419: #{word_att_forward_padded.1} parent=1 // pred_fallthru
      _
    %s648 = sld [smem:[#allocation4 + $0xd]]
    %s649 = scalar_lea.vmem %s1, %s648
    %s650 = scalar_lea.vmem [#allocation2], 13
    %p652 = scmp.lt.u32.totalorder 1, 8
    %p653 = pneg %p652
    // Predicated region
    $region420: #{word_att_forward_padded.1} parent=1 // pred_check
      _
    $region421: #{word_att_forward_padded.1} parent=1 // pred_check_branch
      %655 = sbr.rel (%p652) target = $region423
    $region422: #{word_att_forward_padded.1} parent=1 // pred_region
      %s670 = sand.u32 1, 7
      %p671 = scmp.eq.s32.totalorder %s670, 0
      %p672 = pneg %p671
      // Predicated region
      $region435: #{word_att_forward_padded.1} parent=422 // pred_check
        _
      $region436: #{word_att_forward_padded.1} parent=422 // pred_check_branch
        %674 = sbr.rel (%p671) target = $region438
      $region437: #{word_att_forward_padded.1} parent=422 // pred_region
        %s675 = sand.u32 1, 7
        %s676 = ssub.s32 1, %s675
        %s677 = scalar_lea.vmem %s649, %s676
        %s678 = ssub.s32 1, %s675
        %s679 = scalar_lea.vmem %s650, %s678 [#allocation2]
        %s680 = sshllo.u32 0, %s675
        loop: start=0, step=1, limit=1
        $region439: #{word_att_forward_padded.1} parent=437 // loop_pre_header
          _
        $region440: #{word_att_forward_padded.1} parent=437 // loop_header
          %s682 = sphi 0, %s686
          %p683 = scmp.ge.s32.totalorder %s682, 1
          %s687 = sphi %s677, %s677
          %s688 = sphi %s679, %s679
        $region441: #{word_att_forward_padded.1} parent=437 // loop_header_branch
          %685 = sbr.rel (%p683) target = $region445
        $region442: #{word_att_forward_padded.1} parent=437 // loop_body
          %v689 = vld [vmem:[%s687] sm:%s680]
          %690 = vst [vmem:[%s688] sm:%s680] %v689
        $region443: #{word_att_forward_padded.1} parent=437 // loop_footer
          %s686 = sadd.s32 1, %s682
        $region444: #{word_att_forward_padded.1} parent=437 // loop_footer_branch
          %681 = sbr.rel target = $region440
        $region445: #{word_att_forward_padded.1} parent=437 // loop_exit
          _
      $region438: #{word_att_forward_padded.1} parent=422 // pred_fallthru
        _
    $region423: #{word_att_forward_padded.1} parent=1 // pred_fallthru
      _
    // Predicated region
    $region424: #{word_att_forward_padded.1} parent=1 // pred_check
      %p656 = pneg %p652
    $region425: #{word_att_forward_padded.1} parent=1 // pred_check_branch
      %658 = sbr.rel (%p656) target = $region427
    $region426: #{word_att_forward_padded.1} parent=1 // pred_region
      %s659 = sshllo.u32 0, 1
      loop: start=0, step=1, limit=1
      $region428: #{word_att_forward_padded.1} parent=426 // loop_pre_header
        _
      $region429: #{word_att_forward_padded.1} parent=426 // loop_header
        %s661 = sphi 0, %s665
        %p662 = scmp.ge.s32.totalorder %s661, 1
        %s666 = sphi %s649, %s649
        %s667 = sphi %s650, %s650
      $region430: #{word_att_forward_padded.1} parent=426 // loop_header_branch
        %664 = sbr.rel (%p662) target = $region434
      $region431: #{word_att_forward_padded.1} parent=426 // loop_body
        %v668 = vld [vmem:[%s666] sm:%s659]
        %669 = vst [vmem:[%s667] sm:%s659] %v668
      $region432: #{word_att_forward_padded.1} parent=426 // loop_footer
        %s665 = sadd.s32 1, %s661
      $region433: #{word_att_forward_padded.1} parent=426 // loop_footer_branch
        %660 = sbr.rel target = $region429
      $region434: #{word_att_forward_padded.1} parent=426 // loop_exit
        _
    $region427: #{word_att_forward_padded.1} parent=1 // pred_fallthru
      _
    // Predicated region
    $region446: #{word_att_forward_padded.1} parent=1 // pred_check
      _
    $region447: #{word_att_forward_padded.1} parent=1 // pred_check_branch
      %693 = sbr.rel (0) target = $region449
    $region448: #{word_att_forward_padded.1} parent=1 // pred_region
      %694 = vsyncadd [#allocation3], 16
    $region449: #{word_att_forward_padded.1} parent=1 // pred_fallthru
      _
    %s695 = sld [smem:[#allocation4 + $0xe]]
    %s696 = scalar_lea.vmem %s1, %s695
    %s697 = scalar_lea.vmem [#allocation2], 14
    %p699 = scmp.lt.u32.totalorder 1, 8
    %p700 = pneg %p699
    // Predicated region
    $region450: #{word_att_forward_padded.1} parent=1 // pred_check
      _
    $region451: #{word_att_forward_padded.1} parent=1 // pred_check_branch
      %702 = sbr.rel (%p699) target = $region453
    $region452: #{word_att_forward_padded.1} parent=1 // pred_region
      %s717 = sand.u32 1, 7
      %p718 = scmp.eq.s32.totalorder %s717, 0
      %p719 = pneg %p718
      // Predicated region
      $region465: #{word_att_forward_padded.1} parent=452 // pred_check
        _
      $region466: #{word_att_forward_padded.1} parent=452 // pred_check_branch
        %721 = sbr.rel (%p718) target = $region468
      $region467: #{word_att_forward_padded.1} parent=452 // pred_region
        %s722 = sand.u32 1, 7
        %s723 = ssub.s32 1, %s722
        %s724 = scalar_lea.vmem %s696, %s723
        %s725 = ssub.s32 1, %s722
        %s726 = scalar_lea.vmem %s697, %s725 [#allocation2]
        %s727 = sshllo.u32 0, %s722
        loop: start=0, step=1, limit=1
        $region469: #{word_att_forward_padded.1} parent=467 // loop_pre_header
          _
        $region470: #{word_att_forward_padded.1} parent=467 // loop_header
          %s729 = sphi 0, %s733
          %p730 = scmp.ge.s32.totalorder %s729, 1
          %s734 = sphi %s724, %s724
          %s735 = sphi %s726, %s726
        $region471: #{word_att_forward_padded.1} parent=467 // loop_header_branch
          %732 = sbr.rel (%p730) target = $region475
        $region472: #{word_att_forward_padded.1} parent=467 // loop_body
          %v736 = vld [vmem:[%s734] sm:%s727]
          %737 = vst [vmem:[%s735] sm:%s727] %v736
        $region473: #{word_att_forward_padded.1} parent=467 // loop_footer
          %s733 = sadd.s32 1, %s729
        $region474: #{word_att_forward_padded.1} parent=467 // loop_footer_branch
          %728 = sbr.rel target = $region470
        $region475: #{word_att_forward_padded.1} parent=467 // loop_exit
          _
      $region468: #{word_att_forward_padded.1} parent=452 // pred_fallthru
        _
    $region453: #{word_att_forward_padded.1} parent=1 // pred_fallthru
      _
    // Predicated region
    $region454: #{word_att_forward_padded.1} parent=1 // pred_check
      %p703 = pneg %p699
    $region455: #{word_att_forward_padded.1} parent=1 // pred_check_branch
      %705 = sbr.rel (%p703) target = $region457
    $region456: #{word_att_forward_padded.1} parent=1 // pred_region
      %s706 = sshllo.u32 0, 1
      loop: start=0, step=1, limit=1
      $region458: #{word_att_forward_padded.1} parent=456 // loop_pre_header
        _
      $region459: #{word_att_forward_padded.1} parent=456 // loop_header
        %s708 = sphi 0, %s712
        %p709 = scmp.ge.s32.totalorder %s708, 1
        %s713 = sphi %s696, %s696
        %s714 = sphi %s697, %s697
      $region460: #{word_att_forward_padded.1} parent=456 // loop_header_branch
        %711 = sbr.rel (%p709) target = $region464
      $region461: #{word_att_forward_padded.1} parent=456 // loop_body
        %v715 = vld [vmem:[%s713] sm:%s706]
        %716 = vst [vmem:[%s714] sm:%s706] %v715
      $region462: #{word_att_forward_padded.1} parent=456 // loop_footer
        %s712 = sadd.s32 1, %s708
      $region463: #{word_att_forward_padded.1} parent=456 // loop_footer_branch
        %707 = sbr.rel target = $region459
      $region464: #{word_att_forward_padded.1} parent=456 // loop_exit
        _
    $region457: #{word_att_forward_padded.1} parent=1 // pred_fallthru
      _
    // Predicated region
    $region476: #{word_att_forward_padded.1} parent=1 // pred_check
      _
    $region477: #{word_att_forward_padded.1} parent=1 // pred_check_branch
      %740 = sbr.rel (0) target = $region479
    $region478: #{word_att_forward_padded.1} parent=1 // pred_region
      %741 = vsyncadd [#allocation3], 16
    $region479: #{word_att_forward_padded.1} parent=1 // pred_fallthru
      _
    %s742 = sld [smem:[#allocation4 + $0xf]]
    %s743 = scalar_lea.vmem %s1, %s742
    %s744 = scalar_lea.vmem [#allocation2], 15
    %p746 = scmp.lt.u32.totalorder 1, 8
    %p747 = pneg %p746
    // Predicated region
    $region480: #{word_att_forward_padded.1} parent=1 // pred_check
      _
    $region481: #{word_att_forward_padded.1} parent=1 // pred_check_branch
      %749 = sbr.rel (%p746) target = $region483
    $region482: #{word_att_forward_padded.1} parent=1 // pred_region
      %s764 = sand.u32 1, 7
      %p765 = scmp.eq.s32.totalorder %s764, 0
      %p766 = pneg %p765
      // Predicated region
      $region495: #{word_att_forward_padded.1} parent=482 // pred_check
        _
      $region496: #{word_att_forward_padded.1} parent=482 // pred_check_branch
        %768 = sbr.rel (%p765) target = $region498
      $region497: #{word_att_forward_padded.1} parent=482 // pred_region
        %s769 = sand.u32 1, 7
        %s770 = ssub.s32 1, %s769
        %s771 = scalar_lea.vmem %s743, %s770
        %s772 = ssub.s32 1, %s769
        %s773 = scalar_lea.vmem %s744, %s772 [#allocation2]
        %s774 = sshllo.u32 0, %s769
        loop: start=0, step=1, limit=1
        $region499: #{word_att_forward_padded.1} parent=497 // loop_pre_header
          _
        $region500: #{word_att_forward_padded.1} parent=497 // loop_header
          %s776 = sphi 0, %s780
          %p777 = scmp.ge.s32.totalorder %s776, 1
          %s781 = sphi %s771, %s771
          %s782 = sphi %s773, %s773
        $region501: #{word_att_forward_padded.1} parent=497 // loop_header_branch
          %779 = sbr.rel (%p777) target = $region505
        $region502: #{word_att_forward_padded.1} parent=497 // loop_body
          %v783 = vld [vmem:[%s781] sm:%s774]
          %784 = vst [vmem:[%s782] sm:%s774] %v783
        $region503: #{word_att_forward_padded.1} parent=497 // loop_footer
          %s780 = sadd.s32 1, %s776
        $region504: #{word_att_forward_padded.1} parent=497 // loop_footer_branch
          %775 = sbr.rel target = $region500
        $region505: #{word_att_forward_padded.1} parent=497 // loop_exit
          _
      $region498: #{word_att_forward_padded.1} parent=482 // pred_fallthru
        _
    $region483: #{word_att_forward_padded.1} parent=1 // pred_fallthru
      _
    // Predicated region
    $region484: #{word_att_forward_padded.1} parent=1 // pred_check
      %p750 = pneg %p746
    $region485: #{word_att_forward_padded.1} parent=1 // pred_check_branch
      %752 = sbr.rel (%p750) target = $region487
    $region486: #{word_att_forward_padded.1} parent=1 // pred_region
      %s753 = sshllo.u32 0, 1
      loop: start=0, step=1, limit=1
      $region488: #{word_att_forward_padded.1} parent=486 // loop_pre_header
        _
      $region489: #{word_att_forward_padded.1} parent=486 // loop_header
        %s755 = sphi 0, %s759
        %p756 = scmp.ge.s32.totalorder %s755, 1
        %s760 = sphi %s743, %s743
        %s761 = sphi %s744, %s744
      $region490: #{word_att_forward_padded.1} parent=486 // loop_header_branch
        %758 = sbr.rel (%p756) target = $region494
      $region491: #{word_att_forward_padded.1} parent=486 // loop_body
        %v762 = vld [vmem:[%s760] sm:%s753]
        %763 = vst [vmem:[%s761] sm:%s753] %v762
      $region492: #{word_att_forward_padded.1} parent=486 // loop_footer
        %s759 = sadd.s32 1, %s755
      $region493: #{word_att_forward_padded.1} parent=486 // loop_footer_branch
        %754 = sbr.rel target = $region489
      $region494: #{word_att_forward_padded.1} parent=486 // loop_exit
        _
    $region487: #{word_att_forward_padded.1} parent=1 // pred_fallthru
      _
    // Predicated region
    $region506: #{word_att_forward_padded.1} parent=1 // pred_check
      _
    $region507: #{word_att_forward_padded.1} parent=1 // pred_check_branch
      %787 = sbr.rel (0) target = $region509
    $region508: #{word_att_forward_padded.1} parent=1 // pred_region
      %788 = vsyncadd [#allocation3], 16
    $region509: #{word_att_forward_padded.1} parent=1 // pred_fallthru
      _
    %s789 = sld [smem:[#allocation4 + $0x10]]
    %s790 = scalar_lea.vmem %s1, %s789
    %s791 = scalar_lea.vmem [#allocation2], 16
    %p793 = scmp.lt.u32.totalorder 1, 8
    %p794 = pneg %p793
    // Predicated region
    $region510: #{word_att_forward_padded.1} parent=1 // pred_check
      _
    $region511: #{word_att_forward_padded.1} parent=1 // pred_check_branch
      %796 = sbr.rel (%p793) target = $region513
    $region512: #{word_att_forward_padded.1} parent=1 // pred_region
      %s811 = sand.u32 1, 7
      %p812 = scmp.eq.s32.totalorder %s811, 0
      %p813 = pneg %p812
      // Predicated region
      $region525: #{word_att_forward_padded.1} parent=512 // pred_check
        _
      $region526: #{word_att_forward_padded.1} parent=512 // pred_check_branch
        %815 = sbr.rel (%p812) target = $region528
      $region527: #{word_att_forward_padded.1} parent=512 // pred_region
        %s816 = sand.u32 1, 7
        %s817 = ssub.s32 1, %s816
        %s818 = scalar_lea.vmem %s790, %s817
        %s819 = ssub.s32 1, %s816
        %s820 = scalar_lea.vmem %s791, %s819 [#allocation2]
        %s821 = sshllo.u32 0, %s816
        loop: start=0, step=1, limit=1
        $region529: #{word_att_forward_padded.1} parent=527 // loop_pre_header
          _
        $region530: #{word_att_forward_padded.1} parent=527 // loop_header
          %s823 = sphi 0, %s827
          %p824 = scmp.ge.s32.totalorder %s823, 1
          %s828 = sphi %s818, %s818
          %s829 = sphi %s820, %s820
        $region531: #{word_att_forward_padded.1} parent=527 // loop_header_branch
          %826 = sbr.rel (%p824) target = $region535
        $region532: #{word_att_forward_padded.1} parent=527 // loop_body
          %v830 = vld [vmem:[%s828] sm:%s821]
          %831 = vst [vmem:[%s829] sm:%s821] %v830
        $region533: #{word_att_forward_padded.1} parent=527 // loop_footer
          %s827 = sadd.s32 1, %s823
        $region534: #{word_att_forward_padded.1} parent=527 // loop_footer_branch
          %822 = sbr.rel target = $region530
        $region535: #{word_att_forward_padded.1} parent=527 // loop_exit
          _
      $region528: #{word_att_forward_padded.1} parent=512 // pred_fallthru
        _
    $region513: #{word_att_forward_padded.1} parent=1 // pred_fallthru
      _
    // Predicated region
    $region514: #{word_att_forward_padded.1} parent=1 // pred_check
      %p797 = pneg %p793
    $region515: #{word_att_forward_padded.1} parent=1 // pred_check_branch
      %799 = sbr.rel (%p797) target = $region517
    $region516: #{word_att_forward_padded.1} parent=1 // pred_region
      %s800 = sshllo.u32 0, 1
      loop: start=0, step=1, limit=1
      $region518: #{word_att_forward_padded.1} parent=516 // loop_pre_header
        _
      $region519: #{word_att_forward_padded.1} parent=516 // loop_header
        %s802 = sphi 0, %s806
        %p803 = scmp.ge.s32.totalorder %s802, 1
        %s807 = sphi %s790, %s790
        %s808 = sphi %s791, %s791
      $region520: #{word_att_forward_padded.1} parent=516 // loop_header_branch
        %805 = sbr.rel (%p803) target = $region524
      $region521: #{word_att_forward_padded.1} parent=516 // loop_body
        %v809 = vld [vmem:[%s807] sm:%s800]
        %810 = vst [vmem:[%s808] sm:%s800] %v809
      $region522: #{word_att_forward_padded.1} parent=516 // loop_footer
        %s806 = sadd.s32 1, %s802
      $region523: #{word_att_forward_padded.1} parent=516 // loop_footer_branch
        %801 = sbr.rel target = $region519
      $region524: #{word_att_forward_padded.1} parent=516 // loop_exit
        _
    $region517: #{word_att_forward_padded.1} parent=1 // pred_fallthru
      _
    // Predicated region
    $region536: #{word_att_forward_padded.1} parent=1 // pred_check
      _
    $region537: #{word_att_forward_padded.1} parent=1 // pred_check_branch
      %834 = sbr.rel (0) target = $region539
    $region538: #{word_att_forward_padded.1} parent=1 // pred_region
      %835 = vsyncadd [#allocation3], 16
    $region539: #{word_att_forward_padded.1} parent=1 // pred_fallthru
      _
    %s836 = sld [smem:[#allocation4 + $0x11]]
    %s837 = scalar_lea.vmem %s1, %s836
    %s838 = scalar_lea.vmem [#allocation2], 17
    %p840 = scmp.lt.u32.totalorder 1, 8
    %p841 = pneg %p840
    // Predicated region
    $region540: #{word_att_forward_padded.1} parent=1 // pred_check
      _
    $region541: #{word_att_forward_padded.1} parent=1 // pred_check_branch
      %843 = sbr.rel (%p840) target = $region543
    $region542: #{word_att_forward_padded.1} parent=1 // pred_region
      %s858 = sand.u32 1, 7
      %p859 = scmp.eq.s32.totalorder %s858, 0
      %p860 = pneg %p859
      // Predicated region
      $region555: #{word_att_forward_padded.1} parent=542 // pred_check
        _
      $region556: #{word_att_forward_padded.1} parent=542 // pred_check_branch
        %862 = sbr.rel (%p859) target = $region558
      $region557: #{word_att_forward_padded.1} parent=542 // pred_region
        %s863 = sand.u32 1, 7
        %s864 = ssub.s32 1, %s863
        %s865 = scalar_lea.vmem %s837, %s864
        %s866 = ssub.s32 1, %s863
        %s867 = scalar_lea.vmem %s838, %s866 [#allocation2]
        %s868 = sshllo.u32 0, %s863
        loop: start=0, step=1, limit=1
        $region559: #{word_att_forward_padded.1} parent=557 // loop_pre_header
          _
        $region560: #{word_att_forward_padded.1} parent=557 // loop_header
          %s870 = sphi 0, %s874
          %p871 = scmp.ge.s32.totalorder %s870, 1
          %s875 = sphi %s865, %s865
          %s876 = sphi %s867, %s867
        $region561: #{word_att_forward_padded.1} parent=557 // loop_header_branch
          %873 = sbr.rel (%p871) target = $region565
        $region562: #{word_att_forward_padded.1} parent=557 // loop_body
          %v877 = vld [vmem:[%s875] sm:%s868]
          %878 = vst [vmem:[%s876] sm:%s868] %v877
        $region563: #{word_att_forward_padded.1} parent=557 // loop_footer
          %s874 = sadd.s32 1, %s870
        $region564: #{word_att_forward_padded.1} parent=557 // loop_footer_branch
          %869 = sbr.rel target = $region560
        $region565: #{word_att_forward_padded.1} parent=557 // loop_exit
          _
      $region558: #{word_att_forward_padded.1} parent=542 // pred_fallthru
        _
    $region543: #{word_att_forward_padded.1} parent=1 // pred_fallthru
      _
    // Predicated region
    $region544: #{word_att_forward_padded.1} parent=1 // pred_check
      %p844 = pneg %p840
    $region545: #{word_att_forward_padded.1} parent=1 // pred_check_branch
      %846 = sbr.rel (%p844) target = $region547
    $region546: #{word_att_forward_padded.1} parent=1 // pred_region
      %s847 = sshllo.u32 0, 1
      loop: start=0, step=1, limit=1
      $region548: #{word_att_forward_padded.1} parent=546 // loop_pre_header
        _
      $region549: #{word_att_forward_padded.1} parent=546 // loop_header
        %s849 = sphi 0, %s853
        %p850 = scmp.ge.s32.totalorder %s849, 1
        %s854 = sphi %s837, %s837
        %s855 = sphi %s838, %s838
      $region550: #{word_att_forward_padded.1} parent=546 // loop_header_branch
        %852 = sbr.rel (%p850) target = $region554
      $region551: #{word_att_forward_padded.1} parent=546 // loop_body
        %v856 = vld [vmem:[%s854] sm:%s847]
        %857 = vst [vmem:[%s855] sm:%s847] %v856
      $region552: #{word_att_forward_padded.1} parent=546 // loop_footer
        %s853 = sadd.s32 1, %s849
      $region553: #{word_att_forward_padded.1} parent=546 // loop_footer_branch
        %848 = sbr.rel target = $region549
      $region554: #{word_att_forward_padded.1} parent=546 // loop_exit
        _
    $region547: #{word_att_forward_padded.1} parent=1 // pred_fallthru
      _
    // Predicated region
    $region566: #{word_att_forward_padded.1} parent=1 // pred_check
      _
    $region567: #{word_att_forward_padded.1} parent=1 // pred_check_branch
      %881 = sbr.rel (0) target = $region569
    $region568: #{word_att_forward_padded.1} parent=1 // pred_region
      %882 = vsyncadd [#allocation3], 16
    $region569: #{word_att_forward_padded.1} parent=1 // pred_fallthru
      _
    %s883 = sld [smem:[#allocation4 + $0x12]]
    %s884 = scalar_lea.vmem %s1, %s883
    %s885 = scalar_lea.vmem [#allocation2], 18
    %p887 = scmp.lt.u32.totalorder 1, 8
    %p888 = pneg %p887
    // Predicated region
    $region570: #{word_att_forward_padded.1} parent=1 // pred_check
      _
    $region571: #{word_att_forward_padded.1} parent=1 // pred_check_branch
      %890 = sbr.rel (%p887) target = $region573
    $region572: #{word_att_forward_padded.1} parent=1 // pred_region
      %s905 = sand.u32 1, 7
      %p906 = scmp.eq.s32.totalorder %s905, 0
      %p907 = pneg %p906
      // Predicated region
      $region585: #{word_att_forward_padded.1} parent=572 // pred_check
        _
      $region586: #{word_att_forward_padded.1} parent=572 // pred_check_branch
        %909 = sbr.rel (%p906) target = $region588
      $region587: #{word_att_forward_padded.1} parent=572 // pred_region
        %s910 = sand.u32 1, 7
        %s911 = ssub.s32 1, %s910
        %s912 = scalar_lea.vmem %s884, %s911
        %s913 = ssub.s32 1, %s910
        %s914 = scalar_lea.vmem %s885, %s913 [#allocation2]
        %s915 = sshllo.u32 0, %s910
        loop: start=0, step=1, limit=1
        $region589: #{word_att_forward_padded.1} parent=587 // loop_pre_header
          _
        $region590: #{word_att_forward_padded.1} parent=587 // loop_header
          %s917 = sphi 0, %s921
          %p918 = scmp.ge.s32.totalorder %s917, 1
          %s922 = sphi %s912, %s912
          %s923 = sphi %s914, %s914
        $region591: #{word_att_forward_padded.1} parent=587 // loop_header_branch
          %920 = sbr.rel (%p918) target = $region595
        $region592: #{word_att_forward_padded.1} parent=587 // loop_body
          %v924 = vld [vmem:[%s922] sm:%s915]
          %925 = vst [vmem:[%s923] sm:%s915] %v924
        $region593: #{word_att_forward_padded.1} parent=587 // loop_footer
          %s921 = sadd.s32 1, %s917
        $region594: #{word_att_forward_padded.1} parent=587 // loop_footer_branch
          %916 = sbr.rel target = $region590
        $region595: #{word_att_forward_padded.1} parent=587 // loop_exit
          _
      $region588: #{word_att_forward_padded.1} parent=572 // pred_fallthru
        _
    $region573: #{word_att_forward_padded.1} parent=1 // pred_fallthru
      _
    // Predicated region
    $region574: #{word_att_forward_padded.1} parent=1 // pred_check
      %p891 = pneg %p887
    $region575: #{word_att_forward_padded.1} parent=1 // pred_check_branch
      %893 = sbr.rel (%p891) target = $region577
    $region576: #{word_att_forward_padded.1} parent=1 // pred_region
      %s894 = sshllo.u32 0, 1
      loop: start=0, step=1, limit=1
      $region578: #{word_att_forward_padded.1} parent=576 // loop_pre_header
        _
      $region579: #{word_att_forward_padded.1} parent=576 // loop_header
        %s896 = sphi 0, %s900
        %p897 = scmp.ge.s32.totalorder %s896, 1
        %s901 = sphi %s884, %s884
        %s902 = sphi %s885, %s885
      $region580: #{word_att_forward_padded.1} parent=576 // loop_header_branch
        %899 = sbr.rel (%p897) target = $region584
      $region581: #{word_att_forward_padded.1} parent=576 // loop_body
        %v903 = vld [vmem:[%s901] sm:%s894]
        %904 = vst [vmem:[%s902] sm:%s894] %v903
      $region582: #{word_att_forward_padded.1} parent=576 // loop_footer
        %s900 = sadd.s32 1, %s896
      $region583: #{word_att_forward_padded.1} parent=576 // loop_footer_branch
        %895 = sbr.rel target = $region579
      $region584: #{word_att_forward_padded.1} parent=576 // loop_exit
        _
    $region577: #{word_att_forward_padded.1} parent=1 // pred_fallthru
      _
    // Predicated region
    $region596: #{word_att_forward_padded.1} parent=1 // pred_check
      _
    $region597: #{word_att_forward_padded.1} parent=1 // pred_check_branch
      %928 = sbr.rel (0) target = $region599
    $region598: #{word_att_forward_padded.1} parent=1 // pred_region
      %929 = vsyncadd [#allocation3], 16
    $region599: #{word_att_forward_padded.1} parent=1 // pred_fallthru
      _
    %s930 = sld [smem:[#allocation4 + $0x13]]
    %s931 = scalar_lea.vmem %s1, %s930
    %s932 = scalar_lea.vmem [#allocation2], 19
    %p934 = scmp.lt.u32.totalorder 1, 8
    %p935 = pneg %p934
    // Predicated region
    $region600: #{word_att_forward_padded.1} parent=1 // pred_check
      _
    $region601: #{word_att_forward_padded.1} parent=1 // pred_check_branch
      %937 = sbr.rel (%p934) target = $region603
    $region602: #{word_att_forward_padded.1} parent=1 // pred_region
      %s952 = sand.u32 1, 7
      %p953 = scmp.eq.s32.totalorder %s952, 0
      %p954 = pneg %p953
      // Predicated region
      $region615: #{word_att_forward_padded.1} parent=602 // pred_check
        _
      $region616: #{word_att_forward_padded.1} parent=602 // pred_check_branch
        %956 = sbr.rel (%p953) target = $region618
      $region617: #{word_att_forward_padded.1} parent=602 // pred_region
        %s957 = sand.u32 1, 7
        %s958 = ssub.s32 1, %s957
        %s959 = scalar_lea.vmem %s931, %s958
        %s960 = ssub.s32 1, %s957
        %s961 = scalar_lea.vmem %s932, %s960 [#allocation2]
        %s962 = sshllo.u32 0, %s957
        loop: start=0, step=1, limit=1
        $region619: #{word_att_forward_padded.1} parent=617 // loop_pre_header
          _
        $region620: #{word_att_forward_padded.1} parent=617 // loop_header
          %s964 = sphi 0, %s968
          %p965 = scmp.ge.s32.totalorder %s964, 1
          %s969 = sphi %s959, %s959
          %s970 = sphi %s961, %s961
        $region621: #{word_att_forward_padded.1} parent=617 // loop_header_branch
          %967 = sbr.rel (%p965) target = $region625
        $region622: #{word_att_forward_padded.1} parent=617 // loop_body
          %v971 = vld [vmem:[%s969] sm:%s962]
          %972 = vst [vmem:[%s970] sm:%s962] %v971
        $region623: #{word_att_forward_padded.1} parent=617 // loop_footer
          %s968 = sadd.s32 1, %s964
        $region624: #{word_att_forward_padded.1} parent=617 // loop_footer_branch
          %963 = sbr.rel target = $region620
        $region625: #{word_att_forward_padded.1} parent=617 // loop_exit
          _
      $region618: #{word_att_forward_padded.1} parent=602 // pred_fallthru
        _
    $region603: #{word_att_forward_padded.1} parent=1 // pred_fallthru
      _
    // Predicated region
    $region604: #{word_att_forward_padded.1} parent=1 // pred_check
      %p938 = pneg %p934
    $region605: #{word_att_forward_padded.1} parent=1 // pred_check_branch
      %940 = sbr.rel (%p938) target = $region607
    $region606: #{word_att_forward_padded.1} parent=1 // pred_region
      %s941 = sshllo.u32 0, 1
      loop: start=0, step=1, limit=1
      $region608: #{word_att_forward_padded.1} parent=606 // loop_pre_header
        _
      $region609: #{word_att_forward_padded.1} parent=606 // loop_header
        %s943 = sphi 0, %s947
        %p944 = scmp.ge.s32.totalorder %s943, 1
        %s948 = sphi %s931, %s931
        %s949 = sphi %s932, %s932
      $region610: #{word_att_forward_padded.1} parent=606 // loop_header_branch
        %946 = sbr.rel (%p944) target = $region614
      $region611: #{word_att_forward_padded.1} parent=606 // loop_body
        %v950 = vld [vmem:[%s948] sm:%s941]
        %951 = vst [vmem:[%s949] sm:%s941] %v950
      $region612: #{word_att_forward_padded.1} parent=606 // loop_footer
        %s947 = sadd.s32 1, %s943
      $region613: #{word_att_forward_padded.1} parent=606 // loop_footer_branch
        %942 = sbr.rel target = $region609
      $region614: #{word_att_forward_padded.1} parent=606 // loop_exit
        _
    $region607: #{word_att_forward_padded.1} parent=1 // pred_fallthru
      _
    // Predicated region
    $region626: #{word_att_forward_padded.1} parent=1 // pred_check
      _
    $region627: #{word_att_forward_padded.1} parent=1 // pred_check_branch
      %975 = sbr.rel (0) target = $region629
    $region628: #{word_att_forward_padded.1} parent=1 // pred_region
      %976 = vsyncadd [#allocation3], 16
    $region629: #{word_att_forward_padded.1} parent=1 // pred_fallthru
      _
    %s977 = sld [smem:[#allocation4 + $0x14]]
    %s978 = scalar_lea.vmem %s1, %s977
    %s979 = scalar_lea.vmem [#allocation2], 20
    %p981 = scmp.lt.u32.totalorder 1, 8
    %p982 = pneg %p981
    // Predicated region
    $region630: #{word_att_forward_padded.1} parent=1 // pred_check
      _
    $region631: #{word_att_forward_padded.1} parent=1 // pred_check_branch
      %984 = sbr.rel (%p981) target = $region633
    $region632: #{word_att_forward_padded.1} parent=1 // pred_region
      %s999 = sand.u32 1, 7
      %p1000 = scmp.eq.s32.totalorder %s999, 0
      %p1001 = pneg %p1000
      // Predicated region
      $region645: #{word_att_forward_padded.1} parent=632 // pred_check
        _
      $region646: #{word_att_forward_padded.1} parent=632 // pred_check_branch
        %1003 = sbr.rel (%p1000) target = $region648
      $region647: #{word_att_forward_padded.1} parent=632 // pred_region
        %s1004 = sand.u32 1, 7
        %s1005 = ssub.s32 1, %s1004
        %s1006 = scalar_lea.vmem %s978, %s1005
        %s1007 = ssub.s32 1, %s1004
        %s1008 = scalar_lea.vmem %s979, %s1007 [#allocation2]
        %s1009 = sshllo.u32 0, %s1004
        loop: start=0, step=1, limit=1
        $region649: #{word_att_forward_padded.1} parent=647 // loop_pre_header
          _
        $region650: #{word_att_forward_padded.1} parent=647 // loop_header
          %s1011 = sphi 0, %s1015
          %p1012 = scmp.ge.s32.totalorder %s1011, 1
          %s1016 = sphi %s1006, %s1006
          %s1017 = sphi %s1008, %s1008
        $region651: #{word_att_forward_padded.1} parent=647 // loop_header_branch
          %1014 = sbr.rel (%p1012) target = $region655
        $region652: #{word_att_forward_padded.1} parent=647 // loop_body
          %v1018 = vld [vmem:[%s1016] sm:%s1009]
          %1019 = vst [vmem:[%s1017] sm:%s1009] %v1018
        $region653: #{word_att_forward_padded.1} parent=647 // loop_footer
          %s1015 = sadd.s32 1, %s1011
        $region654: #{word_att_forward_padded.1} parent=647 // loop_footer_branch
          %1010 = sbr.rel target = $region650
        $region655: #{word_att_forward_padded.1} parent=647 // loop_exit
          _
      $region648: #{word_att_forward_padded.1} parent=632 // pred_fallthru
        _
    $region633: #{word_att_forward_padded.1} parent=1 // pred_fallthru
      _
    // Predicated region
    $region634: #{word_att_forward_padded.1} parent=1 // pred_check
      %p985 = pneg %p981
    $region635: #{word_att_forward_padded.1} parent=1 // pred_check_branch
      %987 = sbr.rel (%p985) target = $region637
    $region636: #{word_att_forward_padded.1} parent=1 // pred_region
      %s988 = sshllo.u32 0, 1
      loop: start=0, step=1, limit=1
      $region638: #{word_att_forward_padded.1} parent=636 // loop_pre_header
        _
      $region639: #{word_att_forward_padded.1} parent=636 // loop_header
        %s990 = sphi 0, %s994
        %p991 = scmp.ge.s32.totalorder %s990, 1
        %s995 = sphi %s978, %s978
        %s996 = sphi %s979, %s979
      $region640: #{word_att_forward_padded.1} parent=636 // loop_header_branch
        %993 = sbr.rel (%p991) target = $region644
      $region641: #{word_att_forward_padded.1} parent=636 // loop_body
        %v997 = vld [vmem:[%s995] sm:%s988]
        %998 = vst [vmem:[%s996] sm:%s988] %v997
      $region642: #{word_att_forward_padded.1} parent=636 // loop_footer
        %s994 = sadd.s32 1, %s990
      $region643: #{word_att_forward_padded.1} parent=636 // loop_footer_branch
        %989 = sbr.rel target = $region639
      $region644: #{word_att_forward_padded.1} parent=636 // loop_exit
        _
    $region637: #{word_att_forward_padded.1} parent=1 // pred_fallthru
      _
    // Predicated region
    $region656: #{word_att_forward_padded.1} parent=1 // pred_check
      _
    $region657: #{word_att_forward_padded.1} parent=1 // pred_check_branch
      %1022 = sbr.rel (0) target = $region659
    $region658: #{word_att_forward_padded.1} parent=1 // pred_region
      %1023 = vsyncadd [#allocation3], 16
    $region659: #{word_att_forward_padded.1} parent=1 // pred_fallthru
      _
    %s1024 = sld [smem:[#allocation4 + $0x15]]
    %s1025 = scalar_lea.vmem %s1, %s1024
    %s1026 = scalar_lea.vmem [#allocation2], 21
    %p1028 = scmp.lt.u32.totalorder 1, 8
    %p1029 = pneg %p1028
    // Predicated region
    $region660: #{word_att_forward_padded.1} parent=1 // pred_check
      _
    $region661: #{word_att_forward_padded.1} parent=1 // pred_check_branch
      %1031 = sbr.rel (%p1028) target = $region663
    $region662: #{word_att_forward_padded.1} parent=1 // pred_region
      %s1046 = sand.u32 1, 7
      %p1047 = scmp.eq.s32.totalorder %s1046, 0
      %p1048 = pneg %p1047
      // Predicated region
      $region675: #{word_att_forward_padded.1} parent=662 // pred_check
        _
      $region676: #{word_att_forward_padded.1} parent=662 // pred_check_branch
        %1050 = sbr.rel (%p1047) target = $region678
      $region677: #{word_att_forward_padded.1} parent=662 // pred_region
        %s1051 = sand.u32 1, 7
        %s1052 = ssub.s32 1, %s1051
        %s1053 = scalar_lea.vmem %s1025, %s1052
        %s1054 = ssub.s32 1, %s1051
        %s1055 = scalar_lea.vmem %s1026, %s1054 [#allocation2]
        %s1056 = sshllo.u32 0, %s1051
        loop: start=0, step=1, limit=1
        $region679: #{word_att_forward_padded.1} parent=677 // loop_pre_header
          _
        $region680: #{word_att_forward_padded.1} parent=677 // loop_header
          %s1058 = sphi 0, %s1062
          %p1059 = scmp.ge.s32.totalorder %s1058, 1
          %s1063 = sphi %s1053, %s1053
          %s1064 = sphi %s1055, %s1055
        $region681: #{word_att_forward_padded.1} parent=677 // loop_header_branch
          %1061 = sbr.rel (%p1059) target = $region685
        $region682: #{word_att_forward_padded.1} parent=677 // loop_body
          %v1065 = vld [vmem:[%s1063] sm:%s1056]
          %1066 = vst [vmem:[%s1064] sm:%s1056] %v1065
        $region683: #{word_att_forward_padded.1} parent=677 // loop_footer
          %s1062 = sadd.s32 1, %s1058
        $region684: #{word_att_forward_padded.1} parent=677 // loop_footer_branch
          %1057 = sbr.rel target = $region680
        $region685: #{word_att_forward_padded.1} parent=677 // loop_exit
          _
      $region678: #{word_att_forward_padded.1} parent=662 // pred_fallthru
        _
    $region663: #{word_att_forward_padded.1} parent=1 // pred_fallthru
      _
    // Predicated region
    $region664: #{word_att_forward_padded.1} parent=1 // pred_check
      %p1032 = pneg %p1028
    $region665: #{word_att_forward_padded.1} parent=1 // pred_check_branch
      %1034 = sbr.rel (%p1032) target = $region667
    $region666: #{word_att_forward_padded.1} parent=1 // pred_region
      %s1035 = sshllo.u32 0, 1
      loop: start=0, step=1, limit=1
      $region668: #{word_att_forward_padded.1} parent=666 // loop_pre_header
        _
      $region669: #{word_att_forward_padded.1} parent=666 // loop_header
        %s1037 = sphi 0, %s1041
        %p1038 = scmp.ge.s32.totalorder %s1037, 1
        %s1042 = sphi %s1025, %s1025
        %s1043 = sphi %s1026, %s1026
      $region670: #{word_att_forward_padded.1} parent=666 // loop_header_branch
        %1040 = sbr.rel (%p1038) target = $region674
      $region671: #{word_att_forward_padded.1} parent=666 // loop_body
        %v1044 = vld [vmem:[%s1042] sm:%s1035]
        %1045 = vst [vmem:[%s1043] sm:%s1035] %v1044
      $region672: #{word_att_forward_padded.1} parent=666 // loop_footer
        %s1041 = sadd.s32 1, %s1037
      $region673: #{word_att_forward_padded.1} parent=666 // loop_footer_branch
        %1036 = sbr.rel target = $region669
      $region674: #{word_att_forward_padded.1} parent=666 // loop_exit
        _
    $region667: #{word_att_forward_padded.1} parent=1 // pred_fallthru
      _
    // Predicated region
    $region686: #{word_att_forward_padded.1} parent=1 // pred_check
      _
    $region687: #{word_att_forward_padded.1} parent=1 // pred_check_branch
      %1069 = sbr.rel (0) target = $region689
    $region688: #{word_att_forward_padded.1} parent=1 // pred_region
      %1070 = vsyncadd [#allocation3], 16
    $region689: #{word_att_forward_padded.1} parent=1 // pred_fallthru
      _
    %s1071 = sld [smem:[#allocation4 + $0x16]]
    %s1072 = scalar_lea.vmem %s1, %s1071
    %s1073 = scalar_lea.vmem [#allocation2], 22
    %p1075 = scmp.lt.u32.totalorder 1, 8
    %p1076 = pneg %p1075
    // Predicated region
    $region690: #{word_att_forward_padded.1} parent=1 // pred_check
      _
    $region691: #{word_att_forward_padded.1} parent=1 // pred_check_branch
      %1078 = sbr.rel (%p1075) target = $region693
    $region692: #{word_att_forward_padded.1} parent=1 // pred_region
      %s1093 = sand.u32 1, 7
      %p1094 = scmp.eq.s32.totalorder %s1093, 0
      %p1095 = pneg %p1094
      // Predicated region
      $region705: #{word_att_forward_padded.1} parent=692 // pred_check
        _
      $region706: #{word_att_forward_padded.1} parent=692 // pred_check_branch
        %1097 = sbr.rel (%p1094) target = $region708
      $region707: #{word_att_forward_padded.1} parent=692 // pred_region
        %s1098 = sand.u32 1, 7
        %s1099 = ssub.s32 1, %s1098
        %s1100 = scalar_lea.vmem %s1072, %s1099
        %s1101 = ssub.s32 1, %s1098
        %s1102 = scalar_lea.vmem %s1073, %s1101 [#allocation2]
        %s1103 = sshllo.u32 0, %s1098
        loop: start=0, step=1, limit=1
        $region709: #{word_att_forward_padded.1} parent=707 // loop_pre_header
          _
        $region710: #{word_att_forward_padded.1} parent=707 // loop_header
          %s1105 = sphi 0, %s1109
          %p1106 = scmp.ge.s32.totalorder %s1105, 1
          %s1110 = sphi %s1100, %s1100
          %s1111 = sphi %s1102, %s1102
        $region711: #{word_att_forward_padded.1} parent=707 // loop_header_branch
          %1108 = sbr.rel (%p1106) target = $region715
        $region712: #{word_att_forward_padded.1} parent=707 // loop_body
          %v1112 = vld [vmem:[%s1110] sm:%s1103]
          %1113 = vst [vmem:[%s1111] sm:%s1103] %v1112
        $region713: #{word_att_forward_padded.1} parent=707 // loop_footer
          %s1109 = sadd.s32 1, %s1105
        $region714: #{word_att_forward_padded.1} parent=707 // loop_footer_branch
          %1104 = sbr.rel target = $region710
        $region715: #{word_att_forward_padded.1} parent=707 // loop_exit
          _
      $region708: #{word_att_forward_padded.1} parent=692 // pred_fallthru
        _
    $region693: #{word_att_forward_padded.1} parent=1 // pred_fallthru
      _
    // Predicated region
    $region694: #{word_att_forward_padded.1} parent=1 // pred_check
      %p1079 = pneg %p1075
    $region695: #{word_att_forward_padded.1} parent=1 // pred_check_branch
      %1081 = sbr.rel (%p1079) target = $region697
    $region696: #{word_att_forward_padded.1} parent=1 // pred_region
      %s1082 = sshllo.u32 0, 1
      loop: start=0, step=1, limit=1
      $region698: #{word_att_forward_padded.1} parent=696 // loop_pre_header
        _
      $region699: #{word_att_forward_padded.1} parent=696 // loop_header
        %s1084 = sphi 0, %s1088
        %p1085 = scmp.ge.s32.totalorder %s1084, 1
        %s1089 = sphi %s1072, %s1072
        %s1090 = sphi %s1073, %s1073
      $region700: #{word_att_forward_padded.1} parent=696 // loop_header_branch
        %1087 = sbr.rel (%p1085) target = $region704
      $region701: #{word_att_forward_padded.1} parent=696 // loop_body
        %v1091 = vld [vmem:[%s1089] sm:%s1082]
        %1092 = vst [vmem:[%s1090] sm:%s1082] %v1091
      $region702: #{word_att_forward_padded.1} parent=696 // loop_footer
        %s1088 = sadd.s32 1, %s1084
      $region703: #{word_att_forward_padded.1} parent=696 // loop_footer_branch
        %1083 = sbr.rel target = $region699
      $region704: #{word_att_forward_padded.1} parent=696 // loop_exit
        _
    $region697: #{word_att_forward_padded.1} parent=1 // pred_fallthru
      _
    // Predicated region
    $region716: #{word_att_forward_padded.1} parent=1 // pred_check
      _
    $region717: #{word_att_forward_padded.1} parent=1 // pred_check_branch
      %1116 = sbr.rel (0) target = $region719
    $region718: #{word_att_forward_padded.1} parent=1 // pred_region
      %1117 = vsyncadd [#allocation3], 16
    $region719: #{word_att_forward_padded.1} parent=1 // pred_fallthru
      _
    %s1118 = sld [smem:[#allocation4 + $0x17]]
    %s1119 = scalar_lea.vmem %s1, %s1118
    %s1120 = scalar_lea.vmem [#allocation2], 23
    %p1122 = scmp.lt.u32.totalorder 1, 8
    %p1123 = pneg %p1122
    // Predicated region
    $region720: #{word_att_forward_padded.1} parent=1 // pred_check
      _
    $region721: #{word_att_forward_padded.1} parent=1 // pred_check_branch
      %1125 = sbr.rel (%p1122) target = $region723
    $region722: #{word_att_forward_padded.1} parent=1 // pred_region
      %s1140 = sand.u32 1, 7
      %p1141 = scmp.eq.s32.totalorder %s1140, 0
      %p1142 = pneg %p1141
      // Predicated region
      $region735: #{word_att_forward_padded.1} parent=722 // pred_check
        _
      $region736: #{word_att_forward_padded.1} parent=722 // pred_check_branch
        %1144 = sbr.rel (%p1141) target = $region738
      $region737: #{word_att_forward_padded.1} parent=722 // pred_region
        %s1145 = sand.u32 1, 7
        %s1146 = ssub.s32 1, %s1145
        %s1147 = scalar_lea.vmem %s1119, %s1146
        %s1148 = ssub.s32 1, %s1145
        %s1149 = scalar_lea.vmem %s1120, %s1148 [#allocation2]
        %s1150 = sshllo.u32 0, %s1145
        loop: start=0, step=1, limit=1
        $region739: #{word_att_forward_padded.1} parent=737 // loop_pre_header
          _
        $region740: #{word_att_forward_padded.1} parent=737 // loop_header
          %s1152 = sphi 0, %s1156
          %p1153 = scmp.ge.s32.totalorder %s1152, 1
          %s1157 = sphi %s1147, %s1147
          %s1158 = sphi %s1149, %s1149
        $region741: #{word_att_forward_padded.1} parent=737 // loop_header_branch
          %1155 = sbr.rel (%p1153) target = $region745
        $region742: #{word_att_forward_padded.1} parent=737 // loop_body
          %v1159 = vld [vmem:[%s1157] sm:%s1150]
          %1160 = vst [vmem:[%s1158] sm:%s1150] %v1159
        $region743: #{word_att_forward_padded.1} parent=737 // loop_footer
          %s1156 = sadd.s32 1, %s1152
        $region744: #{word_att_forward_padded.1} parent=737 // loop_footer_branch
          %1151 = sbr.rel target = $region740
        $region745: #{word_att_forward_padded.1} parent=737 // loop_exit
          _
      $region738: #{word_att_forward_padded.1} parent=722 // pred_fallthru
        _
    $region723: #{word_att_forward_padded.1} parent=1 // pred_fallthru
      _
    // Predicated region
    $region724: #{word_att_forward_padded.1} parent=1 // pred_check
      %p1126 = pneg %p1122
    $region725: #{word_att_forward_padded.1} parent=1 // pred_check_branch
      %1128 = sbr.rel (%p1126) target = $region727
    $region726: #{word_att_forward_padded.1} parent=1 // pred_region
      %s1129 = sshllo.u32 0, 1
      loop: start=0, step=1, limit=1
      $region728: #{word_att_forward_padded.1} parent=726 // loop_pre_header
        _
      $region729: #{word_att_forward_padded.1} parent=726 // loop_header
        %s1131 = sphi 0, %s1135
        %p1132 = scmp.ge.s32.totalorder %s1131, 1
        %s1136 = sphi %s1119, %s1119
        %s1137 = sphi %s1120, %s1120
      $region730: #{word_att_forward_padded.1} parent=726 // loop_header_branch
        %1134 = sbr.rel (%p1132) target = $region734
      $region731: #{word_att_forward_padded.1} parent=726 // loop_body
        %v1138 = vld [vmem:[%s1136] sm:%s1129]
        %1139 = vst [vmem:[%s1137] sm:%s1129] %v1138
      $region732: #{word_att_forward_padded.1} parent=726 // loop_footer
        %s1135 = sadd.s32 1, %s1131
      $region733: #{word_att_forward_padded.1} parent=726 // loop_footer_branch
        %1130 = sbr.rel target = $region729
      $region734: #{word_att_forward_padded.1} parent=726 // loop_exit
        _
    $region727: #{word_att_forward_padded.1} parent=1 // pred_fallthru
      _
    // Predicated region
    $region746: #{word_att_forward_padded.1} parent=1 // pred_check
      _
    $region747: #{word_att_forward_padded.1} parent=1 // pred_check_branch
      %1163 = sbr.rel (0) target = $region749
    $region748: #{word_att_forward_padded.1} parent=1 // pred_region
      %1164 = vsyncadd [#allocation3], 16
    $region749: #{word_att_forward_padded.1} parent=1 // pred_fallthru
      _
    %s1165 = sld [smem:[#allocation4 + $0x18]]
    %s1166 = scalar_lea.vmem %s1, %s1165
    %s1167 = scalar_lea.vmem [#allocation2], 24
    %p1169 = scmp.lt.u32.totalorder 1, 8
    %p1170 = pneg %p1169
    // Predicated region
    $region750: #{word_att_forward_padded.1} parent=1 // pred_check
      _
    $region751: #{word_att_forward_padded.1} parent=1 // pred_check_branch
      %1172 = sbr.rel (%p1169) target = $region753
    $region752: #{word_att_forward_padded.1} parent=1 // pred_region
      %s1187 = sand.u32 1, 7
      %p1188 = scmp.eq.s32.totalorder %s1187, 0
      %p1189 = pneg %p1188
      // Predicated region
      $region765: #{word_att_forward_padded.1} parent=752 // pred_check
        _
      $region766: #{word_att_forward_padded.1} parent=752 // pred_check_branch
        %1191 = sbr.rel (%p1188) target = $region768
      $region767: #{word_att_forward_padded.1} parent=752 // pred_region
        %s1192 = sand.u32 1, 7
        %s1193 = ssub.s32 1, %s1192
        %s1194 = scalar_lea.vmem %s1166, %s1193
        %s1195 = ssub.s32 1, %s1192
        %s1196 = scalar_lea.vmem %s1167, %s1195 [#allocation2]
        %s1197 = sshllo.u32 0, %s1192
        loop: start=0, step=1, limit=1
        $region769: #{word_att_forward_padded.1} parent=767 // loop_pre_header
          _
        $region770: #{word_att_forward_padded.1} parent=767 // loop_header
          %s1199 = sphi 0, %s1203
          %p1200 = scmp.ge.s32.totalorder %s1199, 1
          %s1204 = sphi %s1194, %s1194
          %s1205 = sphi %s1196, %s1196
        $region771: #{word_att_forward_padded.1} parent=767 // loop_header_branch
          %1202 = sbr.rel (%p1200) target = $region775
        $region772: #{word_att_forward_padded.1} parent=767 // loop_body
          %v1206 = vld [vmem:[%s1204] sm:%s1197]
          %1207 = vst [vmem:[%s1205] sm:%s1197] %v1206
        $region773: #{word_att_forward_padded.1} parent=767 // loop_footer
          %s1203 = sadd.s32 1, %s1199
        $region774: #{word_att_forward_padded.1} parent=767 // loop_footer_branch
          %1198 = sbr.rel target = $region770
        $region775: #{word_att_forward_padded.1} parent=767 // loop_exit
          _
      $region768: #{word_att_forward_padded.1} parent=752 // pred_fallthru
        _
    $region753: #{word_att_forward_padded.1} parent=1 // pred_fallthru
      _
    // Predicated region
    $region754: #{word_att_forward_padded.1} parent=1 // pred_check
      %p1173 = pneg %p1169
    $region755: #{word_att_forward_padded.1} parent=1 // pred_check_branch
      %1175 = sbr.rel (%p1173) target = $region757
    $region756: #{word_att_forward_padded.1} parent=1 // pred_region
      %s1176 = sshllo.u32 0, 1
      loop: start=0, step=1, limit=1
      $region758: #{word_att_forward_padded.1} parent=756 // loop_pre_header
        _
      $region759: #{word_att_forward_padded.1} parent=756 // loop_header
        %s1178 = sphi 0, %s1182
        %p1179 = scmp.ge.s32.totalorder %s1178, 1
        %s1183 = sphi %s1166, %s1166
        %s1184 = sphi %s1167, %s1167
      $region760: #{word_att_forward_padded.1} parent=756 // loop_header_branch
        %1181 = sbr.rel (%p1179) target = $region764
      $region761: #{word_att_forward_padded.1} parent=756 // loop_body
        %v1185 = vld [vmem:[%s1183] sm:%s1176]
        %1186 = vst [vmem:[%s1184] sm:%s1176] %v1185
      $region762: #{word_att_forward_padded.1} parent=756 // loop_footer
        %s1182 = sadd.s32 1, %s1178
      $region763: #{word_att_forward_padded.1} parent=756 // loop_footer_branch
        %1177 = sbr.rel target = $region759
      $region764: #{word_att_forward_padded.1} parent=756 // loop_exit
        _
    $region757: #{word_att_forward_padded.1} parent=1 // pred_fallthru
      _
    // Predicated region
    $region776: #{word_att_forward_padded.1} parent=1 // pred_check
      _
    $region777: #{word_att_forward_padded.1} parent=1 // pred_check_branch
      %1210 = sbr.rel (0) target = $region779
    $region778: #{word_att_forward_padded.1} parent=1 // pred_region
      %1211 = vsyncadd [#allocation3], 16
    $region779: #{word_att_forward_padded.1} parent=1 // pred_fallthru
      _
    %s1212 = sld [smem:[#allocation4 + $0x19]]
    %s1213 = scalar_lea.vmem %s1, %s1212
    %s1214 = scalar_lea.vmem [#allocation2], 25
    %p1216 = scmp.lt.u32.totalorder 1, 8
    %p1217 = pneg %p1216
    // Predicated region
    $region780: #{word_att_forward_padded.1} parent=1 // pred_check
      _
    $region781: #{word_att_forward_padded.1} parent=1 // pred_check_branch
      %1219 = sbr.rel (%p1216) target = $region783
    $region782: #{word_att_forward_padded.1} parent=1 // pred_region
      %s1234 = sand.u32 1, 7
      %p1235 = scmp.eq.s32.totalorder %s1234, 0
      %p1236 = pneg %p1235
      // Predicated region
      $region795: #{word_att_forward_padded.1} parent=782 // pred_check
        _
      $region796: #{word_att_forward_padded.1} parent=782 // pred_check_branch
        %1238 = sbr.rel (%p1235) target = $region798
      $region797: #{word_att_forward_padded.1} parent=782 // pred_region
        %s1239 = sand.u32 1, 7
        %s1240 = ssub.s32 1, %s1239
        %s1241 = scalar_lea.vmem %s1213, %s1240
        %s1242 = ssub.s32 1, %s1239
        %s1243 = scalar_lea.vmem %s1214, %s1242 [#allocation2]
        %s1244 = sshllo.u32 0, %s1239
        loop: start=0, step=1, limit=1
        $region799: #{word_att_forward_padded.1} parent=797 // loop_pre_header
          _
        $region800: #{word_att_forward_padded.1} parent=797 // loop_header
          %s1246 = sphi 0, %s1250
          %p1247 = scmp.ge.s32.totalorder %s1246, 1
          %s1251 = sphi %s1241, %s1241
          %s1252 = sphi %s1243, %s1243
        $region801: #{word_att_forward_padded.1} parent=797 // loop_header_branch
          %1249 = sbr.rel (%p1247) target = $region805
        $region802: #{word_att_forward_padded.1} parent=797 // loop_body
          %v1253 = vld [vmem:[%s1251] sm:%s1244]
          %1254 = vst [vmem:[%s1252] sm:%s1244] %v1253
        $region803: #{word_att_forward_padded.1} parent=797 // loop_footer
          %s1250 = sadd.s32 1, %s1246
        $region804: #{word_att_forward_padded.1} parent=797 // loop_footer_branch
          %1245 = sbr.rel target = $region800
        $region805: #{word_att_forward_padded.1} parent=797 // loop_exit
          _
      $region798: #{word_att_forward_padded.1} parent=782 // pred_fallthru
        _
    $region783: #{word_att_forward_padded.1} parent=1 // pred_fallthru
      _
    // Predicated region
    $region784: #{word_att_forward_padded.1} parent=1 // pred_check
      %p1220 = pneg %p1216
    $region785: #{word_att_forward_padded.1} parent=1 // pred_check_branch
      %1222 = sbr.rel (%p1220) target = $region787
    $region786: #{word_att_forward_padded.1} parent=1 // pred_region
      %s1223 = sshllo.u32 0, 1
      loop: start=0, step=1, limit=1
      $region788: #{word_att_forward_padded.1} parent=786 // loop_pre_header
        _
      $region789: #{word_att_forward_padded.1} parent=786 // loop_header
        %s1225 = sphi 0, %s1229
        %p1226 = scmp.ge.s32.totalorder %s1225, 1
        %s1230 = sphi %s1213, %s1213
        %s1231 = sphi %s1214, %s1214
      $region790: #{word_att_forward_padded.1} parent=786 // loop_header_branch
        %1228 = sbr.rel (%p1226) target = $region794
      $region791: #{word_att_forward_padded.1} parent=786 // loop_body
        %v1232 = vld [vmem:[%s1230] sm:%s1223]
        %1233 = vst [vmem:[%s1231] sm:%s1223] %v1232
      $region792: #{word_att_forward_padded.1} parent=786 // loop_footer
        %s1229 = sadd.s32 1, %s1225
      $region793: #{word_att_forward_padded.1} parent=786 // loop_footer_branch
        %1224 = sbr.rel target = $region789
      $region794: #{word_att_forward_padded.1} parent=786 // loop_exit
        _
    $region787: #{word_att_forward_padded.1} parent=1 // pred_fallthru
      _
    // Predicated region
    $region806: #{word_att_forward_padded.1} parent=1 // pred_check
      _
    $region807: #{word_att_forward_padded.1} parent=1 // pred_check_branch
      %1257 = sbr.rel (0) target = $region809
    $region808: #{word_att_forward_padded.1} parent=1 // pred_region
      %1258 = vsyncadd [#allocation3], 16
    $region809: #{word_att_forward_padded.1} parent=1 // pred_fallthru
      _
    %s1259 = sld [smem:[#allocation4 + $0x1a]]
    %s1260 = scalar_lea.vmem %s1, %s1259
    %s1261 = scalar_lea.vmem [#allocation2], 26
    %p1263 = scmp.lt.u32.totalorder 1, 8
    %p1264 = pneg %p1263
    // Predicated region
    $region810: #{word_att_forward_padded.1} parent=1 // pred_check
      _
    $region811: #{word_att_forward_padded.1} parent=1 // pred_check_branch
      %1266 = sbr.rel (%p1263) target = $region813
    $region812: #{word_att_forward_padded.1} parent=1 // pred_region
      %s1281 = sand.u32 1, 7
      %p1282 = scmp.eq.s32.totalorder %s1281, 0
      %p1283 = pneg %p1282
      // Predicated region
      $region825: #{word_att_forward_padded.1} parent=812 // pred_check
        _
      $region826: #{word_att_forward_padded.1} parent=812 // pred_check_branch
        %1285 = sbr.rel (%p1282) target = $region828
      $region827: #{word_att_forward_padded.1} parent=812 // pred_region
        %s1286 = sand.u32 1, 7
        %s1287 = ssub.s32 1, %s1286
        %s1288 = scalar_lea.vmem %s1260, %s1287
        %s1289 = ssub.s32 1, %s1286
        %s1290 = scalar_lea.vmem %s1261, %s1289 [#allocation2]
        %s1291 = sshllo.u32 0, %s1286
        loop: start=0, step=1, limit=1
        $region829: #{word_att_forward_padded.1} parent=827 // loop_pre_header
          _
        $region830: #{word_att_forward_padded.1} parent=827 // loop_header
          %s1293 = sphi 0, %s1297
          %p1294 = scmp.ge.s32.totalorder %s1293, 1
          %s1298 = sphi %s1288, %s1288
          %s1299 = sphi %s1290, %s1290
        $region831: #{word_att_forward_padded.1} parent=827 // loop_header_branch
          %1296 = sbr.rel (%p1294) target = $region835
        $region832: #{word_att_forward_padded.1} parent=827 // loop_body
          %v1300 = vld [vmem:[%s1298] sm:%s1291]
          %1301 = vst [vmem:[%s1299] sm:%s1291] %v1300
        $region833: #{word_att_forward_padded.1} parent=827 // loop_footer
          %s1297 = sadd.s32 1, %s1293
        $region834: #{word_att_forward_padded.1} parent=827 // loop_footer_branch
          %1292 = sbr.rel target = $region830
        $region835: #{word_att_forward_padded.1} parent=827 // loop_exit
          _
      $region828: #{word_att_forward_padded.1} parent=812 // pred_fallthru
        _
    $region813: #{word_att_forward_padded.1} parent=1 // pred_fallthru
      _
    // Predicated region
    $region814: #{word_att_forward_padded.1} parent=1 // pred_check
      %p1267 = pneg %p1263
    $region815: #{word_att_forward_padded.1} parent=1 // pred_check_branch
      %1269 = sbr.rel (%p1267) target = $region817
    $region816: #{word_att_forward_padded.1} parent=1 // pred_region
      %s1270 = sshllo.u32 0, 1
      loop: start=0, step=1, limit=1
      $region818: #{word_att_forward_padded.1} parent=816 // loop_pre_header
        _
      $region819: #{word_att_forward_padded.1} parent=816 // loop_header
        %s1272 = sphi 0, %s1276
        %p1273 = scmp.ge.s32.totalorder %s1272, 1
        %s1277 = sphi %s1260, %s1260
        %s1278 = sphi %s1261, %s1261
      $region820: #{word_att_forward_padded.1} parent=816 // loop_header_branch
        %1275 = sbr.rel (%p1273) target = $region824
      $region821: #{word_att_forward_padded.1} parent=816 // loop_body
        %v1279 = vld [vmem:[%s1277] sm:%s1270]
        %1280 = vst [vmem:[%s1278] sm:%s1270] %v1279
      $region822: #{word_att_forward_padded.1} parent=816 // loop_footer
        %s1276 = sadd.s32 1, %s1272
      $region823: #{word_att_forward_padded.1} parent=816 // loop_footer_branch
        %1271 = sbr.rel target = $region819
      $region824: #{word_att_forward_padded.1} parent=816 // loop_exit
        _
    $region817: #{word_att_forward_padded.1} parent=1 // pred_fallthru
      _
    // Predicated region
    $region836: #{word_att_forward_padded.1} parent=1 // pred_check
      _
    $region837: #{word_att_forward_padded.1} parent=1 // pred_check_branch
      %1304 = sbr.rel (0) target = $region839
    $region838: #{word_att_forward_padded.1} parent=1 // pred_region
      %1305 = vsyncadd [#allocation3], 16
    $region839: #{word_att_forward_padded.1} parent=1 // pred_fallthru
      _
    %s1306 = sld [smem:[#allocation4 + $0x1b]]
    %s1307 = scalar_lea.vmem %s1, %s1306
    %s1308 = scalar_lea.vmem [#allocation2], 27
    %p1310 = scmp.lt.u32.totalorder 1, 8
    %p1311 = pneg %p1310
    // Predicated region
    $region840: #{word_att_forward_padded.1} parent=1 // pred_check
      _
    $region841: #{word_att_forward_padded.1} parent=1 // pred_check_branch
      %1313 = sbr.rel (%p1310) target = $region843
    $region842: #{word_att_forward_padded.1} parent=1 // pred_region
      %s1328 = sand.u32 1, 7
      %p1329 = scmp.eq.s32.totalorder %s1328, 0
      %p1330 = pneg %p1329
      // Predicated region
      $region855: #{word_att_forward_padded.1} parent=842 // pred_check
        _
      $region856: #{word_att_forward_padded.1} parent=842 // pred_check_branch
        %1332 = sbr.rel (%p1329) target = $region858
      $region857: #{word_att_forward_padded.1} parent=842 // pred_region
        %s1333 = sand.u32 1, 7
        %s1334 = ssub.s32 1, %s1333
        %s1335 = scalar_lea.vmem %s1307, %s1334
        %s1336 = ssub.s32 1, %s1333
        %s1337 = scalar_lea.vmem %s1308, %s1336 [#allocation2]
        %s1338 = sshllo.u32 0, %s1333
        loop: start=0, step=1, limit=1
        $region859: #{word_att_forward_padded.1} parent=857 // loop_pre_header
          _
        $region860: #{word_att_forward_padded.1} parent=857 // loop_header
          %s1340 = sphi 0, %s1344
          %p1341 = scmp.ge.s32.totalorder %s1340, 1
          %s1345 = sphi %s1335, %s1335
          %s1346 = sphi %s1337, %s1337
        $region861: #{word_att_forward_padded.1} parent=857 // loop_header_branch
          %1343 = sbr.rel (%p1341) target = $region865
        $region862: #{word_att_forward_padded.1} parent=857 // loop_body
          %v1347 = vld [vmem:[%s1345] sm:%s1338]
          %1348 = vst [vmem:[%s1346] sm:%s1338] %v1347
        $region863: #{word_att_forward_padded.1} parent=857 // loop_footer
          %s1344 = sadd.s32 1, %s1340
        $region864: #{word_att_forward_padded.1} parent=857 // loop_footer_branch
          %1339 = sbr.rel target = $region860
        $region865: #{word_att_forward_padded.1} parent=857 // loop_exit
          _
      $region858: #{word_att_forward_padded.1} parent=842 // pred_fallthru
        _
    $region843: #{word_att_forward_padded.1} parent=1 // pred_fallthru
      _
    // Predicated region
    $region844: #{word_att_forward_padded.1} parent=1 // pred_check
      %p1314 = pneg %p1310
    $region845: #{word_att_forward_padded.1} parent=1 // pred_check_branch
      %1316 = sbr.rel (%p1314) target = $region847
    $region846: #{word_att_forward_padded.1} parent=1 // pred_region
      %s1317 = sshllo.u32 0, 1
      loop: start=0, step=1, limit=1
      $region848: #{word_att_forward_padded.1} parent=846 // loop_pre_header
        _
      $region849: #{word_att_forward_padded.1} parent=846 // loop_header
        %s1319 = sphi 0, %s1323
        %p1320 = scmp.ge.s32.totalorder %s1319, 1
        %s1324 = sphi %s1307, %s1307
        %s1325 = sphi %s1308, %s1308
      $region850: #{word_att_forward_padded.1} parent=846 // loop_header_branch
        %1322 = sbr.rel (%p1320) target = $region854
      $region851: #{word_att_forward_padded.1} parent=846 // loop_body
        %v1326 = vld [vmem:[%s1324] sm:%s1317]
        %1327 = vst [vmem:[%s1325] sm:%s1317] %v1326
      $region852: #{word_att_forward_padded.1} parent=846 // loop_footer
        %s1323 = sadd.s32 1, %s1319
      $region853: #{word_att_forward_padded.1} parent=846 // loop_footer_branch
        %1318 = sbr.rel target = $region849
      $region854: #{word_att_forward_padded.1} parent=846 // loop_exit
        _
    $region847: #{word_att_forward_padded.1} parent=1 // pred_fallthru
      _
    // Predicated region
    $region866: #{word_att_forward_padded.1} parent=1 // pred_check
      _
    $region867: #{word_att_forward_padded.1} parent=1 // pred_check_branch
      %1351 = sbr.rel (0) target = $region869
    $region868: #{word_att_forward_padded.1} parent=1 // pred_region
      %1352 = vsyncadd [#allocation3], 16
    $region869: #{word_att_forward_padded.1} parent=1 // pred_fallthru
      _
    %s1353 = sld [smem:[#allocation4 + $0x1c]]
    %s1354 = scalar_lea.vmem %s1, %s1353
    %s1355 = scalar_lea.vmem [#allocation2], 28
    %p1357 = scmp.lt.u32.totalorder 1, 8
    %p1358 = pneg %p1357
    // Predicated region
    $region870: #{word_att_forward_padded.1} parent=1 // pred_check
      _
    $region871: #{word_att_forward_padded.1} parent=1 // pred_check_branch
      %1360 = sbr.rel (%p1357) target = $region873
    $region872: #{word_att_forward_padded.1} parent=1 // pred_region
      %s1375 = sand.u32 1, 7
      %p1376 = scmp.eq.s32.totalorder %s1375, 0
      %p1377 = pneg %p1376
      // Predicated region
      $region885: #{word_att_forward_padded.1} parent=872 // pred_check
        _
      $region886: #{word_att_forward_padded.1} parent=872 // pred_check_branch
        %1379 = sbr.rel (%p1376) target = $region888
      $region887: #{word_att_forward_padded.1} parent=872 // pred_region
        %s1380 = sand.u32 1, 7
        %s1381 = ssub.s32 1, %s1380
        %s1382 = scalar_lea.vmem %s1354, %s1381
        %s1383 = ssub.s32 1, %s1380
        %s1384 = scalar_lea.vmem %s1355, %s1383 [#allocation2]
        %s1385 = sshllo.u32 0, %s1380
        loop: start=0, step=1, limit=1
        $region889: #{word_att_forward_padded.1} parent=887 // loop_pre_header
          _
        $region890: #{word_att_forward_padded.1} parent=887 // loop_header
          %s1387 = sphi 0, %s1391
          %p1388 = scmp.ge.s32.totalorder %s1387, 1
          %s1392 = sphi %s1382, %s1382
          %s1393 = sphi %s1384, %s1384
        $region891: #{word_att_forward_padded.1} parent=887 // loop_header_branch
          %1390 = sbr.rel (%p1388) target = $region895
        $region892: #{word_att_forward_padded.1} parent=887 // loop_body
          %v1394 = vld [vmem:[%s1392] sm:%s1385]
          %1395 = vst [vmem:[%s1393] sm:%s1385] %v1394
        $region893: #{word_att_forward_padded.1} parent=887 // loop_footer
          %s1391 = sadd.s32 1, %s1387
        $region894: #{word_att_forward_padded.1} parent=887 // loop_footer_branch
          %1386 = sbr.rel target = $region890
        $region895: #{word_att_forward_padded.1} parent=887 // loop_exit
          _
      $region888: #{word_att_forward_padded.1} parent=872 // pred_fallthru
        _
    $region873: #{word_att_forward_padded.1} parent=1 // pred_fallthru
      _
    // Predicated region
    $region874: #{word_att_forward_padded.1} parent=1 // pred_check
      %p1361 = pneg %p1357
    $region875: #{word_att_forward_padded.1} parent=1 // pred_check_branch
      %1363 = sbr.rel (%p1361) target = $region877
    $region876: #{word_att_forward_padded.1} parent=1 // pred_region
      %s1364 = sshllo.u32 0, 1
      loop: start=0, step=1, limit=1
      $region878: #{word_att_forward_padded.1} parent=876 // loop_pre_header
        _
      $region879: #{word_att_forward_padded.1} parent=876 // loop_header
        %s1366 = sphi 0, %s1370
        %p1367 = scmp.ge.s32.totalorder %s1366, 1
        %s1371 = sphi %s1354, %s1354
        %s1372 = sphi %s1355, %s1355
      $region880: #{word_att_forward_padded.1} parent=876 // loop_header_branch
        %1369 = sbr.rel (%p1367) target = $region884
      $region881: #{word_att_forward_padded.1} parent=876 // loop_body
        %v1373 = vld [vmem:[%s1371] sm:%s1364]
        %1374 = vst [vmem:[%s1372] sm:%s1364] %v1373
      $region882: #{word_att_forward_padded.1} parent=876 // loop_footer
        %s1370 = sadd.s32 1, %s1366
      $region883: #{word_att_forward_padded.1} parent=876 // loop_footer_branch
        %1365 = sbr.rel target = $region879
      $region884: #{word_att_forward_padded.1} parent=876 // loop_exit
        _
    $region877: #{word_att_forward_padded.1} parent=1 // pred_fallthru
      _
    // Predicated region
    $region896: #{word_att_forward_padded.1} parent=1 // pred_check
      _
    $region897: #{word_att_forward_padded.1} parent=1 // pred_check_branch
      %1398 = sbr.rel (0) target = $region899
    $region898: #{word_att_forward_padded.1} parent=1 // pred_region
      %1399 = vsyncadd [#allocation3], 16
    $region899: #{word_att_forward_padded.1} parent=1 // pred_fallthru
      _
    %s1400 = sld [smem:[#allocation4 + $0x1d]]
    %s1401 = scalar_lea.vmem %s1, %s1400
    %s1402 = scalar_lea.vmem [#allocation2], 29
    %p1404 = scmp.lt.u32.totalorder 1, 8
    %p1405 = pneg %p1404
    // Predicated region
    $region900: #{word_att_forward_padded.1} parent=1 // pred_check
      _
    $region901: #{word_att_forward_padded.1} parent=1 // pred_check_branch
      %1407 = sbr.rel (%p1404) target = $region903
    $region902: #{word_att_forward_padded.1} parent=1 // pred_region
      %s1422 = sand.u32 1, 7
      %p1423 = scmp.eq.s32.totalorder %s1422, 0
      %p1424 = pneg %p1423
      // Predicated region
      $region915: #{word_att_forward_padded.1} parent=902 // pred_check
        _
      $region916: #{word_att_forward_padded.1} parent=902 // pred_check_branch
        %1426 = sbr.rel (%p1423) target = $region918
      $region917: #{word_att_forward_padded.1} parent=902 // pred_region
        %s1427 = sand.u32 1, 7
        %s1428 = ssub.s32 1, %s1427
        %s1429 = scalar_lea.vmem %s1401, %s1428
        %s1430 = ssub.s32 1, %s1427
        %s1431 = scalar_lea.vmem %s1402, %s1430 [#allocation2]
        %s1432 = sshllo.u32 0, %s1427
        loop: start=0, step=1, limit=1
        $region919: #{word_att_forward_padded.1} parent=917 // loop_pre_header
          _
        $region920: #{word_att_forward_padded.1} parent=917 // loop_header
          %s1434 = sphi 0, %s1438
          %p1435 = scmp.ge.s32.totalorder %s1434, 1
          %s1439 = sphi %s1429, %s1429
          %s1440 = sphi %s1431, %s1431
        $region921: #{word_att_forward_padded.1} parent=917 // loop_header_branch
          %1437 = sbr.rel (%p1435) target = $region925
        $region922: #{word_att_forward_padded.1} parent=917 // loop_body
          %v1441 = vld [vmem:[%s1439] sm:%s1432]
          %1442 = vst [vmem:[%s1440] sm:%s1432] %v1441
        $region923: #{word_att_forward_padded.1} parent=917 // loop_footer
          %s1438 = sadd.s32 1, %s1434
        $region924: #{word_att_forward_padded.1} parent=917 // loop_footer_branch
          %1433 = sbr.rel target = $region920
        $region925: #{word_att_forward_padded.1} parent=917 // loop_exit
          _
      $region918: #{word_att_forward_padded.1} parent=902 // pred_fallthru
        _
    $region903: #{word_att_forward_padded.1} parent=1 // pred_fallthru
      _
    // Predicated region
    $region904: #{word_att_forward_padded.1} parent=1 // pred_check
      %p1408 = pneg %p1404
    $region905: #{word_att_forward_padded.1} parent=1 // pred_check_branch
      %1410 = sbr.rel (%p1408) target = $region907
    $region906: #{word_att_forward_padded.1} parent=1 // pred_region
      %s1411 = sshllo.u32 0, 1
      loop: start=0, step=1, limit=1
      $region908: #{word_att_forward_padded.1} parent=906 // loop_pre_header
        _
      $region909: #{word_att_forward_padded.1} parent=906 // loop_header
        %s1413 = sphi 0, %s1417
        %p1414 = scmp.ge.s32.totalorder %s1413, 1
        %s1418 = sphi %s1401, %s1401
        %s1419 = sphi %s1402, %s1402
      $region910: #{word_att_forward_padded.1} parent=906 // loop_header_branch
        %1416 = sbr.rel (%p1414) target = $region914
      $region911: #{word_att_forward_padded.1} parent=906 // loop_body
        %v1420 = vld [vmem:[%s1418] sm:%s1411]
        %1421 = vst [vmem:[%s1419] sm:%s1411] %v1420
      $region912: #{word_att_forward_padded.1} parent=906 // loop_footer
        %s1417 = sadd.s32 1, %s1413
      $region913: #{word_att_forward_padded.1} parent=906 // loop_footer_branch
        %1412 = sbr.rel target = $region909
      $region914: #{word_att_forward_padded.1} parent=906 // loop_exit
        _
    $region907: #{word_att_forward_padded.1} parent=1 // pred_fallthru
      _
    // Predicated region
    $region926: #{word_att_forward_padded.1} parent=1 // pred_check
      _
    $region927: #{word_att_forward_padded.1} parent=1 // pred_check_branch
      %1445 = sbr.rel (0) target = $region929
    $region928: #{word_att_forward_padded.1} parent=1 // pred_region
      %1446 = vsyncadd [#allocation3], 16
    $region929: #{word_att_forward_padded.1} parent=1 // pred_fallthru
      _
    %s1447 = sld [smem:[#allocation4 + $0x1e]]
    %s1448 = scalar_lea.vmem %s1, %s1447
    %s1449 = scalar_lea.vmem [#allocation2], 30
    %p1451 = scmp.lt.u32.totalorder 1, 8
    %p1452 = pneg %p1451
    // Predicated region
    $region930: #{word_att_forward_padded.1} parent=1 // pred_check
      _
    $region931: #{word_att_forward_padded.1} parent=1 // pred_check_branch
      %1454 = sbr.rel (%p1451) target = $region933
    $region932: #{word_att_forward_padded.1} parent=1 // pred_region
      %s1469 = sand.u32 1, 7
      %p1470 = scmp.eq.s32.totalorder %s1469, 0
      %p1471 = pneg %p1470
      // Predicated region
      $region945: #{word_att_forward_padded.1} parent=932 // pred_check
        _
      $region946: #{word_att_forward_padded.1} parent=932 // pred_check_branch
        %1473 = sbr.rel (%p1470) target = $region948
      $region947: #{word_att_forward_padded.1} parent=932 // pred_region
        %s1474 = sand.u32 1, 7
        %s1475 = ssub.s32 1, %s1474
        %s1476 = scalar_lea.vmem %s1448, %s1475
        %s1477 = ssub.s32 1, %s1474
        %s1478 = scalar_lea.vmem %s1449, %s1477 [#allocation2]
        %s1479 = sshllo.u32 0, %s1474
        loop: start=0, step=1, limit=1
        $region949: #{word_att_forward_padded.1} parent=947 // loop_pre_header
          _
        $region950: #{word_att_forward_padded.1} parent=947 // loop_header
          %s1481 = sphi 0, %s1485
          %p1482 = scmp.ge.s32.totalorder %s1481, 1
          %s1486 = sphi %s1476, %s1476
          %s1487 = sphi %s1478, %s1478
        $region951: #{word_att_forward_padded.1} parent=947 // loop_header_branch
          %1484 = sbr.rel (%p1482) target = $region955
        $region952: #{word_att_forward_padded.1} parent=947 // loop_body
          %v1488 = vld [vmem:[%s1486] sm:%s1479]
          %1489 = vst [vmem:[%s1487] sm:%s1479] %v1488
        $region953: #{word_att_forward_padded.1} parent=947 // loop_footer
          %s1485 = sadd.s32 1, %s1481
        $region954: #{word_att_forward_padded.1} parent=947 // loop_footer_branch
          %1480 = sbr.rel target = $region950
        $region955: #{word_att_forward_padded.1} parent=947 // loop_exit
          _
      $region948: #{word_att_forward_padded.1} parent=932 // pred_fallthru
        _
    $region933: #{word_att_forward_padded.1} parent=1 // pred_fallthru
      _
    // Predicated region
    $region934: #{word_att_forward_padded.1} parent=1 // pred_check
      %p1455 = pneg %p1451
    $region935: #{word_att_forward_padded.1} parent=1 // pred_check_branch
      %1457 = sbr.rel (%p1455) target = $region937
    $region936: #{word_att_forward_padded.1} parent=1 // pred_region
      %s1458 = sshllo.u32 0, 1
      loop: start=0, step=1, limit=1
      $region938: #{word_att_forward_padded.1} parent=936 // loop_pre_header
        _
      $region939: #{word_att_forward_padded.1} parent=936 // loop_header
        %s1460 = sphi 0, %s1464
        %p1461 = scmp.ge.s32.totalorder %s1460, 1
        %s1465 = sphi %s1448, %s1448
        %s1466 = sphi %s1449, %s1449
      $region940: #{word_att_forward_padded.1} parent=936 // loop_header_branch
        %1463 = sbr.rel (%p1461) target = $region944
      $region941: #{word_att_forward_padded.1} parent=936 // loop_body
        %v1467 = vld [vmem:[%s1465] sm:%s1458]
        %1468 = vst [vmem:[%s1466] sm:%s1458] %v1467
      $region942: #{word_att_forward_padded.1} parent=936 // loop_footer
        %s1464 = sadd.s32 1, %s1460
      $region943: #{word_att_forward_padded.1} parent=936 // loop_footer_branch
        %1459 = sbr.rel target = $region939
      $region944: #{word_att_forward_padded.1} parent=936 // loop_exit
        _
    $region937: #{word_att_forward_padded.1} parent=1 // pred_fallthru
      _
    // Predicated region
    $region956: #{word_att_forward_padded.1} parent=1 // pred_check
      _
    $region957: #{word_att_forward_padded.1} parent=1 // pred_check_branch
      %1492 = sbr.rel (0) target = $region959
    $region958: #{word_att_forward_padded.1} parent=1 // pred_region
      %1493 = vsyncadd [#allocation3], 16
    $region959: #{word_att_forward_padded.1} parent=1 // pred_fallthru
      _
    %s1494 = sld [smem:[#allocation4 + $0x1f]]
    %s1495 = scalar_lea.vmem %s1, %s1494
    %s1496 = scalar_lea.vmem [#allocation2], 31
    %p1498 = scmp.lt.u32.totalorder 1, 8
    %p1499 = pneg %p1498
    // Predicated region
    $region960: #{word_att_forward_padded.1} parent=1 // pred_check
      _
    $region961: #{word_att_forward_padded.1} parent=1 // pred_check_branch
      %1501 = sbr.rel (%p1498) target = $region963
    $region962: #{word_att_forward_padded.1} parent=1 // pred_region
      %s1516 = sand.u32 1, 7
      %p1517 = scmp.eq.s32.totalorder %s1516, 0
      %p1518 = pneg %p1517
      // Predicated region
      $region975: #{word_att_forward_padded.1} parent=962 // pred_check
        _
      $region976: #{word_att_forward_padded.1} parent=962 // pred_check_branch
        %1520 = sbr.rel (%p1517) target = $region978
      $region977: #{word_att_forward_padded.1} parent=962 // pred_region
        %s1521 = sand.u32 1, 7
        %s1522 = ssub.s32 1, %s1521
        %s1523 = scalar_lea.vmem %s1495, %s1522
        %s1524 = ssub.s32 1, %s1521
        %s1525 = scalar_lea.vmem %s1496, %s1524 [#allocation2]
        %s1526 = sshllo.u32 0, %s1521
        loop: start=0, step=1, limit=1
        $region979: #{word_att_forward_padded.1} parent=977 // loop_pre_header
          _
        $region980: #{word_att_forward_padded.1} parent=977 // loop_header
          %s1528 = sphi 0, %s1532
          %p1529 = scmp.ge.s32.totalorder %s1528, 1
          %s1533 = sphi %s1523, %s1523
          %s1534 = sphi %s1525, %s1525
        $region981: #{word_att_forward_padded.1} parent=977 // loop_header_branch
          %1531 = sbr.rel (%p1529) target = $region985
        $region982: #{word_att_forward_padded.1} parent=977 // loop_body
          %v1535 = vld [vmem:[%s1533] sm:%s1526]
          %1536 = vst [vmem:[%s1534] sm:%s1526] %v1535
        $region983: #{word_att_forward_padded.1} parent=977 // loop_footer
          %s1532 = sadd.s32 1, %s1528
        $region984: #{word_att_forward_padded.1} parent=977 // loop_footer_branch
          %1527 = sbr.rel target = $region980
        $region985: #{word_att_forward_padded.1} parent=977 // loop_exit
          _
      $region978: #{word_att_forward_padded.1} parent=962 // pred_fallthru
        _
    $region963: #{word_att_forward_padded.1} parent=1 // pred_fallthru
      _
    // Predicated region
    $region964: #{word_att_forward_padded.1} parent=1 // pred_check
      %p1502 = pneg %p1498
    $region965: #{word_att_forward_padded.1} parent=1 // pred_check_branch
      %1504 = sbr.rel (%p1502) target = $region967
    $region966: #{word_att_forward_padded.1} parent=1 // pred_region
      %s1505 = sshllo.u32 0, 1
      loop: start=0, step=1, limit=1
      $region968: #{word_att_forward_padded.1} parent=966 // loop_pre_header
        _
      $region969: #{word_att_forward_padded.1} parent=966 // loop_header
        %s1507 = sphi 0, %s1511
        %p1508 = scmp.ge.s32.totalorder %s1507, 1
        %s1512 = sphi %s1495, %s1495
        %s1513 = sphi %s1496, %s1496
      $region970: #{word_att_forward_padded.1} parent=966 // loop_header_branch
        %1510 = sbr.rel (%p1508) target = $region974
      $region971: #{word_att_forward_padded.1} parent=966 // loop_body
        %v1514 = vld [vmem:[%s1512] sm:%s1505]
        %1515 = vst [vmem:[%s1513] sm:%s1505] %v1514
      $region972: #{word_att_forward_padded.1} parent=966 // loop_footer
        %s1511 = sadd.s32 1, %s1507
      $region973: #{word_att_forward_padded.1} parent=966 // loop_footer_branch
        %1506 = sbr.rel target = $region969
      $region974: #{word_att_forward_padded.1} parent=966 // loop_exit
        _
    $region967: #{word_att_forward_padded.1} parent=1 // pred_fallthru
      _
    // Predicated region
    $region986: #{word_att_forward_padded.1} parent=1 // pred_check
      _
    $region987: #{word_att_forward_padded.1} parent=1 // pred_check_branch
      %1539 = sbr.rel (0) target = $region989
    $region988: #{word_att_forward_padded.1} parent=1 // pred_region
      %1540 = vsyncadd [#allocation3], 16
    $region989: #{word_att_forward_padded.1} parent=1 // pred_fallthru
      _
    %s1541 = sld [smem:[#allocation4 + $0x20]]
    %s1542 = scalar_lea.vmem %s1, %s1541
    %s1543 = scalar_lea.vmem [#allocation2], 32
    %p1545 = scmp.lt.u32.totalorder 1, 8
    %p1546 = pneg %p1545
    // Predicated region
    $region990: #{word_att_forward_padded.1} parent=1 // pred_check
      _
    $region991: #{word_att_forward_padded.1} parent=1 // pred_check_branch
      %1548 = sbr.rel (%p1545) target = $region993
    $region992: #{word_att_forward_padded.1} parent=1 // pred_region
      %s1563 = sand.u32 1, 7
      %p1564 = scmp.eq.s32.totalorder %s1563, 0
      %p1565 = pneg %p1564
      // Predicated region
      $region1005: #{word_att_forward_padded.1} parent=992 // pred_check
        _
      $region1006: #{word_att_forward_padded.1} parent=992 // pred_check_branch
        %1567 = sbr.rel (%p1564) target = $region1008
      $region1007: #{word_att_forward_padded.1} parent=992 // pred_region
        %s1568 = sand.u32 1, 7
        %s1569 = ssub.s32 1, %s1568
        %s1570 = scalar_lea.vmem %s1542, %s1569
        %s1571 = ssub.s32 1, %s1568
        %s1572 = scalar_lea.vmem %s1543, %s1571 [#allocation2]
        %s1573 = sshllo.u32 0, %s1568
        loop: start=0, step=1, limit=1
        $region1009: #{word_att_forward_padded.1} parent=1007 // loop_pre_header
          _
        $region1010: #{word_att_forward_padded.1} parent=1007 // loop_header
          %s1575 = sphi 0, %s1579
          %p1576 = scmp.ge.s32.totalorder %s1575, 1
          %s1580 = sphi %s1570, %s1570
          %s1581 = sphi %s1572, %s1572
        $region1011: #{word_att_forward_padded.1} parent=1007 // loop_header_branch
          %1578 = sbr.rel (%p1576) target = $region1015
        $region1012: #{word_att_forward_padded.1} parent=1007 // loop_body
          %v1582 = vld [vmem:[%s1580] sm:%s1573]
          %1583 = vst [vmem:[%s1581] sm:%s1573] %v1582
        $region1013: #{word_att_forward_padded.1} parent=1007 // loop_footer
          %s1579 = sadd.s32 1, %s1575
        $region1014: #{word_att_forward_padded.1} parent=1007 // loop_footer_branch
          %1574 = sbr.rel target = $region1010
        $region1015: #{word_att_forward_padded.1} parent=1007 // loop_exit
          _
      $region1008: #{word_att_forward_padded.1} parent=992 // pred_fallthru
        _
    $region993: #{word_att_forward_padded.1} parent=1 // pred_fallthru
      _
    // Predicated region
    $region994: #{word_att_forward_padded.1} parent=1 // pred_check
      %p1549 = pneg %p1545
    $region995: #{word_att_forward_padded.1} parent=1 // pred_check_branch
      %1551 = sbr.rel (%p1549) target = $region997
    $region996: #{word_att_forward_padded.1} parent=1 // pred_region
      %s1552 = sshllo.u32 0, 1
      loop: start=0, step=1, limit=1
      $region998: #{word_att_forward_padded.1} parent=996 // loop_pre_header
        _
      $region999: #{word_att_forward_padded.1} parent=996 // loop_header
        %s1554 = sphi 0, %s1558
        %p1555 = scmp.ge.s32.totalorder %s1554, 1
        %s1559 = sphi %s1542, %s1542
        %s1560 = sphi %s1543, %s1543
      $region1000: #{word_att_forward_padded.1} parent=996 // loop_header_branch
        %1557 = sbr.rel (%p1555) target = $region1004
      $region1001: #{word_att_forward_padded.1} parent=996 // loop_body
        %v1561 = vld [vmem:[%s1559] sm:%s1552]
        %1562 = vst [vmem:[%s1560] sm:%s1552] %v1561
      $region1002: #{word_att_forward_padded.1} parent=996 // loop_footer
        %s1558 = sadd.s32 1, %s1554
      $region1003: #{word_att_forward_padded.1} parent=996 // loop_footer_branch
        %1553 = sbr.rel target = $region999
      $region1004: #{word_att_forward_padded.1} parent=996 // loop_exit
        _
    $region997: #{word_att_forward_padded.1} parent=1 // pred_fallthru
      _
    // Predicated region
    $region1016: #{word_att_forward_padded.1} parent=1 // pred_check
      _
    $region1017: #{word_att_forward_padded.1} parent=1 // pred_check_branch
      %1586 = sbr.rel (0) target = $region1019
    $region1018: #{word_att_forward_padded.1} parent=1 // pred_region
      %1587 = vsyncadd [#allocation3], 16
    $region1019: #{word_att_forward_padded.1} parent=1 // pred_fallthru
      _
    %s1588 = sld [smem:[#allocation4 + $0x21]]
    %s1589 = scalar_lea.vmem %s1, %s1588
    %s1590 = scalar_lea.vmem [#allocation2], 33
    %p1592 = scmp.lt.u32.totalorder 1, 8
    %p1593 = pneg %p1592
    // Predicated region
    $region1020: #{word_att_forward_padded.1} parent=1 // pred_check
      _
    $region1021: #{word_att_forward_padded.1} parent=1 // pred_check_branch
      %1595 = sbr.rel (%p1592) target = $region1023
    $region1022: #{word_att_forward_padded.1} parent=1 // pred_region
      %s1610 = sand.u32 1, 7
      %p1611 = scmp.eq.s32.totalorder %s1610, 0
      %p1612 = pneg %p1611
      // Predicated region
      $region1035: #{word_att_forward_padded.1} parent=1022 // pred_check
        _
      $region1036: #{word_att_forward_padded.1} parent=1022 // pred_check_branch
        %1614 = sbr.rel (%p1611) target = $region1038
      $region1037: #{word_att_forward_padded.1} parent=1022 // pred_region
        %s1615 = sand.u32 1, 7
        %s1616 = ssub.s32 1, %s1615
        %s1617 = scalar_lea.vmem %s1589, %s1616
        %s1618 = ssub.s32 1, %s1615
        %s1619 = scalar_lea.vmem %s1590, %s1618 [#allocation2]
        %s1620 = sshllo.u32 0, %s1615
        loop: start=0, step=1, limit=1
        $region1039: #{word_att_forward_padded.1} parent=1037 // loop_pre_header
          _
        $region1040: #{word_att_forward_padded.1} parent=1037 // loop_header
          %s1622 = sphi 0, %s1626
          %p1623 = scmp.ge.s32.totalorder %s1622, 1
          %s1627 = sphi %s1617, %s1617
          %s1628 = sphi %s1619, %s1619
        $region1041: #{word_att_forward_padded.1} parent=1037 // loop_header_branch
          %1625 = sbr.rel (%p1623) target = $region1045
        $region1042: #{word_att_forward_padded.1} parent=1037 // loop_body
          %v1629 = vld [vmem:[%s1627] sm:%s1620]
          %1630 = vst [vmem:[%s1628] sm:%s1620] %v1629
        $region1043: #{word_att_forward_padded.1} parent=1037 // loop_footer
          %s1626 = sadd.s32 1, %s1622
        $region1044: #{word_att_forward_padded.1} parent=1037 // loop_footer_branch
          %1621 = sbr.rel target = $region1040
        $region1045: #{word_att_forward_padded.1} parent=1037 // loop_exit
          _
      $region1038: #{word_att_forward_padded.1} parent=1022 // pred_fallthru
        _
    $region1023: #{word_att_forward_padded.1} parent=1 // pred_fallthru
      _
    // Predicated region
    $region1024: #{word_att_forward_padded.1} parent=1 // pred_check
      %p1596 = pneg %p1592
    $region1025: #{word_att_forward_padded.1} parent=1 // pred_check_branch
      %1598 = sbr.rel (%p1596) target = $region1027
    $region1026: #{word_att_forward_padded.1} parent=1 // pred_region
      %s1599 = sshllo.u32 0, 1
      loop: start=0, step=1, limit=1
      $region1028: #{word_att_forward_padded.1} parent=1026 // loop_pre_header
        _
      $region1029: #{word_att_forward_padded.1} parent=1026 // loop_header
        %s1601 = sphi 0, %s1605
        %p1602 = scmp.ge.s32.totalorder %s1601, 1
        %s1606 = sphi %s1589, %s1589
        %s1607 = sphi %s1590, %s1590
      $region1030: #{word_att_forward_padded.1} parent=1026 // loop_header_branch
        %1604 = sbr.rel (%p1602) target = $region1034
      $region1031: #{word_att_forward_padded.1} parent=1026 // loop_body
        %v1608 = vld [vmem:[%s1606] sm:%s1599]
        %1609 = vst [vmem:[%s1607] sm:%s1599] %v1608
      $region1032: #{word_att_forward_padded.1} parent=1026 // loop_footer
        %s1605 = sadd.s32 1, %s1601
      $region1033: #{word_att_forward_padded.1} parent=1026 // loop_footer_branch
        %1600 = sbr.rel target = $region1029
      $region1034: #{word_att_forward_padded.1} parent=1026 // loop_exit
        _
    $region1027: #{word_att_forward_padded.1} parent=1 // pred_fallthru
      _
    // Predicated region
    $region1046: #{word_att_forward_padded.1} parent=1 // pred_check
      _
    $region1047: #{word_att_forward_padded.1} parent=1 // pred_check_branch
      %1633 = sbr.rel (0) target = $region1049
    $region1048: #{word_att_forward_padded.1} parent=1 // pred_region
      %1634 = vsyncadd [#allocation3], 16
    $region1049: #{word_att_forward_padded.1} parent=1 // pred_fallthru
      _
    %s1635 = sld [smem:[#allocation4 + $0x22]]
    %s1636 = scalar_lea.vmem %s1, %s1635
    %s1637 = scalar_lea.vmem [#allocation2], 34
    %p1639 = scmp.lt.u32.totalorder 1, 8
    %p1640 = pneg %p1639
    // Predicated region
    $region1050: #{word_att_forward_padded.1} parent=1 // pred_check
      _
    $region1051: #{word_att_forward_padded.1} parent=1 // pred_check_branch
      %1642 = sbr.rel (%p1639) target = $region1053
    $region1052: #{word_att_forward_padded.1} parent=1 // pred_region
      %s1657 = sand.u32 1, 7
      %p1658 = scmp.eq.s32.totalorder %s1657, 0
      %p1659 = pneg %p1658
      // Predicated region
      $region1065: #{word_att_forward_padded.1} parent=1052 // pred_check
        _
      $region1066: #{word_att_forward_padded.1} parent=1052 // pred_check_branch
        %1661 = sbr.rel (%p1658) target = $region1068
      $region1067: #{word_att_forward_padded.1} parent=1052 // pred_region
        %s1662 = sand.u32 1, 7
        %s1663 = ssub.s32 1, %s1662
        %s1664 = scalar_lea.vmem %s1636, %s1663
        %s1665 = ssub.s32 1, %s1662
        %s1666 = scalar_lea.vmem %s1637, %s1665 [#allocation2]
        %s1667 = sshllo.u32 0, %s1662
        loop: start=0, step=1, limit=1
        $region1069: #{word_att_forward_padded.1} parent=1067 // loop_pre_header
          _
        $region1070: #{word_att_forward_padded.1} parent=1067 // loop_header
          %s1669 = sphi 0, %s1673
          %p1670 = scmp.ge.s32.totalorder %s1669, 1
          %s1674 = sphi %s1664, %s1664
          %s1675 = sphi %s1666, %s1666
        $region1071: #{word_att_forward_padded.1} parent=1067 // loop_header_branch
          %1672 = sbr.rel (%p1670) target = $region1075
        $region1072: #{word_att_forward_padded.1} parent=1067 // loop_body
          %v1676 = vld [vmem:[%s1674] sm:%s1667]
          %1677 = vst [vmem:[%s1675] sm:%s1667] %v1676
        $region1073: #{word_att_forward_padded.1} parent=1067 // loop_footer
          %s1673 = sadd.s32 1, %s1669
        $region1074: #{word_att_forward_padded.1} parent=1067 // loop_footer_branch
          %1668 = sbr.rel target = $region1070
        $region1075: #{word_att_forward_padded.1} parent=1067 // loop_exit
          _
      $region1068: #{word_att_forward_padded.1} parent=1052 // pred_fallthru
        _
    $region1053: #{word_att_forward_padded.1} parent=1 // pred_fallthru
      _
    // Predicated region
    $region1054: #{word_att_forward_padded.1} parent=1 // pred_check
      %p1643 = pneg %p1639
    $region1055: #{word_att_forward_padded.1} parent=1 // pred_check_branch
      %1645 = sbr.rel (%p1643) target = $region1057
    $region1056: #{word_att_forward_padded.1} parent=1 // pred_region
      %s1646 = sshllo.u32 0, 1
      loop: start=0, step=1, limit=1
      $region1058: #{word_att_forward_padded.1} parent=1056 // loop_pre_header
        _
      $region1059: #{word_att_forward_padded.1} parent=1056 // loop_header
        %s1648 = sphi 0, %s1652
        %p1649 = scmp.ge.s32.totalorder %s1648, 1
        %s1653 = sphi %s1636, %s1636
        %s1654 = sphi %s1637, %s1637
      $region1060: #{word_att_forward_padded.1} parent=1056 // loop_header_branch
        %1651 = sbr.rel (%p1649) target = $region1064
      $region1061: #{word_att_forward_padded.1} parent=1056 // loop_body
        %v1655 = vld [vmem:[%s1653] sm:%s1646]
        %1656 = vst [vmem:[%s1654] sm:%s1646] %v1655
      $region1062: #{word_att_forward_padded.1} parent=1056 // loop_footer
        %s1652 = sadd.s32 1, %s1648
      $region1063: #{word_att_forward_padded.1} parent=1056 // loop_footer_branch
        %1647 = sbr.rel target = $region1059
      $region1064: #{word_att_forward_padded.1} parent=1056 // loop_exit
        _
    $region1057: #{word_att_forward_padded.1} parent=1 // pred_fallthru
      _
    // Predicated region
    $region1076: #{word_att_forward_padded.1} parent=1 // pred_check
      _
    $region1077: #{word_att_forward_padded.1} parent=1 // pred_check_branch
      %1680 = sbr.rel (0) target = $region1079
    $region1078: #{word_att_forward_padded.1} parent=1 // pred_region
      %1681 = vsyncadd [#allocation3], 16
    $region1079: #{word_att_forward_padded.1} parent=1 // pred_fallthru
      _
    %s1682 = sld [smem:[#allocation4 + $0x23]]
    %s1683 = scalar_lea.vmem %s1, %s1682
    %s1684 = scalar_lea.vmem [#allocation2], 35
    %p1686 = scmp.lt.u32.totalorder 1, 8
    %p1687 = pneg %p1686
    // Predicated region
    $region1080: #{word_att_forward_padded.1} parent=1 // pred_check
      _
    $region1081: #{word_att_forward_padded.1} parent=1 // pred_check_branch
      %1689 = sbr.rel (%p1686) target = $region1083
    $region1082: #{word_att_forward_padded.1} parent=1 // pred_region
      %s1704 = sand.u32 1, 7
      %p1705 = scmp.eq.s32.totalorder %s1704, 0
      %p1706 = pneg %p1705
      // Predicated region
      $region1095: #{word_att_forward_padded.1} parent=1082 // pred_check
        _
      $region1096: #{word_att_forward_padded.1} parent=1082 // pred_check_branch
        %1708 = sbr.rel (%p1705) target = $region1098
      $region1097: #{word_att_forward_padded.1} parent=1082 // pred_region
        %s1709 = sand.u32 1, 7
        %s1710 = ssub.s32 1, %s1709
        %s1711 = scalar_lea.vmem %s1683, %s1710
        %s1712 = ssub.s32 1, %s1709
        %s1713 = scalar_lea.vmem %s1684, %s1712 [#allocation2]
        %s1714 = sshllo.u32 0, %s1709
        loop: start=0, step=1, limit=1
        $region1099: #{word_att_forward_padded.1} parent=1097 // loop_pre_header
          _
        $region1100: #{word_att_forward_padded.1} parent=1097 // loop_header
          %s1716 = sphi 0, %s1720
          %p1717 = scmp.ge.s32.totalorder %s1716, 1
          %s1721 = sphi %s1711, %s1711
          %s1722 = sphi %s1713, %s1713
        $region1101: #{word_att_forward_padded.1} parent=1097 // loop_header_branch
          %1719 = sbr.rel (%p1717) target = $region1105
        $region1102: #{word_att_forward_padded.1} parent=1097 // loop_body
          %v1723 = vld [vmem:[%s1721] sm:%s1714]
          %1724 = vst [vmem:[%s1722] sm:%s1714] %v1723
        $region1103: #{word_att_forward_padded.1} parent=1097 // loop_footer
          %s1720 = sadd.s32 1, %s1716
        $region1104: #{word_att_forward_padded.1} parent=1097 // loop_footer_branch
          %1715 = sbr.rel target = $region1100
        $region1105: #{word_att_forward_padded.1} parent=1097 // loop_exit
          _
      $region1098: #{word_att_forward_padded.1} parent=1082 // pred_fallthru
        _
    $region1083: #{word_att_forward_padded.1} parent=1 // pred_fallthru
      _
    // Predicated region
    $region1084: #{word_att_forward_padded.1} parent=1 // pred_check
      %p1690 = pneg %p1686
    $region1085: #{word_att_forward_padded.1} parent=1 // pred_check_branch
      %1692 = sbr.rel (%p1690) target = $region1087
    $region1086: #{word_att_forward_padded.1} parent=1 // pred_region
      %s1693 = sshllo.u32 0, 1
      loop: start=0, step=1, limit=1
      $region1088: #{word_att_forward_padded.1} parent=1086 // loop_pre_header
        _
      $region1089: #{word_att_forward_padded.1} parent=1086 // loop_header
        %s1695 = sphi 0, %s1699
        %p1696 = scmp.ge.s32.totalorder %s1695, 1
        %s1700 = sphi %s1683, %s1683
        %s1701 = sphi %s1684, %s1684
      $region1090: #{word_att_forward_padded.1} parent=1086 // loop_header_branch
        %1698 = sbr.rel (%p1696) target = $region1094
      $region1091: #{word_att_forward_padded.1} parent=1086 // loop_body
        %v1702 = vld [vmem:[%s1700] sm:%s1693]
        %1703 = vst [vmem:[%s1701] sm:%s1693] %v1702
      $region1092: #{word_att_forward_padded.1} parent=1086 // loop_footer
        %s1699 = sadd.s32 1, %s1695
      $region1093: #{word_att_forward_padded.1} parent=1086 // loop_footer_branch
        %1694 = sbr.rel target = $region1089
      $region1094: #{word_att_forward_padded.1} parent=1086 // loop_exit
        _
    $region1087: #{word_att_forward_padded.1} parent=1 // pred_fallthru
      _
    // Predicated region
    $region1106: #{word_att_forward_padded.1} parent=1 // pred_check
      _
    $region1107: #{word_att_forward_padded.1} parent=1 // pred_check_branch
      %1727 = sbr.rel (0) target = $region1109
    $region1108: #{word_att_forward_padded.1} parent=1 // pred_region
      %1728 = vsyncadd [#allocation3], 16
    $region1109: #{word_att_forward_padded.1} parent=1 // pred_fallthru
      _
    %s1729 = sld [smem:[#allocation4 + $0x24]]
    %s1730 = scalar_lea.vmem %s1, %s1729
    %s1731 = scalar_lea.vmem [#allocation2], 36
    %p1733 = scmp.lt.u32.totalorder 1, 8
    %p1734 = pneg %p1733
    // Predicated region
    $region1110: #{word_att_forward_padded.1} parent=1 // pred_check
      _
    $region1111: #{word_att_forward_padded.1} parent=1 // pred_check_branch
      %1736 = sbr.rel (%p1733) target = $region1113
    $region1112: #{word_att_forward_padded.1} parent=1 // pred_region
      %s1751 = sand.u32 1, 7
      %p1752 = scmp.eq.s32.totalorder %s1751, 0
      %p1753 = pneg %p1752
      // Predicated region
      $region1125: #{word_att_forward_padded.1} parent=1112 // pred_check
        _
      $region1126: #{word_att_forward_padded.1} parent=1112 // pred_check_branch
        %1755 = sbr.rel (%p1752) target = $region1128
      $region1127: #{word_att_forward_padded.1} parent=1112 // pred_region
        %s1756 = sand.u32 1, 7
        %s1757 = ssub.s32 1, %s1756
        %s1758 = scalar_lea.vmem %s1730, %s1757
        %s1759 = ssub.s32 1, %s1756
        %s1760 = scalar_lea.vmem %s1731, %s1759 [#allocation2]
        %s1761 = sshllo.u32 0, %s1756
        loop: start=0, step=1, limit=1
        $region1129: #{word_att_forward_padded.1} parent=1127 // loop_pre_header
          _
        $region1130: #{word_att_forward_padded.1} parent=1127 // loop_header
          %s1763 = sphi 0, %s1767
          %p1764 = scmp.ge.s32.totalorder %s1763, 1
          %s1768 = sphi %s1758, %s1758
          %s1769 = sphi %s1760, %s1760
        $region1131: #{word_att_forward_padded.1} parent=1127 // loop_header_branch
          %1766 = sbr.rel (%p1764) target = $region1135
        $region1132: #{word_att_forward_padded.1} parent=1127 // loop_body
          %v1770 = vld [vmem:[%s1768] sm:%s1761]
          %1771 = vst [vmem:[%s1769] sm:%s1761] %v1770
        $region1133: #{word_att_forward_padded.1} parent=1127 // loop_footer
          %s1767 = sadd.s32 1, %s1763
        $region1134: #{word_att_forward_padded.1} parent=1127 // loop_footer_branch
          %1762 = sbr.rel target = $region1130
        $region1135: #{word_att_forward_padded.1} parent=1127 // loop_exit
          _
      $region1128: #{word_att_forward_padded.1} parent=1112 // pred_fallthru
        _
    $region1113: #{word_att_forward_padded.1} parent=1 // pred_fallthru
      _
    // Predicated region
    $region1114: #{word_att_forward_padded.1} parent=1 // pred_check
      %p1737 = pneg %p1733
    $region1115: #{word_att_forward_padded.1} parent=1 // pred_check_branch
      %1739 = sbr.rel (%p1737) target = $region1117
    $region1116: #{word_att_forward_padded.1} parent=1 // pred_region
      %s1740 = sshllo.u32 0, 1
      loop: start=0, step=1, limit=1
      $region1118: #{word_att_forward_padded.1} parent=1116 // loop_pre_header
        _
      $region1119: #{word_att_forward_padded.1} parent=1116 // loop_header
        %s1742 = sphi 0, %s1746
        %p1743 = scmp.ge.s32.totalorder %s1742, 1
        %s1747 = sphi %s1730, %s1730
        %s1748 = sphi %s1731, %s1731
      $region1120: #{word_att_forward_padded.1} parent=1116 // loop_header_branch
        %1745 = sbr.rel (%p1743) target = $region1124
      $region1121: #{word_att_forward_padded.1} parent=1116 // loop_body
        %v1749 = vld [vmem:[%s1747] sm:%s1740]
        %1750 = vst [vmem:[%s1748] sm:%s1740] %v1749
      $region1122: #{word_att_forward_padded.1} parent=1116 // loop_footer
        %s1746 = sadd.s32 1, %s1742
      $region1123: #{word_att_forward_padded.1} parent=1116 // loop_footer_branch
        %1741 = sbr.rel target = $region1119
      $region1124: #{word_att_forward_padded.1} parent=1116 // loop_exit
        _
    $region1117: #{word_att_forward_padded.1} parent=1 // pred_fallthru
      _
    // Predicated region
    $region1136: #{word_att_forward_padded.1} parent=1 // pred_check
      _
    $region1137: #{word_att_forward_padded.1} parent=1 // pred_check_branch
      %1774 = sbr.rel (0) target = $region1139
    $region1138: #{word_att_forward_padded.1} parent=1 // pred_region
      %1775 = vsyncadd [#allocation3], 16
    $region1139: #{word_att_forward_padded.1} parent=1 // pred_fallthru
      _
    %s1776 = sld [smem:[#allocation4 + $0x25]]
    %s1777 = scalar_lea.vmem %s1, %s1776
    %s1778 = scalar_lea.vmem [#allocation2], 37
    %p1780 = scmp.lt.u32.totalorder 1, 8
    %p1781 = pneg %p1780
    // Predicated region
    $region1140: #{word_att_forward_padded.1} parent=1 // pred_check
      _
    $region1141: #{word_att_forward_padded.1} parent=1 // pred_check_branch
      %1783 = sbr.rel (%p1780) target = $region1143
    $region1142: #{word_att_forward_padded.1} parent=1 // pred_region
      %s1798 = sand.u32 1, 7
      %p1799 = scmp.eq.s32.totalorder %s1798, 0
      %p1800 = pneg %p1799
      // Predicated region
      $region1155: #{word_att_forward_padded.1} parent=1142 // pred_check
        _
      $region1156: #{word_att_forward_padded.1} parent=1142 // pred_check_branch
        %1802 = sbr.rel (%p1799) target = $region1158
      $region1157: #{word_att_forward_padded.1} parent=1142 // pred_region
        %s1803 = sand.u32 1, 7
        %s1804 = ssub.s32 1, %s1803
        %s1805 = scalar_lea.vmem %s1777, %s1804
        %s1806 = ssub.s32 1, %s1803
        %s1807 = scalar_lea.vmem %s1778, %s1806 [#allocation2]
        %s1808 = sshllo.u32 0, %s1803
        loop: start=0, step=1, limit=1
        $region1159: #{word_att_forward_padded.1} parent=1157 // loop_pre_header
          _
        $region1160: #{word_att_forward_padded.1} parent=1157 // loop_header
          %s1810 = sphi 0, %s1814
          %p1811 = scmp.ge.s32.totalorder %s1810, 1
          %s1815 = sphi %s1805, %s1805
          %s1816 = sphi %s1807, %s1807
        $region1161: #{word_att_forward_padded.1} parent=1157 // loop_header_branch
          %1813 = sbr.rel (%p1811) target = $region1165
        $region1162: #{word_att_forward_padded.1} parent=1157 // loop_body
          %v1817 = vld [vmem:[%s1815] sm:%s1808]
          %1818 = vst [vmem:[%s1816] sm:%s1808] %v1817
        $region1163: #{word_att_forward_padded.1} parent=1157 // loop_footer
          %s1814 = sadd.s32 1, %s1810
        $region1164: #{word_att_forward_padded.1} parent=1157 // loop_footer_branch
          %1809 = sbr.rel target = $region1160
        $region1165: #{word_att_forward_padded.1} parent=1157 // loop_exit
          _
      $region1158: #{word_att_forward_padded.1} parent=1142 // pred_fallthru
        _
    $region1143: #{word_att_forward_padded.1} parent=1 // pred_fallthru
      _
    // Predicated region
    $region1144: #{word_att_forward_padded.1} parent=1 // pred_check
      %p1784 = pneg %p1780
    $region1145: #{word_att_forward_padded.1} parent=1 // pred_check_branch
      %1786 = sbr.rel (%p1784) target = $region1147
    $region1146: #{word_att_forward_padded.1} parent=1 // pred_region
      %s1787 = sshllo.u32 0, 1
      loop: start=0, step=1, limit=1
      $region1148: #{word_att_forward_padded.1} parent=1146 // loop_pre_header
        _
      $region1149: #{word_att_forward_padded.1} parent=1146 // loop_header
        %s1789 = sphi 0, %s1793
        %p1790 = scmp.ge.s32.totalorder %s1789, 1
        %s1794 = sphi %s1777, %s1777
        %s1795 = sphi %s1778, %s1778
      $region1150: #{word_att_forward_padded.1} parent=1146 // loop_header_branch
        %1792 = sbr.rel (%p1790) target = $region1154
      $region1151: #{word_att_forward_padded.1} parent=1146 // loop_body
        %v1796 = vld [vmem:[%s1794] sm:%s1787]
        %1797 = vst [vmem:[%s1795] sm:%s1787] %v1796
      $region1152: #{word_att_forward_padded.1} parent=1146 // loop_footer
        %s1793 = sadd.s32 1, %s1789
      $region1153: #{word_att_forward_padded.1} parent=1146 // loop_footer_branch
        %1788 = sbr.rel target = $region1149
      $region1154: #{word_att_forward_padded.1} parent=1146 // loop_exit
        _
    $region1147: #{word_att_forward_padded.1} parent=1 // pred_fallthru
      _
    // Predicated region
    $region1166: #{word_att_forward_padded.1} parent=1 // pred_check
      _
    $region1167: #{word_att_forward_padded.1} parent=1 // pred_check_branch
      %1821 = sbr.rel (0) target = $region1169
    $region1168: #{word_att_forward_padded.1} parent=1 // pred_region
      %1822 = vsyncadd [#allocation3], 16
    $region1169: #{word_att_forward_padded.1} parent=1 // pred_fallthru
      _
    %s1823 = sld [smem:[#allocation4 + $0x26]]
    %s1824 = scalar_lea.vmem %s1, %s1823
    %s1825 = scalar_lea.vmem [#allocation2], 38
    %p1827 = scmp.lt.u32.totalorder 1, 8
    %p1828 = pneg %p1827
    // Predicated region
    $region1170: #{word_att_forward_padded.1} parent=1 // pred_check
      _
    $region1171: #{word_att_forward_padded.1} parent=1 // pred_check_branch
      %1830 = sbr.rel (%p1827) target = $region1173
    $region1172: #{word_att_forward_padded.1} parent=1 // pred_region
      %s1845 = sand.u32 1, 7
      %p1846 = scmp.eq.s32.totalorder %s1845, 0
      %p1847 = pneg %p1846
      // Predicated region
      $region1185: #{word_att_forward_padded.1} parent=1172 // pred_check
        _
      $region1186: #{word_att_forward_padded.1} parent=1172 // pred_check_branch
        %1849 = sbr.rel (%p1846) target = $region1188
      $region1187: #{word_att_forward_padded.1} parent=1172 // pred_region
        %s1850 = sand.u32 1, 7
        %s1851 = ssub.s32 1, %s1850
        %s1852 = scalar_lea.vmem %s1824, %s1851
        %s1853 = ssub.s32 1, %s1850
        %s1854 = scalar_lea.vmem %s1825, %s1853 [#allocation2]
        %s1855 = sshllo.u32 0, %s1850
        loop: start=0, step=1, limit=1
        $region1189: #{word_att_forward_padded.1} parent=1187 // loop_pre_header
          _
        $region1190: #{word_att_forward_padded.1} parent=1187 // loop_header
          %s1857 = sphi 0, %s1861
          %p1858 = scmp.ge.s32.totalorder %s1857, 1
          %s1862 = sphi %s1852, %s1852
          %s1863 = sphi %s1854, %s1854
        $region1191: #{word_att_forward_padded.1} parent=1187 // loop_header_branch
          %1860 = sbr.rel (%p1858) target = $region1195
        $region1192: #{word_att_forward_padded.1} parent=1187 // loop_body
          %v1864 = vld [vmem:[%s1862] sm:%s1855]
          %1865 = vst [vmem:[%s1863] sm:%s1855] %v1864
        $region1193: #{word_att_forward_padded.1} parent=1187 // loop_footer
          %s1861 = sadd.s32 1, %s1857
        $region1194: #{word_att_forward_padded.1} parent=1187 // loop_footer_branch
          %1856 = sbr.rel target = $region1190
        $region1195: #{word_att_forward_padded.1} parent=1187 // loop_exit
          _
      $region1188: #{word_att_forward_padded.1} parent=1172 // pred_fallthru
        _
    $region1173: #{word_att_forward_padded.1} parent=1 // pred_fallthru
      _
    // Predicated region
    $region1174: #{word_att_forward_padded.1} parent=1 // pred_check
      %p1831 = pneg %p1827
    $region1175: #{word_att_forward_padded.1} parent=1 // pred_check_branch
      %1833 = sbr.rel (%p1831) target = $region1177
    $region1176: #{word_att_forward_padded.1} parent=1 // pred_region
      %s1834 = sshllo.u32 0, 1
      loop: start=0, step=1, limit=1
      $region1178: #{word_att_forward_padded.1} parent=1176 // loop_pre_header
        _
      $region1179: #{word_att_forward_padded.1} parent=1176 // loop_header
        %s1836 = sphi 0, %s1840
        %p1837 = scmp.ge.s32.totalorder %s1836, 1
        %s1841 = sphi %s1824, %s1824
        %s1842 = sphi %s1825, %s1825
      $region1180: #{word_att_forward_padded.1} parent=1176 // loop_header_branch
        %1839 = sbr.rel (%p1837) target = $region1184
      $region1181: #{word_att_forward_padded.1} parent=1176 // loop_body
        %v1843 = vld [vmem:[%s1841] sm:%s1834]
        %1844 = vst [vmem:[%s1842] sm:%s1834] %v1843
      $region1182: #{word_att_forward_padded.1} parent=1176 // loop_footer
        %s1840 = sadd.s32 1, %s1836
      $region1183: #{word_att_forward_padded.1} parent=1176 // loop_footer_branch
        %1835 = sbr.rel target = $region1179
      $region1184: #{word_att_forward_padded.1} parent=1176 // loop_exit
        _
    $region1177: #{word_att_forward_padded.1} parent=1 // pred_fallthru
      _
    // Predicated region
    $region1196: #{word_att_forward_padded.1} parent=1 // pred_check
      _
    $region1197: #{word_att_forward_padded.1} parent=1 // pred_check_branch
      %1868 = sbr.rel (0) target = $region1199
    $region1198: #{word_att_forward_padded.1} parent=1 // pred_region
      %1869 = vsyncadd [#allocation3], 16
    $region1199: #{word_att_forward_padded.1} parent=1 // pred_fallthru
      _
    %s1870 = sld [smem:[#allocation4 + $0x27]]
    %s1871 = scalar_lea.vmem %s1, %s1870
    %s1872 = scalar_lea.vmem [#allocation2], 39
    %p1874 = scmp.lt.u32.totalorder 1, 8
    %p1875 = pneg %p1874
    // Predicated region
    $region1200: #{word_att_forward_padded.1} parent=1 // pred_check
      _
    $region1201: #{word_att_forward_padded.1} parent=1 // pred_check_branch
      %1877 = sbr.rel (%p1874) target = $region1203
    $region1202: #{word_att_forward_padded.1} parent=1 // pred_region
      %s1892 = sand.u32 1, 7
      %p1893 = scmp.eq.s32.totalorder %s1892, 0
      %p1894 = pneg %p1893
      // Predicated region
      $region1215: #{word_att_forward_padded.1} parent=1202 // pred_check
        _
      $region1216: #{word_att_forward_padded.1} parent=1202 // pred_check_branch
        %1896 = sbr.rel (%p1893) target = $region1218
      $region1217: #{word_att_forward_padded.1} parent=1202 // pred_region
        %s1897 = sand.u32 1, 7
        %s1898 = ssub.s32 1, %s1897
        %s1899 = scalar_lea.vmem %s1871, %s1898
        %s1900 = ssub.s32 1, %s1897
        %s1901 = scalar_lea.vmem %s1872, %s1900 [#allocation2]
        %s1902 = sshllo.u32 0, %s1897
        loop: start=0, step=1, limit=1
        $region1219: #{word_att_forward_padded.1} parent=1217 // loop_pre_header
          _
        $region1220: #{word_att_forward_padded.1} parent=1217 // loop_header
          %s1904 = sphi 0, %s1908
          %p1905 = scmp.ge.s32.totalorder %s1904, 1
          %s1909 = sphi %s1899, %s1899
          %s1910 = sphi %s1901, %s1901
        $region1221: #{word_att_forward_padded.1} parent=1217 // loop_header_branch
          %1907 = sbr.rel (%p1905) target = $region1225
        $region1222: #{word_att_forward_padded.1} parent=1217 // loop_body
          %v1911 = vld [vmem:[%s1909] sm:%s1902]
          %1912 = vst [vmem:[%s1910] sm:%s1902] %v1911
        $region1223: #{word_att_forward_padded.1} parent=1217 // loop_footer
          %s1908 = sadd.s32 1, %s1904
        $region1224: #{word_att_forward_padded.1} parent=1217 // loop_footer_branch
          %1903 = sbr.rel target = $region1220
        $region1225: #{word_att_forward_padded.1} parent=1217 // loop_exit
          _
      $region1218: #{word_att_forward_padded.1} parent=1202 // pred_fallthru
        _
    $region1203: #{word_att_forward_padded.1} parent=1 // pred_fallthru
      _
    // Predicated region
    $region1204: #{word_att_forward_padded.1} parent=1 // pred_check
      %p1878 = pneg %p1874
    $region1205: #{word_att_forward_padded.1} parent=1 // pred_check_branch
      %1880 = sbr.rel (%p1878) target = $region1207
    $region1206: #{word_att_forward_padded.1} parent=1 // pred_region
      %s1881 = sshllo.u32 0, 1
      loop: start=0, step=1, limit=1
      $region1208: #{word_att_forward_padded.1} parent=1206 // loop_pre_header
        _
      $region1209: #{word_att_forward_padded.1} parent=1206 // loop_header
        %s1883 = sphi 0, %s1887
        %p1884 = scmp.ge.s32.totalorder %s1883, 1
        %s1888 = sphi %s1871, %s1871
        %s1889 = sphi %s1872, %s1872
      $region1210: #{word_att_forward_padded.1} parent=1206 // loop_header_branch
        %1886 = sbr.rel (%p1884) target = $region1214
      $region1211: #{word_att_forward_padded.1} parent=1206 // loop_body
        %v1890 = vld [vmem:[%s1888] sm:%s1881]
        %1891 = vst [vmem:[%s1889] sm:%s1881] %v1890
      $region1212: #{word_att_forward_padded.1} parent=1206 // loop_footer
        %s1887 = sadd.s32 1, %s1883
      $region1213: #{word_att_forward_padded.1} parent=1206 // loop_footer_branch
        %1882 = sbr.rel target = $region1209
      $region1214: #{word_att_forward_padded.1} parent=1206 // loop_exit
        _
    $region1207: #{word_att_forward_padded.1} parent=1 // pred_fallthru
      _
    // Predicated region
    $region1226: #{word_att_forward_padded.1} parent=1 // pred_check
      _
    $region1227: #{word_att_forward_padded.1} parent=1 // pred_check_branch
      %1915 = sbr.rel (0) target = $region1229
    $region1228: #{word_att_forward_padded.1} parent=1 // pred_region
      %1916 = vsyncadd [#allocation3], 16
    $region1229: #{word_att_forward_padded.1} parent=1 // pred_fallthru
      _
    %s1917 = sld [smem:[#allocation4]]
    %s1918 = smul.u32 1, 1
    %s1919 = sshll.u32 %s1918, 4
    %1920 = dma.done [#allocation3], %s1919
    %s1921 = sld [smem:[#allocation4 + $0x1]]
    %s1922 = sshll.u32 %s1918, 4
    %1923 = dma.done [#allocation3], %s1922
    %s1924 = sld [smem:[#allocation4 + $0x2]]
    %s1925 = sshll.u32 %s1918, 4
    %1926 = dma.done [#allocation3], %s1925
    %s1927 = sld [smem:[#allocation4 + $0x3]]
    %s1928 = sshll.u32 %s1918, 4
    %1929 = dma.done [#allocation3], %s1928
    %s1930 = sld [smem:[#allocation4 + $0x4]]
    %s1931 = sshll.u32 %s1918, 4
    %1932 = dma.done [#allocation3], %s1931
    %s1933 = sld [smem:[#allocation4 + $0x5]]
    %s1934 = sshll.u32 %s1918, 4
    %1935 = dma.done [#allocation3], %s1934
    %s1936 = sld [smem:[#allocation4 + $0x6]]
    %s1937 = sshll.u32 %s1918, 4
    %1938 = dma.done [#allocation3], %s1937
    %s1939 = sld [smem:[#allocation4 + $0x7]]
    %s1940 = sshll.u32 %s1918, 4
    %1941 = dma.done [#allocation3], %s1940
    %s1942 = sld [smem:[#allocation4 + $0x8]]
    %s1943 = sshll.u32 %s1918, 4
    %1944 = dma.done [#allocation3], %s1943
    %s1945 = sld [smem:[#allocation4 + $0x9]]
    %s1946 = sshll.u32 %s1918, 4
    %1947 = dma.done [#allocation3], %s1946
    %s1948 = sld [smem:[#allocation4 + $0xa]]
    %s1949 = sshll.u32 %s1918, 4
    %1950 = dma.done [#allocation3], %s1949
    %s1951 = sld [smem:[#allocation4 + $0xb]]
    %s1952 = sshll.u32 %s1918, 4
    %1953 = dma.done [#allocation3], %s1952
    %s1954 = sld [smem:[#allocation4 + $0xc]]
    %s1955 = sshll.u32 %s1918, 4
    %1956 = dma.done [#allocation3], %s1955
    %s1957 = sld [smem:[#allocation4 + $0xd]]
    %s1958 = sshll.u32 %s1918, 4
    %1959 = dma.done [#allocation3], %s1958
    %s1960 = sld [smem:[#allocation4 + $0xe]]
    %s1961 = sshll.u32 %s1918, 4
    %1962 = dma.done [#allocation3], %s1961
    %s1963 = sld [smem:[#allocation4 + $0xf]]
    %s1964 = sshll.u32 %s1918, 4
    %1965 = dma.done [#allocation3], %s1964
    %s1966 = sld [smem:[#allocation4 + $0x10]]
    %s1967 = sshll.u32 %s1918, 4
    %1968 = dma.done [#allocation3], %s1967
    %s1969 = sld [smem:[#allocation4 + $0x11]]
    %s1970 = sshll.u32 %s1918, 4
    %1971 = dma.done [#allocation3], %s1970
    %s1972 = sld [smem:[#allocation4 + $0x12]]
    %s1973 = sshll.u32 %s1918, 4
    %1974 = dma.done [#allocation3], %s1973
    %s1975 = sld [smem:[#allocation4 + $0x13]]
    %s1976 = sshll.u32 %s1918, 4
    %1977 = dma.done [#allocation3], %s1976
    %s1978 = sld [smem:[#allocation4 + $0x14]]
    %s1979 = sshll.u32 %s1918, 4
    %1980 = dma.done [#allocation3], %s1979
    %s1981 = sld [smem:[#allocation4 + $0x15]]
    %s1982 = sshll.u32 %s1918, 4
    %1983 = dma.done [#allocation3], %s1982
    %s1984 = sld [smem:[#allocation4 + $0x16]]
    %s1985 = sshll.u32 %s1918, 4
    %1986 = dma.done [#allocation3], %s1985
    %s1987 = sld [smem:[#allocation4 + $0x17]]
    %s1988 = sshll.u32 %s1918, 4
    %1989 = dma.done [#allocation3], %s1988
    %s1990 = sld [smem:[#allocation4 + $0x18]]
    %s1991 = sshll.u32 %s1918, 4
    %1992 = dma.done [#allocation3], %s1991
    %s1993 = sld [smem:[#allocation4 + $0x19]]
    %s1994 = sshll.u32 %s1918, 4
    %1995 = dma.done [#allocation3], %s1994
    %s1996 = sld [smem:[#allocation4 + $0x1a]]
    %s1997 = sshll.u32 %s1918, 4
    %1998 = dma.done [#allocation3], %s1997
    %s1999 = sld [smem:[#allocation4 + $0x1b]]
    %s2000 = sshll.u32 %s1918, 4
    %2001 = dma.done [#allocation3], %s2000
    %s2002 = sld [smem:[#allocation4 + $0x1c]]
    %s2003 = sshll.u32 %s1918, 4
    %2004 = dma.done [#allocation3], %s2003
    %s2005 = sld [smem:[#allocation4 + $0x1d]]
    %s2006 = sshll.u32 %s1918, 4
    %2007 = dma.done [#allocation3], %s2006
    %s2008 = sld [smem:[#allocation4 + $0x1e]]
    %s2009 = sshll.u32 %s1918, 4
    %2010 = dma.done [#allocation3], %s2009
    %s2011 = sld [smem:[#allocation4 + $0x1f]]
    %s2012 = sshll.u32 %s1918, 4
    %2013 = dma.done [#allocation3], %s2012
    %s2014 = sld [smem:[#allocation4 + $0x20]]
    %s2015 = sshll.u32 %s1918, 4
    %2016 = dma.done [#allocation3], %s2015
    %s2017 = sld [smem:[#allocation4 + $0x21]]
    %s2018 = sshll.u32 %s1918, 4
    %2019 = dma.done [#allocation3], %s2018
    %s2020 = sld [smem:[#allocation4 + $0x22]]
    %s2021 = sshll.u32 %s1918, 4
    %2022 = dma.done [#allocation3], %s2021
    %s2023 = sld [smem:[#allocation4 + $0x23]]
    %s2024 = sshll.u32 %s1918, 4
    %2025 = dma.done [#allocation3], %s2024
    %s2026 = sld [smem:[#allocation4 + $0x24]]
    %s2027 = sshll.u32 %s1918, 4
    %2028 = dma.done [#allocation3], %s2027
    %s2029 = sld [smem:[#allocation4 + $0x25]]
    %s2030 = sshll.u32 %s1918, 4
    %2031 = dma.done [#allocation3], %s2030
    %s2032 = sld [smem:[#allocation4 + $0x26]]
    %s2033 = sshll.u32 %s1918, 4
    %2034 = dma.done [#allocation3], %s2033
    %s2035 = sld [smem:[#allocation4 + $0x27]]
    %s2036 = sshll.u32 %s1918, 4
    %2037 = dma.done [#allocation3], %s2036
    %v2038 = vld [vmem:[#allocation2] sm:$0xff]
    %v2039 = vld [vmem:[#allocation2 + $0x8] sm:$0xff]
    %v2040 = vld [vmem:[#allocation2 + $0x10] sm:$0xff]
    %v2041 = vld [vmem:[#allocation2 + $0x18] sm:$0xff]
    %v2042 = vld [vmem:[%s2] sm:$0xff]
    %v2043 = vld [vmem:[%s2 + $0x8] sm:$0xff]
    %v2044 = vld [vmem:[%s2 + $0x10] sm:$0xff]
    %v2045 = vld [vmem:[%s2 + $0x18] sm:$0xff]
    %v2046 = vld [vmem:[%s2 + $0x20] sm:$0xff]
    %v2047 = vld [vmem:[%s2 + $0x28] sm:$0xff]
    %v2048 = vld [vmem:[%s2 + $0x30] sm:$0xff]
    %v2049 = vld [vmem:[%s2 + $0x38] sm:$0xff]
    %v2050 = vld [vmem:[#allocation2 + $0x2] sm:$0xff]
    %v2051 = vld [vmem:[#allocation2 + $0xa] sm:$0xff]
    %v2052 = vld [vmem:[#allocation2 + $0x12] sm:$0xff]
    %v2053 = vld [vmem:[#allocation2 + $0x1a] sm:$0xff]
    %s2054 = scalar_lea.vmem %s2, 64
    %v2055 = vld [vmem:[%s2054] sm:$0xff]
    %v2056 = vld [vmem:[%s2054 + $0x8] sm:$0xff]
    %v2057 = vld [vmem:[%s2054 + $0x10] sm:$0xff]
    %v2058 = vld [vmem:[%s2054 + $0x18] sm:$0xff]
    %v2059 = vld [vmem:[%s2054 + $0x20] sm:$0xff]
    %v2060 = vld [vmem:[%s2054 + $0x28] sm:$0xff]
    %v2061 = vld [vmem:[%s2054 + $0x30] sm:$0xff]
    %v2062 = vld [vmem:[%s2054 + $0x38] sm:$0xff]
    %vm2063 = vcmask 523264
    %v2065 = vsel %vm2063, %v2050, 0
    %v2068 = vsel %vm2063, %v2051, 0
    %v2071 = vsel %vm2063, %v2052, 0
    %v2074 = vsel %vm2063, %v2053, 0
    %2076 = vmatprep.subr.mxu0 0.0
    %2077 = vmatpush1.msra.mxu0 %v2055
    %2078 = vmatprep.subr.mxu0 0.0
    %2079 = vmatpush1.msra.mxu0 %v2056
    %2080 = vmatprep.subr.mxu0 0.0
    %2081 = vmatpush1.msra.mxu0 %v2057
    %2082 = vmatprep.subr.mxu0 0.0
    %2083 = vmatpush1.msra.mxu0 %v2058
    %2084 = vmatprep.subr.mxu0 0.0
    %2085 = vmatpush1.msra.mxu0 %v2059
    %2086 = vmatprep.subr.mxu0 0.0
    %2087 = vmatpush1.msra.mxu0 %v2060
    %2088 = vmatprep.subr.mxu0 0.0
    %2089 = vmatpush1.msra.mxu0 %v2061
    %2090 = vmatprep.subr.mxu0 0.0
    %2091 = vmatpush1.msra.mxu0 %v2062
    %2092 = vmatprep.subr.mxu0 0.0
    %2093 = vmatpush1.msra.mxu0 0.0
    %2094 = vmatprep.subr.mxu0 0.0
    %2095 = vmatpush1.msra.mxu0 0.0
    %2096 = vmatprep.subr.mxu0 0.0
    %2097 = vmatpush1.msra.mxu0 0.0
    %2098 = vmatprep.subr.mxu0 0.0
    %2099 = vmatpush1.msra.mxu0 0.0
    %2100 = vmatprep.subr.mxu0 0.0
    %2101 = vmatpush1.msra.mxu0 0.0
    %2102 = vmatprep.subr.mxu0 0.0
    %2103 = vmatpush1.msra.mxu0 0.0
    %2104 = vmatprep.subr.mxu0 0.0
    %2105 = vmatpush1.msra.mxu0 0.0
    %2106 = vmatprep.subr.mxu0 0.0
    %2107 = vmatpush1.msra.mxu0 0.0
    %2108 = vmatprep.subr.mxu0 0.0
    %2109 = vmatpush1.msra.mxu0 0.0
    %2110 = vmatprep.subr.mxu0 0.0
    %2111 = vmatpush1.msra.mxu0 0.0
    %2112 = vmatprep.subr.mxu0 0.0
    %2113 = vmatpush1.msra.mxu0 0.0
    %2114 = vmatprep.subr.mxu0 0.0
    %2115 = vmatpush1.msra.mxu0 0.0
    %2116 = vmatprep.subr.mxu0 0.0
    %2117 = vmatpush1.msra.mxu0 0.0
    %2118 = vmatprep.subr.mxu0 0.0
    %2119 = vmatpush1.msra.mxu0 0.0
    %2120 = vmatprep.subr.mxu0 0.0
    %2121 = vmatpush1.msra.mxu0 0.0
    %2122 = vmatprep.subr.mxu0 0.0
    %2123 = vmatpush1.msra.mxu0 0.0
    %2124 = vmatprep.subr.mxu0 0.0
    %2125 = vmatpush1.msra.mxu0 0.0
    %2126 = vmatprep.subr.mxu0 0.0
    %2127 = vmatpush1.msra.mxu0 0.0
    %2128 = vmatprep.subr.mxu0 0.0
    %2129 = vmatpush1.msra.mxu0 0.0
    %2130 = vmatprep.subr.mxu0 0.0
    %2131 = vmatpush1.msra.mxu0 0.0
    %2132 = vmatprep.subr.mxu0 0.0
    %2133 = vmatpush1.msra.mxu0 0.0
    %2134 = vmatprep.subr.mxu0 0.0
    %2135 = vmatpush1.msra.mxu0 0.0
    %2136 = vmatprep.subr.mxu0 0.0
    %2137 = vmatpush1.msra.mxu0 0.0
    %2138 = vmatprep.subr.mxu0 0.0
    %2139 = vmatpush1.msra.mxu0 0.0
    %2140 = vmatprep.mubr.f32.mxu0 0.0
    %2141 = vmatmul.mubr.f32.gmra.mrb[0].mxu0 %v2065
    %v2142 = vpop.f32.mrb[0].mxu0
    %v2143 = vadd.f32 0.0, %v2142
    %v2144 = vpop.f32.mrb[0].mxu0
    %2145 = vmatprep.mubr.f32.mxu0 0.0
    %2146 = vmatmul.mubr.f32.gmra.mrb[0].mxu0 %v2068
    %v2147 = vpop.f32.mrb[0].mxu0
    %v2148 = vadd.f32 0.0, %v2147
    %v2149 = vpop.f32.mrb[0].mxu0
    %2150 = vmatprep.mubr.f32.mxu0 0.0
    %2151 = vmatmul.mubr.f32.gmra.mrb[0].mxu0 %v2071
    %v2152 = vpop.f32.mrb[0].mxu0
    %v2153 = vadd.f32 0.0, %v2152
    %v2154 = vpop.f32.mrb[0].mxu0
    %2155 = vmatprep.mubr.f32.mxu0 0.0
    %2156 = vmatmul.mubr.f32.gmra.mrb[0].mxu0 %v2074
    %v2157 = vpop.f32.mrb[0].mxu0
    %v2158 = vadd.f32 0.0, %v2157
    %v2159 = vpop.f32.mrb[0].mxu0
    %2160 = vdwg.mxu0
    %v2162 = vsel %vm2063, %v2038, 0
    %v2165 = vsel %vm2063, %v2039, 0
    %v2168 = vsel %vm2063, %v2040, 0
    %v2171 = vsel %vm2063, %v2041, 0
    %2173 = vmatprep.subr.mxu0 0.0
    %2174 = vmatpush1.msra.mxu0 %v2042
    %2175 = vmatprep.subr.mxu0 0.0
    %2176 = vmatpush1.msra.mxu0 %v2043
    %2177 = vmatprep.subr.mxu0 0.0
    %2178 = vmatpush1.msra.mxu0 %v2044
    %2179 = vmatprep.subr.mxu0 0.0
    %2180 = vmatpush1.msra.mxu0 %v2045
    %2181 = vmatprep.subr.mxu0 0.0
    %2182 = vmatpush1.msra.mxu0 %v2046
    %2183 = vmatprep.subr.mxu0 0.0
    %2184 = vmatpush1.msra.mxu0 %v2047
    %2185 = vmatprep.subr.mxu0 0.0
    %2186 = vmatpush1.msra.mxu0 %v2048
    %2187 = vmatprep.subr.mxu0 0.0
    %2188 = vmatpush1.msra.mxu0 %v2049
    %2189 = vmatprep.subr.mxu0 0.0
    %2190 = vmatpush1.msra.mxu0 0.0
    %2191 = vmatprep.subr.mxu0 0.0
    %2192 = vmatpush1.msra.mxu0 0.0
    %2193 = vmatprep.subr.mxu0 0.0
    %2194 = vmatpush1.msra.mxu0 0.0
    %2195 = vmatprep.subr.mxu0 0.0
    %2196 = vmatpush1.msra.mxu0 0.0
    %2197 = vmatprep.subr.mxu0 0.0
    %2198 = vmatpush1.msra.mxu0 0.0
    %2199 = vmatprep.subr.mxu0 0.0
    %2200 = vmatpush1.msra.mxu0 0.0
    %2201 = vmatprep.subr.mxu0 0.0
    %2202 = vmatpush1.msra.mxu0 0.0
    %2203 = vmatprep.subr.mxu0 0.0
    %2204 = vmatpush1.msra.mxu0 0.0
    %2205 = vmatprep.subr.mxu0 0.0
    %2206 = vmatpush1.msra.mxu0 0.0
    %2207 = vmatprep.subr.mxu0 0.0
    %2208 = vmatpush1.msra.mxu0 0.0
    %2209 = vmatprep.subr.mxu0 0.0
    %2210 = vmatpush1.msra.mxu0 0.0
    %2211 = vmatprep.subr.mxu0 0.0
    %2212 = vmatpush1.msra.mxu0 0.0
    %2213 = vmatprep.subr.mxu0 0.0
    %2214 = vmatpush1.msra.mxu0 0.0
    %2215 = vmatprep.subr.mxu0 0.0
    %2216 = vmatpush1.msra.mxu0 0.0
    %2217 = vmatprep.subr.mxu0 0.0
    %2218 = vmatpush1.msra.mxu0 0.0
    %2219 = vmatprep.subr.mxu0 0.0
    %2220 = vmatpush1.msra.mxu0 0.0
    %2221 = vmatprep.subr.mxu0 0.0
    %2222 = vmatpush1.msra.mxu0 0.0
    %2223 = vmatprep.subr.mxu0 0.0
    %2224 = vmatpush1.msra.mxu0 0.0
    %2225 = vmatprep.subr.mxu0 0.0
    %2226 = vmatpush1.msra.mxu0 0.0
    %2227 = vmatprep.subr.mxu0 0.0
    %2228 = vmatpush1.msra.mxu0 0.0
    %2229 = vmatprep.subr.mxu0 0.0
    %2230 = vmatpush1.msra.mxu0 0.0
    %2231 = vmatprep.subr.mxu0 0.0
    %2232 = vmatpush1.msra.mxu0 0.0
    %2233 = vmatprep.subr.mxu0 0.0
    %2234 = vmatpush1.msra.mxu0 0.0
    %2235 = vmatprep.subr.mxu0 0.0
    %2236 = vmatpush1.msra.mxu0 0.0
    %2237 = vmatprep.mubr.f32.mxu0 0.0
    %2238 = vmatmul.mubr.f32.gmra.mrb[0].mxu0 %v2162
    %v2239 = vpop.f32.mrb[0].mxu0
    %v2240 = vadd.f32 %v2143, %v2239
    %v2241 = vpop.f32.mrb[0].mxu0
    %2242 = vmatprep.mubr.f32.mxu0 0.0
    %2243 = vmatmul.mubr.f32.gmra.mrb[0].mxu0 %v2165
    %v2244 = vpop.f32.mrb[0].mxu0
    %v2245 = vadd.f32 %v2148, %v2244
    %v2246 = vpop.f32.mrb[0].mxu0
    %2247 = vmatprep.mubr.f32.mxu0 0.0
    %2248 = vmatmul.mubr.f32.gmra.mrb[0].mxu0 %v2168
    %v2249 = vpop.f32.mrb[0].mxu0
    %v2250 = vadd.f32 %v2153, %v2249
    %v2251 = vpop.f32.mrb[0].mxu0
    %2252 = vmatprep.mubr.f32.mxu0 0.0
    %2253 = vmatmul.mubr.f32.gmra.mrb[0].mxu0 %v2171
    %v2254 = vpop.f32.mrb[0].mxu0
    %v2255 = vadd.f32 %v2158, %v2254
    %v2256 = vpop.f32.mrb[0].mxu0
    %2257 = vdwg.mxu0
    %v2258 = vld [vmem:[#allocation2 + $0x4] sm:$0xff]
    %v2259 = vld [vmem:[#allocation2 + $0xc] sm:$0xff]
    %v2260 = vld [vmem:[#allocation2 + $0x14] sm:$0xff]
    %v2261 = vld [vmem:[#allocation2 + $0x1c] sm:$0xff]
    %s2262 = scalar_lea.vmem %s2, 128
    %v2263 = vld [vmem:[%s2262] sm:$0xff]
    %v2264 = vld [vmem:[%s2262 + $0x8] sm:$0xff]
    %v2265 = vld [vmem:[%s2262 + $0x10] sm:$0xff]
    %v2266 = vld [vmem:[%s2262 + $0x18] sm:$0xff]
    %v2267 = vld [vmem:[%s2262 + $0x20] sm:$0xff]
    %v2268 = vld [vmem:[%s2262 + $0x28] sm:$0xff]
    %v2269 = vld [vmem:[%s2262 + $0x30] sm:$0xff]
    %v2270 = vld [vmem:[%s2262 + $0x38] sm:$0xff]
    %v2272 = vsel %vm2063, %v2258, 0
    %v2275 = vsel %vm2063, %v2259, 0
    %v2278 = vsel %vm2063, %v2260, 0
    %v2281 = vsel %vm2063, %v2261, 0
    %2283 = vmatprep.subr.mxu0 0.0
    %2284 = vmatpush1.msra.mxu0 %v2263
    %2285 = vmatprep.subr.mxu0 0.0
    %2286 = vmatpush1.msra.mxu0 %v2264
    %2287 = vmatprep.subr.mxu0 0.0
    %2288 = vmatpush1.msra.mxu0 %v2265
    %2289 = vmatprep.subr.mxu0 0.0
    %2290 = vmatpush1.msra.mxu0 %v2266
    %2291 = vmatprep.subr.mxu0 0.0
    %2292 = vmatpush1.msra.mxu0 %v2267
    %2293 = vmatprep.subr.mxu0 0.0
    %2294 = vmatpush1.msra.mxu0 %v2268
    %2295 = vmatprep.subr.mxu0 0.0
    %2296 = vmatpush1.msra.mxu0 %v2269
    %2297 = vmatprep.subr.mxu0 0.0
    %2298 = vmatpush1.msra.mxu0 %v2270
    %2299 = vmatprep.subr.mxu0 0.0
    %2300 = vmatpush1.msra.mxu0 0.0
    %2301 = vmatprep.subr.mxu0 0.0
    %2302 = vmatpush1.msra.mxu0 0.0
    %2303 = vmatprep.subr.mxu0 0.0
    %2304 = vmatpush1.msra.mxu0 0.0
    %2305 = vmatprep.subr.mxu0 0.0
    %2306 = vmatpush1.msra.mxu0 0.0
    %2307 = vmatprep.subr.mxu0 0.0
    %2308 = vmatpush1.msra.mxu0 0.0
    %2309 = vmatprep.subr.mxu0 0.0
    %2310 = vmatpush1.msra.mxu0 0.0
    %2311 = vmatprep.subr.mxu0 0.0
    %2312 = vmatpush1.msra.mxu0 0.0
    %2313 = vmatprep.subr.mxu0 0.0
    %2314 = vmatpush1.msra.mxu0 0.0
    %2315 = vmatprep.subr.mxu0 0.0
    %2316 = vmatpush1.msra.mxu0 0.0
    %2317 = vmatprep.subr.mxu0 0.0
    %2318 = vmatpush1.msra.mxu0 0.0
    %2319 = vmatprep.subr.mxu0 0.0
    %2320 = vmatpush1.msra.mxu0 0.0
    %2321 = vmatprep.subr.mxu0 0.0
    %2322 = vmatpush1.msra.mxu0 0.0
    %2323 = vmatprep.subr.mxu0 0.0
    %2324 = vmatpush1.msra.mxu0 0.0
    %2325 = vmatprep.subr.mxu0 0.0
    %2326 = vmatpush1.msra.mxu0 0.0
    %2327 = vmatprep.subr.mxu0 0.0
    %2328 = vmatpush1.msra.mxu0 0.0
    %2329 = vmatprep.subr.mxu0 0.0
    %2330 = vmatpush1.msra.mxu0 0.0
    %2331 = vmatprep.subr.mxu0 0.0
    %2332 = vmatpush1.msra.mxu0 0.0
    %2333 = vmatprep.subr.mxu0 0.0
    %2334 = vmatpush1.msra.mxu0 0.0
    %2335 = vmatprep.subr.mxu0 0.0
    %2336 = vmatpush1.msra.mxu0 0.0
    %2337 = vmatprep.subr.mxu0 0.0
    %2338 = vmatpush1.msra.mxu0 0.0
    %2339 = vmatprep.subr.mxu0 0.0
    %2340 = vmatpush1.msra.mxu0 0.0
    %2341 = vmatprep.subr.mxu0 0.0
    %2342 = vmatpush1.msra.mxu0 0.0
    %2343 = vmatprep.subr.mxu0 0.0
    %2344 = vmatpush1.msra.mxu0 0.0
    %2345 = vmatprep.subr.mxu0 0.0
    %2346 = vmatpush1.msra.mxu0 0.0
    %2347 = vmatprep.mubr.f32.mxu0 0.0
    %2348 = vmatmul.mubr.f32.gmra.mrb[0].mxu0 %v2272
    %v2349 = vpop.f32.mrb[0].mxu0
    %v2350 = vadd.f32 0.0, %v2349
    %v2351 = vpop.f32.mrb[0].mxu0
    %2352 = vmatprep.mubr.f32.mxu0 0.0
    %2353 = vmatmul.mubr.f32.gmra.mrb[0].mxu0 %v2275
    %v2354 = vpop.f32.mrb[0].mxu0
    %v2355 = vadd.f32 0.0, %v2354
    %v2356 = vpop.f32.mrb[0].mxu0
    %2357 = vmatprep.mubr.f32.mxu0 0.0
    %2358 = vmatmul.mubr.f32.gmra.mrb[0].mxu0 %v2278
    %v2359 = vpop.f32.mrb[0].mxu0
    %v2360 = vadd.f32 0.0, %v2359
    %v2361 = vpop.f32.mrb[0].mxu0
    %2362 = vmatprep.mubr.f32.mxu0 0.0
    %2363 = vmatmul.mubr.f32.gmra.mrb[0].mxu0 %v2281
    %v2364 = vpop.f32.mrb[0].mxu0
    %v2365 = vadd.f32 0.0, %v2364
    %v2366 = vpop.f32.mrb[0].mxu0
    %2367 = vdwg.mxu0
    %v2368 = vadd.f32 %v2240, %v2350
    %v2369 = vadd.f32 %v2245, %v2355
    %v2370 = vadd.f32 %v2250, %v2360
    %v2371 = vadd.f32 %v2255, %v2365
    %v2372 = vld [vmem:[#allocation2 + $0x6] sm:$0xff]
    %v2373 = vld [vmem:[#allocation2 + $0xe] sm:$0xff]
    %v2374 = vld [vmem:[#allocation2 + $0x16] sm:$0xff]
    %v2375 = vld [vmem:[#allocation2 + $0x1e] sm:$0xff]
    %s2376 = scalar_lea.vmem %s2, 192
    %v2377 = vld [vmem:[%s2376] sm:$0xff]
    %v2378 = vld [vmem:[%s2376 + $0x8] sm:$0xff]
    %v2379 = vld [vmem:[%s2376 + $0x10] sm:$0xff]
    %v2380 = vld [vmem:[%s2376 + $0x18] sm:$0xff]
    %v2381 = vld [vmem:[%s2376 + $0x20] sm:$0xff]
    %v2382 = vld [vmem:[%s2376 + $0x28] sm:$0xff]
    %v2383 = vld [vmem:[%s2376 + $0x30] sm:$0xff]
    %v2384 = vld [vmem:[%s2376 + $0x38] sm:$0xff]
    %v2386 = vsel %vm2063, %v2372, 0
    %v2389 = vsel %vm2063, %v2373, 0
    %v2392 = vsel %vm2063, %v2374, 0
    %v2395 = vsel %vm2063, %v2375, 0
    %2397 = vmatprep.subr.mxu0 0.0
    %2398 = vmatpush1.msra.mxu0 %v2377
    %2399 = vmatprep.subr.mxu0 0.0
    %2400 = vmatpush1.msra.mxu0 %v2378
    %2401 = vmatprep.subr.mxu0 0.0
    %2402 = vmatpush1.msra.mxu0 %v2379
    %2403 = vmatprep.subr.mxu0 0.0
    %2404 = vmatpush1.msra.mxu0 %v2380
    %2405 = vmatprep.subr.mxu0 0.0
    %2406 = vmatpush1.msra.mxu0 %v2381
    %2407 = vmatprep.subr.mxu0 0.0
    %2408 = vmatpush1.msra.mxu0 %v2382
    %2409 = vmatprep.subr.mxu0 0.0
    %2410 = vmatpush1.msra.mxu0 %v2383
    %2411 = vmatprep.subr.mxu0 0.0
    %2412 = vmatpush1.msra.mxu0 %v2384
    %2413 = vmatprep.subr.mxu0 0.0
    %2414 = vmatpush1.msra.mxu0 0.0
    %2415 = vmatprep.subr.mxu0 0.0
    %2416 = vmatpush1.msra.mxu0 0.0
    %2417 = vmatprep.subr.mxu0 0.0
    %2418 = vmatpush1.msra.mxu0 0.0
    %2419 = vmatprep.subr.mxu0 0.0
    %2420 = vmatpush1.msra.mxu0 0.0
    %2421 = vmatprep.subr.mxu0 0.0
    %2422 = vmatpush1.msra.mxu0 0.0
    %2423 = vmatprep.subr.mxu0 0.0
    %2424 = vmatpush1.msra.mxu0 0.0
    %2425 = vmatprep.subr.mxu0 0.0
    %2426 = vmatpush1.msra.mxu0 0.0
    %2427 = vmatprep.subr.mxu0 0.0
    %2428 = vmatpush1.msra.mxu0 0.0
    %2429 = vmatprep.subr.mxu0 0.0
    %2430 = vmatpush1.msra.mxu0 0.0
    %2431 = vmatprep.subr.mxu0 0.0
    %2432 = vmatpush1.msra.mxu0 0.0
    %2433 = vmatprep.subr.mxu0 0.0
    %2434 = vmatpush1.msra.mxu0 0.0
    %2435 = vmatprep.subr.mxu0 0.0
    %2436 = vmatpush1.msra.mxu0 0.0
    %2437 = vmatprep.subr.mxu0 0.0
    %2438 = vmatpush1.msra.mxu0 0.0
    %2439 = vmatprep.subr.mxu0 0.0
    %2440 = vmatpush1.msra.mxu0 0.0
    %2441 = vmatprep.subr.mxu0 0.0
    %2442 = vmatpush1.msra.mxu0 0.0
    %2443 = vmatprep.subr.mxu0 0.0
    %2444 = vmatpush1.msra.mxu0 0.0
    %2445 = vmatprep.subr.mxu0 0.0
    %2446 = vmatpush1.msra.mxu0 0.0
    %2447 = vmatprep.subr.mxu0 0.0
    %2448 = vmatpush1.msra.mxu0 0.0
    %2449 = vmatprep.subr.mxu0 0.0
    %2450 = vmatpush1.msra.mxu0 0.0
    %2451 = vmatprep.subr.mxu0 0.0
    %2452 = vmatpush1.msra.mxu0 0.0
    %2453 = vmatprep.subr.mxu0 0.0
    %2454 = vmatpush1.msra.mxu0 0.0
    %2455 = vmatprep.subr.mxu0 0.0
    %2456 = vmatpush1.msra.mxu0 0.0
    %2457 = vmatprep.subr.mxu0 0.0
    %2458 = vmatpush1.msra.mxu0 0.0
    %2459 = vmatprep.subr.mxu0 0.0
    %2460 = vmatpush1.msra.mxu0 0.0
    %2461 = vmatprep.mubr.f32.mxu0 0.0
    %2462 = vmatmul.mubr.f32.gmra.mrb[0].mxu0 %v2386
    %v2463 = vpop.f32.mrb[0].mxu0
    %v2464 = vadd.f32 0.0, %v2463
    %v2465 = vpop.f32.mrb[0].mxu0
    %2466 = vmatprep.mubr.f32.mxu0 0.0
    %2467 = vmatmul.mubr.f32.gmra.mrb[0].mxu0 %v2389
    %v2468 = vpop.f32.mrb[0].mxu0
    %v2469 = vadd.f32 0.0, %v2468
    %v2470 = vpop.f32.mrb[0].mxu0
    %2471 = vmatprep.mubr.f32.mxu0 0.0
    %2472 = vmatmul.mubr.f32.gmra.mrb[0].mxu0 %v2392
    %v2473 = vpop.f32.mrb[0].mxu0
    %v2474 = vadd.f32 0.0, %v2473
    %v2475 = vpop.f32.mrb[0].mxu0
    %2476 = vmatprep.mubr.f32.mxu0 0.0
    %2477 = vmatmul.mubr.f32.gmra.mrb[0].mxu0 %v2395
    %v2478 = vpop.f32.mrb[0].mxu0
    %v2479 = vadd.f32 0.0, %v2478
    %v2480 = vpop.f32.mrb[0].mxu0
    %2481 = vdwg.mxu0
    %v2482 = vadd.f32 %v2368, %v2464
    %v2483 = vadd.f32 %v2369, %v2469
    %v2484 = vadd.f32 %v2370, %v2474
    %v2485 = vadd.f32 %v2371, %v2479
    %v2486 = vld [vmem:[#allocation2 + $0x8] sm:$0xff]
    %v2487 = vld [vmem:[#allocation2 + $0x10] sm:$0xff]
    %v2488 = vld [vmem:[#allocation2 + $0x18] sm:$0xff]
    %v2489 = vld [vmem:[#allocation2 + $0x20] sm:$0xff]
    %s2490 = scalar_lea.vmem %s2, 256
    %v2491 = vld [vmem:[%s2490] sm:$0xff]
    %v2492 = vld [vmem:[%s2490 + $0x8] sm:$0xff]
    %v2493 = vld [vmem:[%s2490 + $0x10] sm:$0xff]
    %v2494 = vld [vmem:[%s2490 + $0x18] sm:$0xff]
    %v2495 = vld [vmem:[%s2490 + $0x20] sm:$0xff]
    %v2496 = vld [vmem:[%s2490 + $0x28] sm:$0xff]
    %v2497 = vld [vmem:[%s2490 + $0x30] sm:$0xff]
    %v2498 = vld [vmem:[%s2490 + $0x38] sm:$0xff]
    %v2500 = vsel %vm2063, %v2486, 0
    %v2503 = vsel %vm2063, %v2487, 0
    %v2506 = vsel %vm2063, %v2488, 0
    %v2509 = vsel %vm2063, %v2489, 0
    %2511 = vmatprep.subr.mxu0 0.0
    %2512 = vmatpush1.msra.mxu0 %v2491
    %2513 = vmatprep.subr.mxu0 0.0
    %2514 = vmatpush1.msra.mxu0 %v2492
    %2515 = vmatprep.subr.mxu0 0.0
    %2516 = vmatpush1.msra.mxu0 %v2493
    %2517 = vmatprep.subr.mxu0 0.0
    %2518 = vmatpush1.msra.mxu0 %v2494
    %2519 = vmatprep.subr.mxu0 0.0
    %2520 = vmatpush1.msra.mxu0 %v2495
    %2521 = vmatprep.subr.mxu0 0.0
    %2522 = vmatpush1.msra.mxu0 %v2496
    %2523 = vmatprep.subr.mxu0 0.0
    %2524 = vmatpush1.msra.mxu0 %v2497
    %2525 = vmatprep.subr.mxu0 0.0
    %2526 = vmatpush1.msra.mxu0 %v2498
    %2527 = vmatprep.subr.mxu0 0.0
    %2528 = vmatpush1.msra.mxu0 0.0
    %2529 = vmatprep.subr.mxu0 0.0
    %2530 = vmatpush1.msra.mxu0 0.0
    %2531 = vmatprep.subr.mxu0 0.0
    %2532 = vmatpush1.msra.mxu0 0.0
    %2533 = vmatprep.subr.mxu0 0.0
    %2534 = vmatpush1.msra.mxu0 0.0
    %2535 = vmatprep.subr.mxu0 0.0
    %2536 = vmatpush1.msra.mxu0 0.0
    %2537 = vmatprep.subr.mxu0 0.0
    %2538 = vmatpush1.msra.mxu0 0.0
    %2539 = vmatprep.subr.mxu0 0.0
    %2540 = vmatpush1.msra.mxu0 0.0
    %2541 = vmatprep.subr.mxu0 0.0
    %2542 = vmatpush1.msra.mxu0 0.0
    %2543 = vmatprep.subr.mxu0 0.0
    %2544 = vmatpush1.msra.mxu0 0.0
    %2545 = vmatprep.subr.mxu0 0.0
    %2546 = vmatpush1.msra.mxu0 0.0
    %2547 = vmatprep.subr.mxu0 0.0
    %2548 = vmatpush1.msra.mxu0 0.0
    %2549 = vmatprep.subr.mxu0 0.0
    %2550 = vmatpush1.msra.mxu0 0.0
    %2551 = vmatprep.subr.mxu0 0.0
    %2552 = vmatpush1.msra.mxu0 0.0
    %2553 = vmatprep.subr.mxu0 0.0
    %2554 = vmatpush1.msra.mxu0 0.0
    %2555 = vmatprep.subr.mxu0 0.0
    %2556 = vmatpush1.msra.mxu0 0.0
    %2557 = vmatprep.subr.mxu0 0.0
    %2558 = vmatpush1.msra.mxu0 0.0
    %2559 = vmatprep.subr.mxu0 0.0
    %2560 = vmatpush1.msra.mxu0 0.0
    %2561 = vmatprep.subr.mxu0 0.0
    %2562 = vmatpush1.msra.mxu0 0.0
    %2563 = vmatprep.subr.mxu0 0.0
    %2564 = vmatpush1.msra.mxu0 0.0
    %2565 = vmatprep.subr.mxu0 0.0
    %2566 = vmatpush1.msra.mxu0 0.0
    %2567 = vmatprep.subr.mxu0 0.0
    %2568 = vmatpush1.msra.mxu0 0.0
    %2569 = vmatprep.subr.mxu0 0.0
    %2570 = vmatpush1.msra.mxu0 0.0
    %2571 = vmatprep.subr.mxu0 0.0
    %2572 = vmatpush1.msra.mxu0 0.0
    %2573 = vmatprep.subr.mxu0 0.0
    %2574 = vmatpush1.msra.mxu0 0.0
    %2575 = vmatprep.mubr.f32.mxu0 0.0
    %2576 = vmatmul.mubr.f32.gmra.mrb[0].mxu0 %v2500
    %v2577 = vpop.f32.mrb[0].mxu0
    %v2578 = vadd.f32 0.0, %v2577
    %v2579 = vpop.f32.mrb[0].mxu0
    %2580 = vmatprep.mubr.f32.mxu0 0.0
    %2581 = vmatmul.mubr.f32.gmra.mrb[0].mxu0 %v2503
    %v2582 = vpop.f32.mrb[0].mxu0
    %v2583 = vadd.f32 0.0, %v2582
    %v2584 = vpop.f32.mrb[0].mxu0
    %2585 = vmatprep.mubr.f32.mxu0 0.0
    %2586 = vmatmul.mubr.f32.gmra.mrb[0].mxu0 %v2506
    %v2587 = vpop.f32.mrb[0].mxu0
    %v2588 = vadd.f32 0.0, %v2587
    %v2589 = vpop.f32.mrb[0].mxu0
    %2590 = vmatprep.mubr.f32.mxu0 0.0
    %2591 = vmatmul.mubr.f32.gmra.mrb[0].mxu0 %v2509
    %v2592 = vpop.f32.mrb[0].mxu0
    %v2593 = vadd.f32 0.0, %v2592
    %v2594 = vpop.f32.mrb[0].mxu0
    %2595 = vdwg.mxu0
    %v2596 = vadd.f32 %v2482, %v2578
    %v2597 = vadd.f32 %v2483, %v2583
    %v2598 = vadd.f32 %v2484, %v2588
    %v2599 = vadd.f32 %v2485, %v2593
    %v2600 = vld [vmem:[%s3] sm:$0x1]
    %v2602 = vlaneseq
    %v2603 = vshrl.u32 %v2602, 7
    %v2604 = vsub.s32 0, %v2603
    %v2605 = vrot.slane %v2600, %v2604
    %v2607 = vadd.f32 %v2596, %v2605
    %v2608 = vadd.f32 %v2597, %v2605
    %v2609 = vadd.f32 %v2598, %v2605
    %v2610 = vadd.f32 %v2599, %v2605
    %v2611 = vld [vmem:[%s4] sm:$0xff]
    %v2612 = vld [vmem:[%s4 + $0x8] sm:$0xff]
    %v2613 = vld [vmem:[%s4 + $0x10] sm:$0xff]
    %v2614 = vld [vmem:[%s4 + $0x18] sm:$0xff]
    %v2615 = vld [vmem:[%s4 + $0x20] sm:$0xff]
    %v2616 = vld [vmem:[%s4 + $0x28] sm:$0xff]
    %v2617 = vld [vmem:[%s4 + $0x30] sm:$0xff]
    %v2618 = vld [vmem:[%s4 + $0x38] sm:$0xff]
    %v2619 = vld [vmem:[%s4 + $0x40] sm:$0xff]
    %v2620 = vld [vmem:[%s4 + $0x48] sm:$0xff]
    %v2621 = vld [vmem:[%s4 + $0x50] sm:$0xff]
    %v2622 = vld [vmem:[%s4 + $0x58] sm:$0xff]
    %v2623 = vld [vmem:[%s4 + $0x60] sm:$0xff]
    %v2624 = vld [vmem:[%s4 + $0x68] sm:$0xff]
    %v2625 = vld [vmem:[%s4 + $0x70] sm:$0xff]
    %v2626 = vld [vmem:[%s4 + $0x78] sm:$0xff]
    %v2627 = vld [vmem:[%s5] sm:$0x1]
    %v2629 = vlaneseq
    %v2630 = vshrl.u32 %v2629, 7
    %v2631 = vsub.s32 0, %v2630
    %v2632 = vrot.slane %v2627, %v2631
    %2634 = vmatprep.subr.mxu0 0.0
    %2635 = vmatpush1.msra.mxu0 %v2611
    %2636 = vmatprep.subr.mxu0 0.0
    %2637 = vmatpush1.msra.mxu0 %v2612
    %2638 = vmatprep.subr.mxu0 0.0
    %2639 = vmatpush1.msra.mxu0 %v2613
    %2640 = vmatprep.subr.mxu0 0.0
    %2641 = vmatpush1.msra.mxu0 %v2614
    %2642 = vmatprep.subr.mxu0 0.0
    %2643 = vmatpush1.msra.mxu0 %v2615
    %2644 = vmatprep.subr.mxu0 0.0
    %2645 = vmatpush1.msra.mxu0 %v2616
    %2646 = vmatprep.subr.mxu0 0.0
    %2647 = vmatpush1.msra.mxu0 %v2617
    %2648 = vmatprep.subr.mxu0 0.0
    %2649 = vmatpush1.msra.mxu0 %v2618
    %2650 = vmatprep.subr.mxu0 0.0
    %2651 = vmatpush1.msra.mxu0 %v2619
    %2652 = vmatprep.subr.mxu0 0.0
    %2653 = vmatpush1.msra.mxu0 %v2620
    %2654 = vmatprep.subr.mxu0 0.0
    %2655 = vmatpush1.msra.mxu0 %v2621
    %2656 = vmatprep.subr.mxu0 0.0
    %2657 = vmatpush1.msra.mxu0 %v2622
    %2658 = vmatprep.subr.mxu0 0.0
    %2659 = vmatpush1.msra.mxu0 %v2623
    %2660 = vmatprep.subr.mxu0 0.0
    %2661 = vmatpush1.msra.mxu0 %v2624
    %2662 = vmatprep.subr.mxu0 0.0
    %2663 = vmatpush1.msra.mxu0 %v2625
    %2664 = vmatprep.subr.mxu0 0.0
    %2665 = vmatpush1.msra.mxu0 %v2626
    %2666 = vmatprep.subr.mxu0 0.0
    %2667 = vmatpush1.msra.mxu0 0.0
    %2668 = vmatprep.subr.mxu0 0.0
    %2669 = vmatpush1.msra.mxu0 0.0
    %2670 = vmatprep.subr.mxu0 0.0
    %2671 = vmatpush1.msra.mxu0 0.0
    %2672 = vmatprep.subr.mxu0 0.0
    %2673 = vmatpush1.msra.mxu0 0.0
    %2674 = vmatprep.subr.mxu0 0.0
    %2675 = vmatpush1.msra.mxu0 0.0
    %2676 = vmatprep.subr.mxu0 0.0
    %2677 = vmatpush1.msra.mxu0 0.0
    %2678 = vmatprep.subr.mxu0 0.0
    %2679 = vmatpush1.msra.mxu0 0.0
    %2680 = vmatprep.subr.mxu0 0.0
    %2681 = vmatpush1.msra.mxu0 0.0
    %2682 = vmatprep.subr.mxu0 0.0
    %2683 = vmatpush1.msra.mxu0 0.0
    %2684 = vmatprep.subr.mxu0 0.0
    %2685 = vmatpush1.msra.mxu0 0.0
    %2686 = vmatprep.subr.mxu0 0.0
    %2687 = vmatpush1.msra.mxu0 0.0
    %2688 = vmatprep.subr.mxu0 0.0
    %2689 = vmatpush1.msra.mxu0 0.0
    %2690 = vmatprep.subr.mxu0 0.0
    %2691 = vmatpush1.msra.mxu0 0.0
    %2692 = vmatprep.subr.mxu0 0.0
    %2693 = vmatpush1.msra.mxu0 0.0
    %2694 = vmatprep.subr.mxu0 0.0
    %2695 = vmatpush1.msra.mxu0 0.0
    %2696 = vmatprep.subr.mxu0 0.0
    %2697 = vmatpush1.msra.mxu0 0.0
    %2698 = vmatprep.mubr.f32.mxu0 0.0
    %2699 = vmatmul.mubr.f32.gmra.mrb[0].mxu0 %v2607
    %v2700 = vpop.f32.mrb[0].mxu0
    %v2701 = vadd.f32 %v2632, %v2700
    %v2702 = vpop.f32.mrb[0].mxu0
    %2703 = vmatprep.mubr.f32.mxu0 0.0
    %2704 = vmatmul.mubr.f32.gmra.mrb[0].mxu0 %v2608
    %v2705 = vpop.f32.mrb[0].mxu0
    %v2706 = vadd.f32 %v2632, %v2705
    %v2707 = vpop.f32.mrb[0].mxu0
    %2708 = vmatprep.mubr.f32.mxu0 0.0
    %2709 = vmatmul.mubr.f32.gmra.mrb[0].mxu0 %v2609
    %v2710 = vpop.f32.mrb[0].mxu0
    %v2711 = vadd.f32 %v2632, %v2710
    %v2712 = vpop.f32.mrb[0].mxu0
    %2713 = vmatprep.mubr.f32.mxu0 0.0
    %2714 = vmatmul.mubr.f32.gmra.mrb[0].mxu0 %v2610
    %v2715 = vpop.f32.mrb[0].mxu0
    %v2716 = vadd.f32 %v2632, %v2715
    %v2717 = vpop.f32.mrb[0].mxu0
    %2718 = vdwg.mxu0
    %v2719 = vtanh.pop %v2701
    %v2720 = vtanh.pop %v2706
    %v2721 = vtanh.pop %v2711
    %v2722 = vtanh.pop %v2716
    %v2723 = vld [vmem:[%s6] sm:$0x1]
    %2724 = vmatprep.subr.mxu0 0.0
    %2725 = vmatpush1.xpose.msra.mxu0 %v2719
    %2726 = vmatprep.subr.mxu0 0.0
    %2727 = vmatpush1.xpose.msra.mxu0 %v2720
    %2728 = vmatprep.subr.mxu0 0.0
    %2729 = vmatpush1.xpose.msra.mxu0 %v2721
    %2730 = vmatprep.subr.mxu0 0.0
    %2731 = vmatpush1.xpose.msra.mxu0 %v2722
    %2732 = vmatprep.subr.mxu0 0.0
    %2733 = vmatpush1.xpose.msra.mxu0 0.0
    %2734 = vmatprep.subr.mxu0 0.0
    %2735 = vmatpush1.xpose.msra.mxu0 0.0
    %2736 = vmatprep.subr.mxu0 0.0
    %2737 = vmatpush1.xpose.msra.mxu0 0.0
    %2738 = vmatprep.subr.mxu0 0.0
    %2739 = vmatpush1.xpose.msra.mxu0 0.0
    %2740 = vmatprep.subr.mxu0 0.0
    %2741 = vmatpush1.xpose.msra.mxu0 0.0
    %2742 = vmatprep.subr.mxu0 0.0
    %2743 = vmatpush1.xpose.msra.mxu0 0.0
    %2744 = vmatprep.subr.mxu0 0.0
    %2745 = vmatpush1.xpose.msra.mxu0 0.0
    %2746 = vmatprep.subr.mxu0 0.0
    %2747 = vmatpush1.xpose.msra.mxu0 0.0
    %2748 = vmatprep.subr.mxu0 0.0
    %2749 = vmatpush1.xpose.msra.mxu0 0.0
    %2750 = vmatprep.subr.mxu0 0.0
    %2751 = vmatpush1.xpose.msra.mxu0 0.0
    %2752 = vmatprep.subr.mxu0 0.0
    %2753 = vmatpush1.xpose.msra.mxu0 0.0
    %2754 = vmatprep.subr.mxu0 0.0
    %2755 = vmatpush1.xpose.msra.mxu0 0.0
    %2756 = vmatprep.subr.mxu0 0.0
    %2757 = vmatpush1.xpose.msra.mxu0 0.0
    %2758 = vmatprep.subr.mxu0 0.0
    %2759 = vmatpush1.xpose.msra.mxu0 0.0
    %2760 = vmatprep.subr.mxu0 0.0
    %2761 = vmatpush1.xpose.msra.mxu0 0.0
    %2762 = vmatprep.subr.mxu0 0.0
    %2763 = vmatpush1.xpose.msra.mxu0 0.0
    %2764 = vmatprep.subr.mxu0 0.0
    %2765 = vmatpush1.xpose.msra.mxu0 0.0
    %2766 = vmatprep.subr.mxu0 0.0
    %2767 = vmatpush1.xpose.msra.mxu0 0.0
    %2768 = vmatprep.subr.mxu0 0.0
    %2769 = vmatpush1.xpose.msra.mxu0 0.0
    %2770 = vmatprep.subr.mxu0 0.0
    %2771 = vmatpush1.xpose.msra.mxu0 0.0
    %2772 = vmatprep.subr.mxu0 0.0
    %2773 = vmatpush1.xpose.msra.mxu0 0.0
    %2774 = vmatprep.subr.mxu0 0.0
    %2775 = vmatpush1.xpose.msra.mxu0 0.0
    %2776 = vmatprep.subr.mxu0 0.0
    %2777 = vmatpush1.xpose.msra.mxu0 0.0
    %2778 = vmatprep.subr.mxu0 0.0
    %2779 = vmatpush1.xpose.msra.mxu0 0.0
    %2780 = vmatprep.subr.mxu0 0.0
    %2781 = vmatpush1.xpose.msra.mxu0 0.0
    %2782 = vmatprep.subr.mxu0 0.0
    %2783 = vmatpush1.xpose.msra.mxu0 0.0
    %2784 = vmatprep.subr.mxu0 0.0
    %2785 = vmatpush1.xpose.msra.mxu0 0.0
    %2786 = vmatprep.subr.mxu0 0.0
    %2787 = vmatpush1.xpose.msra.mxu0 0.0
    %2788 = vmatprep.mubr.f32.mxu0 0.0
    %2789 = vmatmul.mubr.f32.gmra.mrb[0].mxu0 %v2723
    %v2790 = vpop.f32.mrb[0].mxu0
    %v2791 = vadd.f32 0.0, %v2790
    %v2792 = vpop.f32.mrb[0].mxu0
    %2793 = vdwg.mxu0
    %v2794 = vlaneseq
    %v2795 = vand.u32 %v2794, 127
    %v2796 = vlaneseq
    %v2797 = vshrl.u32 %v2796, 7
    %vm2798 = vcmp.lt.s32.totalorder %v2795, 0
    %v2799 = vsub.s32 0, %v2795
    %v2800 = vsel %vm2798, %v2799, %v2795
    %v2801 = vshrl.u32 %v2800, 1
    %v2802 = vand.u32 %v2800, 1
    %v2803 = vsub.s32 0, %v2802
    %v2804 = vsel %vm2798, %v2803, %v2802
    %vm2805 = vcmp.ne.s32.totalorder %v2804, 0
    %vm2806 = vcmp.lt.s32.totalorder %v2804, 0
    %vm2807 = vmand %vm2806, %vm2805
    %v2808 = vadd.s32 %v2804, 2
    %v2809 = vsel %vm2807, %v2808, %v2804
    %vm2810 = vcmp.eq.s32.totalorder %v2809, %v2797
    %v2811 = vlaneseq
    %v2812 = vshrl.u32 %v2811, 7
    %v2813 = vsub.s32 0, %v2812
    %v2814 = vrot.slane %v2791, %v2813
    %v2815 = vsel %vm2810, %v2814, -1e+30
    %vm2816 = vcmask 254976
    %v2817 = vsel %vm2816, %v2815, -inf
    %2818 = vmax.xlane.f32.xlu0 %v2817
    %v2819 = vpop.xlane.xlu0 %2818
    %v2820 = vsub.f32 %v2815, %v2819
    %v2821 = vmul.f32 %v2820, 1.442695
    %v2822 = vpow.pop %v2821
    %v2823 = vsel %vm2816, %v2822, 0.0
    %2824 = vadd.xlane.f32.xlu0 %v2823
    %v2825 = vpop.xlane.xlu0 %2824
    %v2826 = vrcp.pop %v2825
    %v2827 = vmul.f32 %v2822, %v2826
    %vm2828 = vcmask 261120
    %v2830 = vsel %vm2828, %v2827, 0
    %2832 = vmatprep.subr.mxu0 0.0
    %2833 = vmatpush1.msra.mxu0 %v2607
    %2834 = vmatprep.subr.mxu0 0.0
    %2835 = vmatpush1.msra.mxu0 %v2608
    %2836 = vmatprep.subr.mxu0 0.0
    %2837 = vmatpush1.msra.mxu0 %v2609
    %2838 = vmatprep.subr.mxu0 0.0
    %2839 = vmatpush1.msra.mxu0 %v2610
    %2840 = vmatprep.subr.mxu0 0.0
    %2841 = vmatpush1.msra.mxu0 0.0
    %2842 = vmatprep.subr.mxu0 0.0
    %2843 = vmatpush1.msra.mxu0 0.0
    %2844 = vmatprep.subr.mxu0 0.0
    %2845 = vmatpush1.msra.mxu0 0.0
    %2846 = vmatprep.subr.mxu0 0.0
    %2847 = vmatpush1.msra.mxu0 0.0
    %2848 = vmatprep.subr.mxu0 0.0
    %2849 = vmatpush1.msra.mxu0 0.0
    %2850 = vmatprep.subr.mxu0 0.0
    %2851 = vmatpush1.msra.mxu0 0.0
    %2852 = vmatprep.subr.mxu0 0.0
    %2853 = vmatpush1.msra.mxu0 0.0
    %2854 = vmatprep.subr.mxu0 0.0
    %2855 = vmatpush1.msra.mxu0 0.0
    %2856 = vmatprep.subr.mxu0 0.0
    %2857 = vmatpush1.msra.mxu0 0.0
    %2858 = vmatprep.subr.mxu0 0.0
    %2859 = vmatpush1.msra.mxu0 0.0
    %2860 = vmatprep.subr.mxu0 0.0
    %2861 = vmatpush1.msra.mxu0 0.0
    %2862 = vmatprep.subr.mxu0 0.0
    %2863 = vmatpush1.msra.mxu0 0.0
    %2864 = vmatprep.subr.mxu0 0.0
    %2865 = vmatpush1.msra.mxu0 0.0
    %2866 = vmatprep.subr.mxu0 0.0
    %2867 = vmatpush1.msra.mxu0 0.0
    %2868 = vmatprep.subr.mxu0 0.0
    %2869 = vmatpush1.msra.mxu0 0.0
    %2870 = vmatprep.subr.mxu0 0.0
    %2871 = vmatpush1.msra.mxu0 0.0
    %2872 = vmatprep.subr.mxu0 0.0
    %2873 = vmatpush1.msra.mxu0 0.0
    %2874 = vmatprep.subr.mxu0 0.0
    %2875 = vmatpush1.msra.mxu0 0.0
    %2876 = vmatprep.subr.mxu0 0.0
    %2877 = vmatpush1.msra.mxu0 0.0
    %2878 = vmatprep.subr.mxu0 0.0
    %2879 = vmatpush1.msra.mxu0 0.0
    %2880 = vmatprep.subr.mxu0 0.0
    %2881 = vmatpush1.msra.mxu0 0.0
    %2882 = vmatprep.subr.mxu0 0.0
    %2883 = vmatpush1.msra.mxu0 0.0
    %2884 = vmatprep.subr.mxu0 0.0
    %2885 = vmatpush1.msra.mxu0 0.0
    %2886 = vmatprep.subr.mxu0 0.0
    %2887 = vmatpush1.msra.mxu0 0.0
    %2888 = vmatprep.subr.mxu0 0.0
    %2889 = vmatpush1.msra.mxu0 0.0
    %2890 = vmatprep.subr.mxu0 0.0
    %2891 = vmatpush1.msra.mxu0 0.0
    %2892 = vmatprep.subr.mxu0 0.0
    %2893 = vmatpush1.msra.mxu0 0.0
    %2894 = vmatprep.subr.mxu0 0.0
    %2895 = vmatpush1.msra.mxu0 0.0
    %2896 = vmatprep.mubr.f32.mxu0 0.0
    %2897 = vmatmul.mubr.f32.gmra.mrb[0].mxu0 %v2830
    %v2898 = vpop.f32.mrb[0].mxu0
    %v2899 = vadd.f32 0.0, %v2898
    %v2900 = vpop.f32.mrb[0].mxu0
    %2901 = vdwg.mxu0
    %2902 = vst [vmem:[#allocation7] sm:$0x3] %v2899
    // Predicated region
    $region1230: #{word_att_forward_padded.1} parent=1 // pred_check
      _
    $region1231: #{word_att_forward_padded.1} parent=1 // pred_check_branch
      %2904 = sbr.rel (0) target = $region1233
    $region1232: #{word_att_forward_padded.1} parent=1 // pred_region
      %s2906 = ssub.s32 32, 32
      %2907 = vsyncadd [#allocation5], %s2906
      %s2909 = sshll.u32 [#allocation7], 4
      %s2910 = int_to_ptr.vmem [resolvable:$true] %s2909
      %2912 = dma.vmem_to_hbm [thread:$0]  %s2910, 32, %s7, [#allocation5]
    $region1233: #{word_att_forward_padded.1} parent=1 // pred_fallthru
      _
    // Predicated region
    $region1234: #{word_att_forward_padded.1} parent=1 // pred_check
      _
    $region1235: #{word_att_forward_padded.1} parent=1 // pred_check_branch
      %2914 = sbr.rel (0) target = $region1237
    $region1236: #{word_att_forward_padded.1} parent=1 // pred_region
      %2915 = dma.done [#allocation5], 32
    $region1237: #{word_att_forward_padded.1} parent=1 // pred_fallthru
      _
    %2916 = vsyncpa [#allocation5], 1
    %2917 = vsyncpa [#allocation6], 1
  %2918 = vsyncmov [#allocation3]
  %s2919 = vpop.sfrf %2918
  %p2920 = scmp.eq.s32.totalorder %s2919, 0
  %p2921 = pneg %p2920
  %2923 = shalt.err (%p2921)

</llo_original>
